<compile_context>
chip_gen: v7x
topology: tpu7x:2x2x1
jax: 0.10.0
libtpu: 0.0.40
codegen_flags: <defaults>
</compile_context>

<pallas_src>
import functools
import math

import jax
import jax.numpy as jnp
from jax.experimental import pallas as pl
from jax.experimental.pallas import tpu as pltpu


_VMEM_LIMIT = 32 * 1024 * 1024   # explicit scoped-VMEM cap (safe on v5e/v6e/v7x)
_VMEM_BUDGET = 10 * 1024 * 1024  # target bytes for per-step blocks (pipelining headroom)


def _round_up(x, m):
    return ((x + m - 1) // m) * m


def _pick_group(n_total, per_item_bytes, budget_bytes):
    """Largest divisor of n_total fitting the VMEM budget, keeping >=2 grid steps."""
    best = 1
    for g in range(1, n_total + 1):
        if n_total % g:
            continue
        if g * per_item_bytes > budget_bytes:
            continue
        if n_total >= 2 and (n_total // g) < 2:
            continue  # keep at least 2 parallel steps so both v7x TCs get work
        best = g
    return best


# ----------------------------------------------------------------------------
# Kernel 1: sparsity measure M = max(sampled scores) - sum(sampled scores)/L_K
# ----------------------------------------------------------------------------
def _sparsity_measure_kernel(cnt_ref, q_ref, k_ref, m_ref):
    # cnt_ref: (L_Q, L_K) f32  — sampled-column multiplicities, shared by all heads
    #                            (grid-resident: constant index_map => one DMA)
    # q_ref:   (G, L_Q, D)     compute dtype (bf16)
    # k_ref:   (G, L_K, D)     compute dtype (bf16)
    # m_ref:   (1, G, L_Q) f32 — lane-dense output (L_Q on lanes)
    L_K = k_ref.shape[1]
    # full Q K^T on the MXU (bf16 operands, f32 accumulation)
    s = jnp.einsum("gqd,gkd->gqk", q_ref[...], k_ref[...],
                   preferred_element_type=jnp.float32)          # (G, L_Q, L_K)
    cnt = cnt_ref[...]                                          # (L_Q, L_K)
    # sum over sampled columns *with multiplicity* (matches torch.randint w/ replacement)
    sampled_sum = jnp.sum(s * cnt, axis=-1)                     # (G, L_Q)
    neg = jnp.finfo(jnp.float32).min
    sampled_max = jnp.max(jnp.where(cnt > 0.0, s, neg), axis=-1)  # (G, L_Q)
    # NOTE: division by L_K (not U_part) is intentional — matches Informer's code.
    m_ref[0] = sampled_max - sampled_sum * (1.0 / L_K)


# ----------------------------------------------------------------------------
# Kernel 2: attention for the top-u queries + fused mean-init / scatter
# ----------------------------------------------------------------------------
def _prob_attn_kernel(mtop_ref, qr_ref, k_ref, v_ref, ctx_ref, *, scale):
    # mtop_ref: (G, 1, u_pad) int32 — selected query rows, padded with -1
    # qr_ref:   (G, u_pad, D)       compute dtype (bf16)
    # k_ref:    (G, L_K, D)         compute dtype
    # v_ref:    (G, L_K, D)         compute dtype
    # ctx_ref:  (G, L_Q, D)         output dtype
    G, u_pad, D = qr_ref.shape
    L_Q = ctx_ref.shape[1]
    cdt = k_ref.dtype

    # pre-scale queries (u*D multiplies instead of scaling the (u, L_K) scores)
    q = (qr_ref[...].astype(jnp.float32) * scale).astype(cdt)

    s = jnp.einsum("gud,gkd->guk", q, k_ref[...],
                   preferred_element_type=jnp.float32)            # (G, u, L_K) f32
    m = jnp.max(s, axis=-1, keepdims=True)
    p = jnp.exp(s - m)                                            # f32 softmax math
    denom = jnp.sum(p, axis=-1, keepdims=True)                    # (G, u, 1)
    ctx = jnp.einsum("guk,gkd->gud", p.astype(cdt), v_ref[...],
                     preferred_element_type=jnp.float32)          # (G, u, D) f32
    # deferred normalization: EUP reciprocal instead of u*L_K divisions
    ctx = ctx * pl.reciprocal(denom, approx=True)

    # initial context = mean of V over the key axis (mask_flag=False path)
    v_mean = jnp.mean(v_ref[...].astype(jnp.float32), axis=1, keepdims=True)  # (G,1,D)

    # fused "broadcast v_mean then scatter top-u rows" via a one-hot selection matmul
    iota_q = jax.lax.broadcasted_iota(jnp.int32, (G, L_Q, u_pad), 1)
    onehot = (iota_q == mtop_ref[...]).astype(jnp.float32)        # (G, L_Q, u_pad)
    hit = jnp.sum(onehot, axis=-1, keepdims=True)                 # (G, L_Q, 1) in {0,1}
    full = jnp.einsum("gqu,gud->gqd", onehot, ctx,
                      preferred_element_type=jnp.float32)
    full = full + (1.0 - hit) * v_mean
    ctx_ref[...] = full.astype(ctx_ref.dtype)


# ----------------------------------------------------------------------------
# ProbAttention on head-major tensors (B, H, L, D)
# ----------------------------------------------------------------------------
def _prob_attention_heads(Qh, Kh, Vh, rng_key, *, factor=5, scale=None,
                          out_dtype=None):
    B, H, L_Q, D = Qh.shape
    L_K = Kh.shape[2]
    BH = B * H
    out_dtype = out_dtype if out_dtype is not None else Qh.dtype

    Q = Qh.reshape(BH, L_Q, D)
    K = Kh.reshape(BH, L_K, D)
    V = Vh.reshape(BH, L_K, D)

    U_part = min(factor * int(math.ceil(math.log(L_K))), L_K)
    u = min(factor * int(math.ceil(math.log(L_Q))), L_Q)
    u_pad = _round_up(u, 8)  # sublane alignment; padded rows are never scattered

    # torch.randint equivalent (sampling with replacement, shared across (B, H)).
    # TODO(synk): jax PRNG stream cannot reproduce torch.randint bit-for-bit.
    index_sample = jax.random.randint(rng_key, (L_Q, U_part), 0, L_K)
    # multiplicity matrix cnt[q, k] = #times key column k was sampled for query q
    cnt = jnp.zeros((L_Q, L_K), jnp.float32).at[
        jnp.arange(L_Q)[:, None], index_sample].add(1.0)

    csize = jnp.dtype(Q.dtype).itemsize
    osize = jnp.dtype(out_dtype).itemsize

    # ---------------- kernel 1: sparsity measure M ----------------
    k1_per_head = 2 * ((L_Q + L_K) * D * csize + L_Q * 4) + L_Q * L_K * 4
    G1 = _pick_group(BH, k1_per_head, max(_VMEM_BUDGET - L_Q * L_K * 4, 0))

    M = pl.pallas_call(
        _sparsity_measure_kernel,
        out_shape=jax.ShapeDtypeStruct((BH // G1, G1, L_Q), jnp.float32),
        grid=(BH // G1,),
        in_specs=[
            pl.BlockSpec((L_Q, L_K), lambda i: (0, 0)),          # resident across grid
            pl.BlockSpec((G1, L_Q, D), lambda i: (i, 0, 0)),
            pl.BlockSpec((G1, L_K, D), lambda i: (i, 0, 0)),
        ],
        out_specs=pl.BlockSpec((1, G1, L_Q), lambda i: (i, 0, 0)),
        compiler_params=pltpu.CompilerParams(
            dimension_semantics=("parallel",),
            vmem_limit_bytes=_VMEM_LIMIT),
    )(cnt, Q, K).reshape(BH, L_Q)

    # ---------------- top-u query selection (JAX glue) ----------------
    _, M_top = jax.lax.top_k(M, u)                               # (BH, u) distinct rows
    if u_pad > u:
        M_top = jnp.concatenate(
            [M_top, jnp.full((BH, u_pad - u), -1, M_top.dtype)], axis=1)
    Q_reduce = jnp.take_along_axis(
        Q, jnp.clip(M_top, 0, L_Q - 1)[:, :, None], axis=1)      # (BH, u_pad, D)

    sc = scale if scale is not None else 1.0 / math.sqrt(D)

    # ---------------- kernel 2: attention on the top-u queries ----------------
    k2_per_head = (2 * ((u_pad + 2 * L_K) * D * csize + u_pad * 4 + L_Q * D * osize)
                   + u_pad * L_K * 4 + L_Q * u_pad * 4 + L_Q * D * 4)
    G2 = _pick_group(BH, k2_per_head, _VMEM_BUDGET)

    ctx = pl.pallas_call(
        functools.partial(_prob_attn_kernel, scale=sc),
        out_shape=jax.ShapeDtypeStruct((BH, L_Q, D), out_dtype),
        grid=(BH // G2,),
        in_specs=[
            pl.BlockSpec((G2, 1, u_pad), lambda i: (i, 0, 0)),
            pl.BlockSpec((G2, u_pad, D), lambda i: (i, 0, 0)),
            pl.BlockSpec((G2, L_K, D), lambda i: (i, 0, 0)),
            pl.BlockSpec((G2, L_K, D), lambda i: (i, 0, 0)),
        ],
        out_specs=pl.BlockSpec((G2, L_Q, D), lambda i: (i, 0, 0)),
        compiler_params=pltpu.CompilerParams(
            dimension_semantics=("parallel",),
            vmem_limit_bytes=_VMEM_LIMIT),
    )(M_top.reshape(BH, 1, u_pad), Q_reduce, K, V)

    return ctx.reshape(B, H, L_Q, D)


# ----------------------------------------------------------------------------
# ProbAttention with the (B, L, H, D) inner-attention interface
# ----------------------------------------------------------------------------
def prob_attention(queries, keys, values, rng_key, factor=5, scale=None,
                   compute_dtype=jnp.bfloat16):
    # mask_flag=False, output_attention=False; dropout declared but unused in forward().
    # single fused transpose+cast per tensor (kernels want head-major layout)
    q = jnp.transpose(queries, (0, 2, 1, 3)).astype(compute_dtype)
    k = jnp.transpose(keys, (0, 2, 1, 3)).astype(compute_dtype)
    v = jnp.transpose(values, (0, 2, 1, 3)).astype(compute_dtype)
    ctx = _prob_attention_heads(q, k, v, rng_key, factor=factor, scale=scale,
                                out_dtype=values.dtype)
    return jnp.transpose(ctx, (0, 2, 1, 3)), None


# ----------------------------------------------------------------------------
# AttentionLayer: projections + ProbAttention + output projection
# ----------------------------------------------------------------------------
def init_attention_layer_params(key, d_model, n_heads, d_keys=None,
                                d_values=None, dtype=jnp.float32):
    d_keys = d_keys or d_model // n_heads
    d_values = d_values or d_model // n_heads
    ks = jax.random.split(key, 4)

    def lin(k, fan_in, fan_out):
        bound = 1.0 / math.sqrt(fan_in)
        kw, kb = jax.random.split(k)
        W = jax.random.uniform(kw, (fan_in, fan_out), dtype, -bound, bound)
        b = jax.random.uniform(kb, (fan_out,), dtype, -bound, bound)
        return W, b

    Wq, bq = lin(ks[0], d_model, d_keys * n_heads)
    Wk, bk = lin(ks[1], d_model, d_keys * n_heads)
    Wv, bv = lin(ks[2], d_model, d_values * n_heads)
    Wo, bo = lin(ks[3], d_values * n_heads, d_model)
    return dict(Wq=Wq, bq=bq, Wk=Wk, bk=bk, Wv=Wv, bv=bv, Wo=Wo, bo=bo)


def attention_layer(params, queries, keys, values, rng_key, *, n_heads,
                    factor=5, scale=None, mix=False,
                    compute_dtype=jnp.bfloat16):
    """Forward of AttentionLayer with a ProbAttention inner attention (attn_mask unused)."""
    B, L, d_model = queries.shape
    H = n_heads
    dk = params["Wq"].shape[1] // H
    dv = params["Wv"].shape[1] // H

    # Project straight into head-major (B, H, L, d) — avoids a separate transpose
    # pass — and cast to the MXU compute dtype so the cast fuses with the GEMM.
    # TODO(synk): linear projections are left to XLA (plain GEMMs), not Pallas.
    q = (jnp.einsum("bld,dhk->bhlk", queries, params["Wq"].reshape(d_model, H, dk))
         + params["bq"].reshape(1, H, 1, dk)).astype(compute_dtype)
    k = (jnp.einsum("bsd,dhk->bhsk", keys, params["Wk"].reshape(d_model, H, dk))
         + params["bk"].reshape(1, H, 1, dk)).astype(compute_dtype)
    v = (jnp.einsum("bsd,dhk->bhsk", values, params["Wv"].reshape(d_model, H, dv))
         + params["bv"].reshape(1, H, 1, dv)).astype(compute_dtype)

    ctx = _prob_attention_heads(q, k, v, rng_key, factor=factor, scale=scale,
                                out_dtype=queries.dtype)          # (B, H, L, dv)

    if mix:
        # torch: out.transpose(2,1).contiguous().view(B, L, -1) on (B, L, H, dv)
        out = ctx.reshape(B, L, H * dv)
    else:
        out = jnp.transpose(ctx, (0, 2, 1, 3)).reshape(B, L, H * dv)

    out = jnp.dot(out, params["Wo"]) + params["bo"]
    return out, None   # output_attention=False


if __name__ == "__main__":
    key = jax.random.PRNGKey(0)
    k_param, k_q, k_k, k_v, k_samp = jax.random.split(key, 5)

    B, L, d_model, H = 2, 64, 128, 4
    params = init_attention_layer_params(k_param, d_model, H)
    queries = jax.random.normal(k_q, (B, L, d_model), jnp.float32)
    keys = jax.random.normal(k_k, (B, L, d_model), jnp.float32)
    values = jax.random.normal(k_v, (B, L, d_model), jnp.float32)

    fwd = jax.jit(functools.partial(attention_layer, n_heads=H))
    out, attn = fwd(params, queries, keys, values, k_samp)
    out = jax.block_until_ready(out)
    assert out.shape == (B, L, d_model)
    assert out.dtype == queries.dtype
    assert attn is None
    assert bool(jnp.all(jnp.isfinite(out)))

    # also exercise the bare inner attention (B, L, H, D) interface
    D = d_model // H
    qh = jax.random.normal(k_q, (B, L, H, D), jnp.float32)
    kh = jax.random.normal(k_k, (B, L, H, D), jnp.float32)
    vh = jax.random.normal(k_v, (B, L, H, D), jnp.float32)
    ctx, ctx_attn = jax.jit(prob_attention)(qh, kh, vh, k_samp)
    ctx = jax.block_until_ready(ctx)
    assert ctx.shape == (B, L, H, D)
    assert ctx_attn is None
    assert bool(jnp.all(jnp.isfinite(ctx)))

    print("KERNEL_OK")
</pallas_src>

<mosaic_0001>
module attributes {stable_mosaic.version = 11 : i64} {
  func.func private @main(%arg0: i32) attributes {dimension_semantics = [#tpu.dimension_semantics<core_parallel>], iteration_bounds = array<i64: 2>, tpu.core_type = #tpu.core_type<sc_scalar_subcore>, window_params = []} {
    return
  }
}

module attributes {stable_mosaic.version = 11 : i64} {
  func.func private @main(%arg0: i32) attributes {dimension_semantics = [#tpu.dimension_semantics<core_parallel>], iteration_bounds = array<i64: 2>, tpu.core_type = #tpu.core_type<sc_scalar_subcore>, window_params = []} {
    return
  }
}

module attributes {stable_mosaic.version = 11 : i64} {
  func.func @_sparsity_measure_kernel(%arg0: i32, %arg1: memref<64x64xf32, #tpu.memory_space<vmem>>, %arg2: memref<4x64x32xbf16, #tpu.memory_space<vmem>>, %arg3: memref<4x64x32xbf16, #tpu.memory_space<vmem>>, %arg4: memref<1x4x64xf32, #tpu.memory_space<vmem>>) attributes {dimension_semantics = [#tpu.dimension_semantics<parallel>], iteration_bounds = array<i64: 2>, scalar_prefetch = 0 : i64, scratch_operands = 0 : i64, tpu.core_type = #tpu.core_type<tc>, window_params = [{pipeline_mode = #tpu.pipeline_mode<synchronous>, transform_indices = @transform_0, window_bounds = array<i64: 64, 64>}, {transform_indices = @transform_1, window_bounds = array<i64: 4, 64, 32>}, {transform_indices = @transform_2, window_bounds = array<i64: 4, 64, 32>}, {transform_indices = @transform_3, window_bounds = array<i64: 1, 4, 64>}]} {
    %c0 = arith.constant 0 : index
    %c0_0 = arith.constant 0 : index
    %c0_1 = arith.constant 0 : index
    %0 = vector.load %arg2[%c0, %c0_0, %c0_1] : memref<4x64x32xbf16, #tpu.memory_space<vmem>>, vector<4x64x32xbf16>
    %c0_2 = arith.constant 0 : index
    %c0_3 = arith.constant 0 : index
    %c0_4 = arith.constant 0 : index
    %1 = vector.load %arg3[%c0_2, %c0_3, %c0_4] : memref<4x64x32xbf16, #tpu.memory_space<vmem>>, vector<4x64x32xbf16>
    "tpu.trace_start"() <{level = 10 : i32, message = "gqd,gkd->gqk"}> : () -> ()
    %cst = arith.constant dense<0.000000e+00> : vector<4x64x64xf32>
    %2 = tpu.matmul %0, %1, %cst {dimension_numbers = #tpu.dot_dimension_numbers<[2], [2], [1], [1], [0, 0, 0, 1, 1, 1], [0], [0]>} : vector<4x64x32xbf16>, vector<4x64x32xbf16>, vector<4x64x64xf32> -> vector<4x64x64xf32>
    "tpu.trace_stop"() : () -> ()
    %c0_5 = arith.constant 0 : index
    %c0_6 = arith.constant 0 : index
    %3 = vector.load %arg1[%c0_5, %c0_6] : memref<64x64xf32, #tpu.memory_space<vmem>>, vector<64x64xf32>
    %4 = vector.shape_cast %3 : vector<64x64xf32> to vector<1x64x64xf32>
    %5 = vector.broadcast %4 : vector<1x64x64xf32> to vector<4x64x64xf32>
    %6 = arith.mulf %2, %5 : vector<4x64x64xf32>
    %cst_7 = arith.constant dense<0.000000e+00> : vector<4x64xf32>
    %7 = vector.multi_reduction <add>, %6, %cst_7 [2] : vector<4x64x64xf32> to vector<4x64xf32>
    %cst_8 = arith.constant 0.000000e+00 : f32
    %8 = vector.broadcast %cst_8 : f32 to vector<64x64xf32>
    %9 = arith.cmpf ogt, %3, %8 : vector<64x64xf32>
    %cst_9 = arith.constant -3.40282347E+38 : f32
    %10 = vector.shape_cast %9 : vector<64x64xi1> to vector<1x64x64xi1>
    %11 = vector.broadcast %10 : vector<1x64x64xi1> to vector<4x64x64xi1>
    %12 = vector.broadcast %cst_9 : f32 to vector<4x64x64xf32>
    %13 = arith.select %11, %2, %12 : vector<4x64x64xi1>, vector<4x64x64xf32>
    %cst_10 = arith.constant dense<0xFF800000> : vector<4x64xf32>
    %14 = vector.multi_reduction <maximumf>, %13, %cst_10 [2] : vector<4x64x64xf32> to vector<4x64xf32>
    %cst_11 = arith.constant 1.562500e-02 : f32
    %15 = vector.broadcast %cst_11 : f32 to vector<4x64xf32>
    %16 = arith.mulf %7, %15 : vector<4x64xf32>
    %17 = arith.subf %14, %16 : vector<4x64xf32>
    %c0_12 = arith.constant 0 : index
    %c0_13 = arith.constant 0 : index
    %c0_14 = arith.constant 0 : index
    %18 = vector.load %arg4[%c0_12, %c0_13, %c0_14] : memref<1x4x64xf32, #tpu.memory_space<vmem>>, vector<1x4x64xf32>
    %19 = vector.shape_cast %18 : vector<1x4x64xf32> to vector<4x64xf32>
    %20 = vector.shape_cast %17 : vector<4x64xf32> to vector<1x4x64xf32>
    tpu.vector_store %arg4[%c0_12, %c0_13, %c0_14], %20 {strides = array<i32>} : memref<1x4x64xf32, #tpu.memory_space<vmem>>, vector<1x4x64xf32>,
    return
  }
  func.func @transform_0(%arg0: i32) -> (i32, i32) {
    %c0_i32 = arith.constant 0 : i32
    %c0_i32_0 = arith.constant 0 : i32
    %c0_i32_1 = arith.constant 0 : i32
    return %c0_i32, %c0_i32_0 : i32, i32
  }
  func.func @transform_1(%arg0: i32) -> (i32, i32, i32) {
    %c0_i32 = arith.constant 0 : i32
    %c0_i32_0 = arith.constant 0 : i32
    %c0_i32_1 = arith.constant 0 : i32
    return %arg0, %c0_i32, %c0_i32_0 : i32, i32, i32
  }
  func.func @transform_2(%arg0: i32) -> (i32, i32, i32) {
    %c0_i32 = arith.constant 0 : i32
    %c0_i32_0 = arith.constant 0 : i32
    %c0_i32_1 = arith.constant 0 : i32
    return %arg0, %c0_i32, %c0_i32_0 : i32, i32, i32
  }
  func.func @transform_3(%arg0: i32) -> (i32, i32, i32) {
    %c0_i32 = arith.constant 0 : i32
    %c0_i32_0 = arith.constant 0 : i32
    %c0_i32_1 = arith.constant 0 : i32
    return %arg0, %c0_i32, %c0_i32_0 : i32, i32, i32
  }
}

module attributes {stable_mosaic.version = 11 : i64} {
  func.func @_prob_attn_kernel(%arg0: i32, %arg1: memref<4x1x32xi32, #tpu.memory_space<vmem>>, %arg2: memref<4x32x32xbf16, #tpu.memory_space<vmem>>, %arg3: memref<4x64x32xbf16, #tpu.memory_space<vmem>>, %arg4: memref<4x64x32xbf16, #tpu.memory_space<vmem>>, %arg5: memref<4x64x32xf32, #tpu.memory_space<vmem>>) attributes {dimension_semantics = [#tpu.dimension_semantics<parallel>], iteration_bounds = array<i64: 2>, scalar_prefetch = 0 : i64, scratch_operands = 0 : i64, tpu.core_type = #tpu.core_type<tc>, window_params = [{transform_indices = @transform_0, window_bounds = array<i64: 4, 1, 32>}, {transform_indices = @transform_1, window_bounds = array<i64: 4, 32, 32>}, {transform_indices = @transform_2, window_bounds = array<i64: 4, 64, 32>}, {transform_indices = @transform_3, window_bounds = array<i64: 4, 64, 32>}, {transform_indices = @transform_4, window_bounds = array<i64: 4, 64, 32>}]} {
    %c0 = arith.constant 0 : index
    %c0_0 = arith.constant 0 : index
    %c0_1 = arith.constant 0 : index
    %0 = vector.load %arg2[%c0, %c0_0, %c0_1] : memref<4x32x32xbf16, #tpu.memory_space<vmem>>, vector<4x32x32xbf16>
    %1 = arith.extf %0 : vector<4x32x32xbf16> to vector<4x32x32xf32>
    %cst = arith.constant 0.176776692 : f32
    %2 = vector.broadcast %cst : f32 to vector<4x32x32xf32>
    %3 = arith.mulf %1, %2 : vector<4x32x32xf32>
    %4 = arith.truncf %3 : vector<4x32x32xf32> to vector<4x32x32xbf16>
    %c0_2 = arith.constant 0 : index
    %c0_3 = arith.constant 0 : index
    %c0_4 = arith.constant 0 : index
    %5 = vector.load %arg3[%c0_2, %c0_3, %c0_4] : memref<4x64x32xbf16, #tpu.memory_space<vmem>>, vector<4x64x32xbf16>
    "tpu.trace_start"() <{level = 10 : i32, message = "gud,gkd->guk"}> : () -> ()
    %cst_5 = arith.constant dense<0.000000e+00> : vector<4x32x64xf32>
    %6 = tpu.matmul %4, %5, %cst_5 {dimension_numbers = #tpu.dot_dimension_numbers<[2], [2], [1], [1], [0, 0, 0, 1, 1, 1], [0], [0]>} : vector<4x32x32xbf16>, vector<4x64x32xbf16>, vector<4x32x64xf32> -> vector<4x32x64xf32>
    "tpu.trace_stop"() : () -> ()
    %cst_6 = arith.constant dense<0xFF800000> : vector<4x32xf32>
    %7 = vector.multi_reduction <maximumf>, %6, %cst_6 [2] : vector<4x32x64xf32> to vector<4x32xf32>
    %8 = vector.shape_cast %7 : vector<4x32xf32> to vector<4x32x1xf32>
    %9 = vector.broadcast %8 : vector<4x32x1xf32> to vector<4x32x64xf32>
    %10 = arith.subf %6, %9 : vector<4x32x64xf32>
    %11 = math.exp %10 : vector<4x32x64xf32>
    %cst_7 = arith.constant dense<0.000000e+00> : vector<4x32xf32>
    %12 = vector.multi_reduction <add>, %11, %cst_7 [2] : vector<4x32x64xf32> to vector<4x32xf32>
    %13 = vector.shape_cast %12 : vector<4x32xf32> to vector<4x32x1xf32>
    %14 = arith.truncf %11 : vector<4x32x64xf32> to vector<4x32x64xbf16>
    %c0_8 = arith.constant 0 : index
    %c0_9 = arith.constant 0 : index
    %c0_10 = arith.constant 0 : index
    %15 = vector.load %arg4[%c0_8, %c0_9, %c0_10] : memref<4x64x32xbf16, #tpu.memory_space<vmem>>, vector<4x64x32xbf16>
    "tpu.trace_start"() <{level = 10 : i32, message = "guk,gkd->gud"}> : () -> ()
    %cst_11 = arith.constant dense<0.000000e+00> : vector<4x32x32xf32>
    %16 = tpu.matmul %14, %15, %cst_11 {dimension_numbers = #tpu.dot_dimension_numbers<[2], [1], [1], [2], [0, 0, 0, 1, 1, 2], [0], [0]>} : vector<4x32x64xbf16>, vector<4x64x32xbf16>, vector<4x32x32xf32> -> vector<4x32x32xf32>
    "tpu.trace_stop"() : () -> ()
    %17 = tpu.reciprocal %13 {approx = true} : vector<4x32x1xf32> -> vector<4x32x1xf32>
    %18 = vector.broadcast %17 : vector<4x32x1xf32> to vector<4x32x32xf32>
    %19 = arith.mulf %16, %18 : vector<4x32x32xf32>
    %c0_12 = arith.constant 0 : index
    %c0_13 = arith.constant 0 : index
    %c0_14 = arith.constant 0 : index
    %20 = vector.load %arg4[%c0_12, %c0_13, %c0_14] : memref<4x64x32xbf16, #tpu.memory_space<vmem>>, vector<4x64x32xbf16>
    %21 = arith.extf %20 : vector<4x64x32xbf16> to vector<4x64x32xf32>
    %cst_15 = arith.constant dense<0.000000e+00> : vector<4x32xf32>
    %22 = vector.multi_reduction <add>, %21, %cst_15 [1] : vector<4x64x32xf32> to vector<4x32xf32>
    %23 = vector.shape_cast %22 : vector<4x32xf32> to vector<4x1x32xf32>
    %cst_16 = arith.constant 6.400000e+01 : f32
    %24 = vector.broadcast %cst_16 : f32 to vector<4x1x32xf32>
    %25 = arith.divf %23, %24 : vector<4x1x32xf32>
    %26 = tpu.iota {dimensions = array<i32: 1>} : vector<4x64x32xi32>
    %c0_17 = arith.constant 0 : index
    %c0_18 = arith.constant 0 : index
    %c0_19 = arith.constant 0 : index
    %27 = vector.load %arg1[%c0_17, %c0_18, %c0_19] : memref<4x1x32xi32, #tpu.memory_space<vmem>>, vector<4x1x32xi32>
    %28 = vector.broadcast %27 : vector<4x1x32xi32> to vector<4x64x32xi32>
    %29 = arith.cmpi eq, %26, %28 : vector<4x64x32xi32>
    %30 = arith.extui %29 : vector<4x64x32xi1> to vector<4x64x32xi32>
    %31 = arith.sitofp %30 : vector<4x64x32xi32> to vector<4x64x32xf32>
    %cst_20 = arith.constant dense<0.000000e+00> : vector<4x64xf32>
    %32 = vector.multi_reduction <add>, %31, %cst_20 [2] : vector<4x64x32xf32> to vector<4x64xf32>
    %33 = vector.shape_cast %32 : vector<4x64xf32> to vector<4x64x1xf32>
    "tpu.trace_start"() <{level = 10 : i32, message = "gqu,gud->gqd"}> : () -> ()
    %cst_21 = arith.constant dense<0.000000e+00> : vector<4x64x32xf32>
    %34 = tpu.matmul %31, %19, %cst_21 {dimension_numbers = #tpu.dot_dimension_numbers<[2], [1], [1], [2], [0, 0, 0, 1, 1, 2], [0], [0]>} : vector<4x64x32xf32>, vector<4x32x32xf32>, vector<4x64x32xf32> -> vector<4x64x32xf32>
    "tpu.trace_stop"() : () -> ()
    %cst_22 = arith.constant 1.000000e+00 : f32
    %35 = vector.broadcast %cst_22 : f32 to vector<4x64x1xf32>
    %36 = arith.subf %35, %33 : vector<4x64x1xf32>
    %37 = vector.broadcast %36 : vector<4x64x1xf32> to vector<4x64x32xf32>
    %38 = vector.broadcast %25 : vector<4x1x32xf32> to vector<4x64x32xf32>
    %39 = arith.mulf %37, %38 : vector<4x64x32xf32>
    %40 = arith.addf %34, %39 : vector<4x64x32xf32>
    %c0_23 = arith.constant 0 : index
    %c0_24 = arith.constant 0 : index
    %c0_25 = arith.constant 0 : index
    %41 = vector.load %arg5[%c0_23, %c0_24, %c0_25] : memref<4x64x32xf32, #tpu.memory_space<vmem>>, vector<4x64x32xf32>
    tpu.vector_store %arg5[%c0_23, %c0_24, %c0_25], %40 {strides = array<i32>} : memref<4x64x32xf32, #tpu.memory_space<vmem>>, vector<4x64x32xf32>,
    return
  }
  func.func @transform_0(%arg0: i32) -> (i32, i32, i32) {
    %c0_i32 = arith.constant 0 : i32
    %c0_i32_0 = arith.constant 0 : i32
    %c0_i32_1 = arith.constant 0 : i32
    return %arg0, %c0_i32, %c0_i32_0 : i32, i32, i32
  }
  func.func @transform_1(%arg0: i32) -> (i32, i32, i32) {
    %c0_i32 = arith.constant 0 : i32
    %c0_i32_0 = arith.constant 0 : i32
    %c0_i32_1 = arith.constant 0 : i32
    return %arg0, %c0_i32, %c0_i32_0 : i32, i32, i32
  }
  func.func @transform_2(%arg0: i32) -> (i32, i32, i32) {
    %c0_i32 = arith.constant 0 : i32
    %c0_i32_0 = arith.constant 0 : i32
    %c0_i32_1 = arith.constant 0 : i32
    return %arg0, %c0_i32, %c0_i32_0 : i32, i32, i32
  }
  func.func @transform_3(%arg0: i32) -> (i32, i32, i32) {
    %c0_i32 = arith.constant 0 : i32
    %c0_i32_0 = arith.constant 0 : i32
    %c0_i32_1 = arith.constant 0 : i32
    return %arg0, %c0_i32, %c0_i32_0 : i32, i32, i32
  }
  func.func @transform_4(%arg0: i32) -> (i32, i32, i32) {
    %c0_i32 = arith.constant 0 : i32
    %c0_i32_0 = arith.constant 0 : i32
    %c0_i32_1 = arith.constant 0 : i32
    return %arg0, %c0_i32, %c0_i32_0 : i32, i32, i32
  }
}

</mosaic_0001>

<llo_original>
// kernel: attention_layer.2
$region0: #{attention_layer.2}
  #allocation0 [shape = 'u32[]', space=smem, size = 0x4, offset = 0x4, fixed_abs, tag = 'smem constant byte address 0x4 - core index']
  #allocation1 [shape = 'u32[144,128]{1,0:T(1,128)}', space=vmem, size = 0x12000, scoped, tag = 'internal scratch']
  %s0 = inlined_call_operand.vmem [shape: f32[64,64], index: 0, kind: input, shape index: {}]
  %s1 = inlined_call_operand.vmem [shape: bf16[8,64,32], index: 1, kind: input, shape index: {}]
  %s2 = inlined_call_operand.vmem [shape: bf16[8,64,32], index: 2, kind: input, shape index: {}]
  %s3 = inlined_call_operand.vmem [shape: f32[2,4,64], index: 3, kind: output, shape index: {}]
  %s4 = sld [smem:[#allocation0]]
  $region45: #{attention_layer.2} parent=0
    _
  %s6 = ssub.s32 1, %s4
  %s7 = scalar_select 0, %s6, %s4
  loop: start=0, step=1, limit=4
  $region2: #{attention_layer.2} parent=0 // loop_pre_header
    _
  $region3: #{attention_layer.2} parent=0 // loop_header
    %s9 = sphi 0, %s13
    %p10 = scmp.ge.s32.totalorder %s9, 4
    %s17 = sphi 0, %s17
    %s19 = sphi 0, %s17
    %s20 = sphi 0, %s19
    %s34 = sphi 0, %s20
    %s40 = sphi 0, %s42
    %s43 = sphi 0, %s40
    %s44 = sphi 0, %s43
    %s60 = sphi 0, %s44
    %s66 = sphi 0, %s68
    %s69 = sphi 0, %s66
    %s70 = sphi 0, %s69
    %s86 = sphi 0, %s70
    %s92 = sphi 0, %s94
    %s95 = sphi 0, %s92
    %s96 = sphi 0, %s95
    %s112 = sphi 0, %s96
  $region4: #{attention_layer.2} parent=0 // loop_header_branch
    %12 = sbr.rel (%p10) target = $region8
  $region5: #{attention_layer.2} parent=0 // loop_body
    %s14 = ssub.s32 %s9, 1
    %s15 = ssub.s32 %s9, 2
    %s16 = sadd.s32 %s9, 1
    %s18 = sadd.s32 %s17, 1
    %p21 = scmp.eq.s32.totalorder %s9, 1
    %p22 = scmp.ne.s32.totalorder %s17, %s19
    %p23 = scmp.eq.s32.totalorder %s9, 0
    %p24 = por %p22, %p23
    %p25 = scmp.ne.s32.totalorder %s17, %s19
    %p26 = scmp.eq.s32.totalorder %s14, 1
    %p27 = por %p25, %p26
    %p28 = scmp.ne.s32.totalorder %s19, %s20
    %p29 = scmp.eq.s32.totalorder %s14, 0
    %p30 = por %p28, %p29
    %p31 = scmp.ne.s32.totalorder %s19, %s20
    %p32 = scmp.eq.s32.totalorder %s15, 1
    %p33 = por %p31, %p32
    %p35 = scmp.ne.s32.totalorder %s20, %s34
    %p36 = scmp.eq.s32.totalorder %s15, 0
    %p37 = por %p35, %p36
    %s38 = ssub.s32 %s9, %s16
    %p39 = scmp.eq.s32.totalorder %s38, 0
    %s41 = sadd.s32 %s40, 1
    %s42 = scalar_select %p39, %s40, %s41
    %p45 = pneg %p39
    %p46 = scmp.eq.s32.totalorder %s9, 1
    %p47 = por %p45, %p46
    %p48 = scmp.ne.s32.totalorder %s40, %s43
    %p49 = scmp.eq.s32.totalorder %s9, 0
    %p50 = por %p48, %p49
    %p51 = scmp.ne.s32.totalorder %s40, %s43
    %p52 = scmp.eq.s32.totalorder %s14, 1
    %p53 = por %p51, %p52
    %p54 = scmp.ne.s32.totalorder %s43, %s44
    %p55 = scmp.eq.s32.totalorder %s14, 0
    %p56 = por %p54, %p55
    %p57 = scmp.ne.s32.totalorder %s43, %s44
    %p58 = scmp.eq.s32.totalorder %s15, 1
    %p59 = por %p57, %p58
    %p61 = scmp.ne.s32.totalorder %s44, %s60
    %p62 = scmp.eq.s32.totalorder %s15, 0
    %p63 = por %p61, %p62
    %s64 = ssub.s32 %s9, %s16
    %p65 = scmp.eq.s32.totalorder %s64, 0
    %s67 = sadd.s32 %s66, 1
    %s68 = scalar_select %p65, %s66, %s67
    %p71 = pneg %p65
    %p72 = scmp.eq.s32.totalorder %s9, 1
    %p73 = por %p71, %p72
    %p74 = scmp.ne.s32.totalorder %s66, %s69
    %p75 = scmp.eq.s32.totalorder %s9, 0
    %p76 = por %p74, %p75
    %p77 = scmp.ne.s32.totalorder %s66, %s69
    %p78 = scmp.eq.s32.totalorder %s14, 1
    %p79 = por %p77, %p78
    %p80 = scmp.ne.s32.totalorder %s69, %s70
    %p81 = scmp.eq.s32.totalorder %s14, 0
    %p82 = por %p80, %p81
    %p83 = scmp.ne.s32.totalorder %s69, %s70
    %p84 = scmp.eq.s32.totalorder %s15, 1
    %p85 = por %p83, %p84
    %p87 = scmp.ne.s32.totalorder %s70, %s86
    %p88 = scmp.eq.s32.totalorder %s15, 0
    %p89 = por %p87, %p88
    %s90 = ssub.s32 %s9, %s16
    %p91 = scmp.eq.s32.totalorder %s90, 0
    %s93 = sadd.s32 %s92, 1
    %s94 = scalar_select %p91, %s92, %s93
    %p97 = pneg %p91
    %p98 = scmp.eq.s32.totalorder %s9, 1
    %p99 = por %p97, %p98
    %p100 = scmp.ne.s32.totalorder %s92, %s95
    %p101 = scmp.eq.s32.totalorder %s9, 0
    %p102 = por %p100, %p101
    %p103 = scmp.ne.s32.totalorder %s92, %s95
    %p104 = scmp.eq.s32.totalorder %s14, 1
    %p105 = por %p103, %p104
    %p106 = scmp.ne.s32.totalorder %s95, %s96
    %p107 = scmp.eq.s32.totalorder %s14, 0
    %p108 = por %p106, %p107
    %p109 = scmp.ne.s32.totalorder %s95, %s96
    %p110 = scmp.eq.s32.totalorder %s15, 1
    %p111 = por %p109, %p110
    %p113 = scmp.ne.s32.totalorder %s96, %s112
    %p114 = scmp.eq.s32.totalorder %s15, 0
    %p115 = por %p113, %p114
    %p116 = scmp.le.s32.totalorder 1, %s9
    %p117 = scmp.lt.s32.totalorder %s9, 3
    %p118 = pnand %p116, %p117
    %p119 = pneg %p118
    // Predicated region
    $region9: #{attention_layer.2} parent=5 // pred_check
      _
    $region10: #{attention_layer.2} parent=5 // pred_check_branch
      %121 = sbr.rel (%p118) target = $region12
    $region11: #{attention_layer.2} parent=5 // pred_region
      %s122 = ssub.s32 %s9, 1
      // Predicated region
      $region13: #{attention_layer.2} parent=11 // pred_check
        %p123 = pneg %p30
      $region14: #{attention_layer.2} parent=11 // pred_check_branch
        %125 = sbr.rel (%p123) target = $region16
      $region15: #{attention_layer.2} parent=11 // pred_region
        _
      $region16: #{attention_layer.2} parent=11 // pred_fallthru
        _
    $region12: #{attention_layer.2} parent=5 // pred_fallthru
      _
    %p126 = scmp.lt.s32.totalorder %s9, 2
    // Predicated region
    $region17: #{attention_layer.2} parent=5 // pred_check
      %p127 = pneg %p126
    $region18: #{attention_layer.2} parent=5 // pred_check_branch
      %129 = sbr.rel (%p127) target = $region20
    $region19: #{attention_layer.2} parent=5 // pred_region
      // Predicated region
      $region21: #{attention_layer.2} parent=19 // pred_check
        %p130 = pneg %p50
      $region22: #{attention_layer.2} parent=19 // pred_check_branch
        %132 = sbr.rel (%p130) target = $region24
      $region23: #{attention_layer.2} parent=19 // pred_region
        %s133 = smul.u32 4, %s9
        %p134 = scmp.lt.s32.totalorder %s133, 7
        %s135 = scalar_select %p134, %s133, 7
        %s136 = smul.addr %s135, 8
        %s137 = smul.addr %s136, 4
        %s138 = scalar_lea.vmem %s1, %s137
        %s139 = smul.u32 4, %s9
      $region24: #{attention_layer.2} parent=19 // pred_fallthru
        _
      // Predicated region
      $region25: #{attention_layer.2} parent=19 // pred_check
        %p140 = pneg %p76
      $region26: #{attention_layer.2} parent=19 // pred_check_branch
        %142 = sbr.rel (%p140) target = $region28
      $region27: #{attention_layer.2} parent=19 // pred_region
        %s143 = smul.u32 4, %s9
        %p144 = scmp.lt.s32.totalorder %s143, 7
        %s145 = scalar_select %p144, %s143, 7
        %s146 = smul.addr %s145, 8
        %s147 = smul.addr %s146, 4
        %s148 = scalar_lea.vmem %s2, %s147
        %s149 = smul.u32 4, %s9
      $region28: #{attention_layer.2} parent=19 // pred_fallthru
        _
    $region20: #{attention_layer.2} parent=5 // pred_fallthru
      _
    %p150 = scmp.le.s32.totalorder 1, %s9
    %p151 = scmp.lt.s32.totalorder %s9, 3
    %p152 = pnand %p150, %p151
    %p153 = pneg %p152
    // Predicated region
    $region29: #{attention_layer.2} parent=5 // pred_check
      _
    $region30: #{attention_layer.2} parent=5 // pred_check_branch
      %155 = sbr.rel (%p152) target = $region32
    $region31: #{attention_layer.2} parent=5 // pred_region
      %s156 = ssub.s32 %s9, 1
      %p157 = pneg %p30
      %p158 = pneg %p27
      %s159 = smul.u32 4, %s14
      %p160 = scmp.lt.s32.totalorder %s159, 7
      %s161 = scalar_select %p160, %s159, 7
      %s162 = smul.addr %s161, 8
      %s163 = smul.addr %s162, 4
      %s164 = scalar_lea.vmem %s1, %s163
      %p165 = pneg %p56
      %p166 = pneg %p53
      %s167 = smul.u32 4, %s14
      %p168 = scmp.lt.s32.totalorder %s167, 7
      %s169 = scalar_select %p168, %s167, 7
      %s170 = smul.addr %s169, 8
      %s171 = smul.addr %s170, 4
      %s172 = scalar_lea.vmem %s2, %s171
      %p173 = pneg %p82
      %p174 = pneg %p79
      %p175 = pneg %p108
      %p176 = pneg %p105
      %p177 = scmp.lt.s32.totalorder %s14, 1
      %s178 = scalar_select %p177, %s14, 1
      %s179 = smul.addr %s178, 4
      %s180 = scalar_lea.vmem %s3, %s179
      %s181 = smul.u32 4, %s14
      %p182 = scmp.lt.s32.totalorder %s181, 7
      %s183 = scalar_select %p182, %s181, 7
      %s184 = smul.addr %s183, 8
      %s185 = smul.addr %s184, 4
      %s186 = scalar_lea.vmem %s1, %s185
      %s187 = smul.u32 4, %s14
      %s188 = smul.u32 4, %s14
      %p189 = scmp.lt.s32.totalorder %s188, 7
      %s190 = scalar_select %p189, %s188, 7
      %s191 = smul.addr %s190, 8
      %s192 = smul.addr %s191, 4
      %s193 = scalar_lea.vmem %s2, %s192
      %s194 = smul.u32 4, %s14
      %p195 = scmp.lt.s32.totalorder %s14, 1
      %s196 = scalar_select %p195, %s14, 1
      %s197 = smul.addr %s196, 4
      %s198 = scalar_lea.vmem %s3, %s197
      %v200 = vld [vmem:[%s186] sm:$0xf]
      %v201 = vld [vmem:[%s186 + $0x4] sm:$0xf]
      %v202 = vld [vmem:[%s186 + $0x8] sm:$0xf]
      %v203 = vld [vmem:[%s186 + $0xc] sm:$0xf]
      %v204 = vld [vmem:[%s186 + $0x10] sm:$0xf]
      %v205 = vld [vmem:[%s186 + $0x14] sm:$0xf]
      %v206 = vld [vmem:[%s186 + $0x18] sm:$0xf]
      %v207 = vld [vmem:[%s186 + $0x1c] sm:$0xf]
      %v208 = vld [vmem:[%s186 + $0x20] sm:$0xf]
      %v209 = vld [vmem:[%s186 + $0x24] sm:$0xf]
      %v210 = vld [vmem:[%s186 + $0x28] sm:$0xf]
      %v211 = vld [vmem:[%s186 + $0x2c] sm:$0xf]
      %v212 = vld [vmem:[%s186 + $0x30] sm:$0xf]
      %v213 = vld [vmem:[%s186 + $0x34] sm:$0xf]
      %v214 = vld [vmem:[%s186 + $0x38] sm:$0xf]
      %v215 = vld [vmem:[%s186 + $0x3c] sm:$0xf]
      %v216 = vld [vmem:[%s186 + $0x40] sm:$0xf]
      %v217 = vld [vmem:[%s186 + $0x44] sm:$0xf]
      %v218 = vld [vmem:[%s186 + $0x48] sm:$0xf]
      %v219 = vld [vmem:[%s186 + $0x4c] sm:$0xf]
      %v220 = vld [vmem:[%s186 + $0x50] sm:$0xf]
      %v221 = vld [vmem:[%s186 + $0x54] sm:$0xf]
      %v222 = vld [vmem:[%s186 + $0x58] sm:$0xf]
      %v223 = vld [vmem:[%s186 + $0x5c] sm:$0xf]
      %v224 = vld [vmem:[%s186 + $0x60] sm:$0xf]
      %v225 = vld [vmem:[%s186 + $0x64] sm:$0xf]
      %v226 = vld [vmem:[%s186 + $0x68] sm:$0xf]
      %v227 = vld [vmem:[%s186 + $0x6c] sm:$0xf]
      %v228 = vld [vmem:[%s186 + $0x70] sm:$0xf]
      %v229 = vld [vmem:[%s186 + $0x74] sm:$0xf]
      %v230 = vld [vmem:[%s186 + $0x78] sm:$0xf]
      %v231 = vld [vmem:[%s186 + $0x7c] sm:$0xf]
      %v232 = vld [vmem:[%s193] sm:$0xf]
      %v233 = vld [vmem:[%s193 + $0x4] sm:$0xf]
      %v234 = vld [vmem:[%s193 + $0x8] sm:$0xf]
      %v235 = vld [vmem:[%s193 + $0xc] sm:$0xf]
      %v236 = vld [vmem:[%s193 + $0x10] sm:$0xf]
      %v237 = vld [vmem:[%s193 + $0x14] sm:$0xf]
      %v238 = vld [vmem:[%s193 + $0x18] sm:$0xf]
      %v239 = vld [vmem:[%s193 + $0x1c] sm:$0xf]
      %v240 = vld [vmem:[%s193 + $0x20] sm:$0xf]
      %v241 = vld [vmem:[%s193 + $0x24] sm:$0xf]
      %v242 = vld [vmem:[%s193 + $0x28] sm:$0xf]
      %v243 = vld [vmem:[%s193 + $0x2c] sm:$0xf]
      %v244 = vld [vmem:[%s193 + $0x30] sm:$0xf]
      %v245 = vld [vmem:[%s193 + $0x34] sm:$0xf]
      %v246 = vld [vmem:[%s193 + $0x38] sm:$0xf]
      %v247 = vld [vmem:[%s193 + $0x3c] sm:$0xf]
      %v248 = vld [vmem:[%s193 + $0x40] sm:$0xf]
      %v249 = vld [vmem:[%s193 + $0x44] sm:$0xf]
      %v250 = vld [vmem:[%s193 + $0x48] sm:$0xf]
      %v251 = vld [vmem:[%s193 + $0x4c] sm:$0xf]
      %v252 = vld [vmem:[%s193 + $0x50] sm:$0xf]
      %v253 = vld [vmem:[%s193 + $0x54] sm:$0xf]
      %v254 = vld [vmem:[%s193 + $0x58] sm:$0xf]
      %v255 = vld [vmem:[%s193 + $0x5c] sm:$0xf]
      %v256 = vld [vmem:[%s193 + $0x60] sm:$0xf]
      %v257 = vld [vmem:[%s193 + $0x64] sm:$0xf]
      %v258 = vld [vmem:[%s193 + $0x68] sm:$0xf]
      %v259 = vld [vmem:[%s193 + $0x6c] sm:$0xf]
      %v260 = vld [vmem:[%s193 + $0x70] sm:$0xf]
      %v261 = vld [vmem:[%s193 + $0x74] sm:$0xf]
      %v262 = vld [vmem:[%s193 + $0x78] sm:$0xf]
      %v263 = vld [vmem:[%s193 + $0x7c] sm:$0xf]
      %v272 = vunpack.c.l.b16 %v200
      %v273 = vunpack.c.l.b16 %v201
      %v274 = vunpack.c.l.b16 %v202
      %v275 = vunpack.c.l.b16 %v203
      %v276 = vunpack.c.l.b16 %v204
      %v277 = vunpack.c.l.b16 %v205
      %v278 = vunpack.c.l.b16 %v206
      %v279 = vunpack.c.l.b16 %v207
      %v280 = vpack.c.b16 %v273, %v272
      %v281 = vpack.c.b16 %v275, %v274
      %v282 = vpack.c.b16 %v277, %v276
      %v283 = vpack.c.b16 %v279, %v278
      %v292 = vunpack.c.l.b16 %v232
      %v293 = vunpack.c.l.b16 %v233
      %v294 = vunpack.c.l.b16 %v234
      %v295 = vunpack.c.l.b16 %v235
      %v296 = vunpack.c.l.b16 %v236
      %v297 = vunpack.c.l.b16 %v237
      %v298 = vunpack.c.l.b16 %v238
      %v299 = vunpack.c.l.b16 %v239
      %v300 = vpack.c.b16 %v293, %v292
      %v301 = vpack.c.b16 %v295, %v294
      %v302 = vpack.c.b16 %v297, %v296
      %v303 = vpack.c.b16 %v299, %v298
      %vm304 = vcmask 261120
      %v306 = vsel %vm304, %v280, 0
      %v309 = vsel %vm304, %v281, 0
      %v312 = vsel %vm304, %v282, 0
      %v315 = vsel %vm304, %v283, 0
      %v318 = vsel %vm304, %v300, 0
      %v321 = vsel %vm304, %v301, 0
      %v324 = vsel %vm304, %v302, 0
      %v327 = vsel %vm304, %v303, 0
      %329 = vmatprep.subr.bf16.mxu0 0
      %330 = vmatpush1.bf16.xpose.msra.mxu0 %v318
      %331 = vmatprep.subr.bf16.mxu0 0
      %332 = vmatpush1.bf16.xpose.msra.mxu0 %v321
      %333 = vmatprep.subr.bf16.mxu0 0
      %334 = vmatpush1.bf16.xpose.msra.mxu0 %v324
      %335 = vmatprep.subr.bf16.mxu0 0
      %336 = vmatpush1.bf16.xpose.msra.mxu0 %v327
      %337 = vmatprep.subr.bf16.mxu0 0
      %338 = vmatpush1.bf16.xpose.msra.mxu0 0
      %339 = vmatprep.subr.bf16.mxu0 0
      %340 = vmatpush1.bf16.xpose.msra.mxu0 0
      %341 = vmatprep.subr.bf16.mxu0 0
      %342 = vmatpush1.bf16.xpose.msra.mxu0 0
      %343 = vmatprep.subr.bf16.mxu0 0
      %344 = vmatpush1.bf16.xpose.msra.mxu0 0
      %345 = vmatprep.subr.bf16.mxu0 0
      %346 = vmatpush1.bf16.xpose.msra.mxu0 0
      %347 = vmatprep.subr.bf16.mxu0 0
      %348 = vmatpush1.bf16.xpose.msra.mxu0 0
      %349 = vmatprep.subr.bf16.mxu0 0
      %350 = vmatpush1.bf16.xpose.msra.mxu0 0
      %351 = vmatprep.subr.bf16.mxu0 0
      %352 = vmatpush1.bf16.xpose.msra.mxu0 0
      %353 = vmatprep.subr.bf16.mxu0 0
      %354 = vmatpush1.bf16.xpose.msra.mxu0 0
      %355 = vmatprep.subr.bf16.mxu0 0
      %356 = vmatpush1.bf16.xpose.msra.mxu0 0
      %357 = vmatprep.subr.bf16.mxu0 0
      %358 = vmatpush1.bf16.xpose.msra.mxu0 0
      %359 = vmatprep.subr.bf16.mxu0 0
      %360 = vmatpush1.bf16.xpose.msra.mxu0 0
      %361 = vmatprep.mubr.bf16.mxu0 0
      %362 = vmatmul.mubr.bf16.gmra.mrb[0].mxu0 %v306
      %v363 = vpop.f32.mrb[0].mxu0
      %v364 = vadd.f32 0.0, %v363
      %v365 = vpop.f32.mrb[0].mxu0
      %v366 = vpop.f32.mrb[0].mxu0
      %v367 = vadd.f32 0.0, %v366
      %v368 = vpop.f32.mrb[0].mxu0
      %369 = vmatprep.mubr.bf16.mxu0 0
      %370 = vmatmul.mubr.bf16.gmra.mrb[0].mxu0 %v309
      %v371 = vpop.f32.mrb[0].mxu0
      %v372 = vadd.f32 0.0, %v371
      %v373 = vpop.f32.mrb[0].mxu0
      %v374 = vpop.f32.mrb[0].mxu0
      %v375 = vadd.f32 0.0, %v374
      %v376 = vpop.f32.mrb[0].mxu0
      %377 = vmatprep.mubr.bf16.mxu0 0
      %378 = vmatmul.mubr.bf16.gmra.mrb[0].mxu0 %v312
      %v379 = vpop.f32.mrb[0].mxu0
      %v380 = vadd.f32 0.0, %v379
      %v381 = vpop.f32.mrb[0].mxu0
      %v382 = vpop.f32.mrb[0].mxu0
      %v383 = vadd.f32 0.0, %v382
      %v384 = vpop.f32.mrb[0].mxu0
      %385 = vmatprep.mubr.bf16.mxu0 0
      %386 = vmatmul.mubr.bf16.gmra.mrb[0].mxu0 %v315
      %v387 = vpop.f32.mrb[0].mxu0
      %v388 = vadd.f32 0.0, %v387
      %v389 = vpop.f32.mrb[0].mxu0
      %v390 = vpop.f32.mrb[0].mxu0
      %v391 = vadd.f32 0.0, %v390
      %v392 = vpop.f32.mrb[0].mxu0
      %393 = vdwg.mxu0
      %v402 = vunpack.c.l.b16 %v208
      %v403 = vunpack.c.l.b16 %v209
      %v404 = vunpack.c.l.b16 %v210
      %v405 = vunpack.c.l.b16 %v211
      %v406 = vunpack.c.l.b16 %v212
      %v407 = vunpack.c.l.b16 %v213
      %v408 = vunpack.c.l.b16 %v214
      %v409 = vunpack.c.l.b16 %v215
      %v410 = vpack.c.b16 %v403, %v402
      %v411 = vpack.c.b16 %v405, %v404
      %v412 = vpack.c.b16 %v407, %v406
      %v413 = vpack.c.b16 %v409, %v408
      %v422 = vunpack.c.l.b16 %v240
      %v423 = vunpack.c.l.b16 %v241
      %v424 = vunpack.c.l.b16 %v242
      %v425 = vunpack.c.l.b16 %v243
      %v426 = vunpack.c.l.b16 %v244
      %v427 = vunpack.c.l.b16 %v245
      %v428 = vunpack.c.l.b16 %v246
      %v429 = vunpack.c.l.b16 %v247
      %v430 = vpack.c.b16 %v423, %v422
      %v431 = vpack.c.b16 %v425, %v424
      %v432 = vpack.c.b16 %v427, %v426
      %v433 = vpack.c.b16 %v429, %v428
      %v435 = vsel %vm304, %v410, 0
      %v438 = vsel %vm304, %v411, 0
      %v441 = vsel %vm304, %v412, 0
      %v444 = vsel %vm304, %v413, 0
      %v447 = vsel %vm304, %v430, 0
      %v450 = vsel %vm304, %v431, 0
      %v453 = vsel %vm304, %v432, 0
      %v456 = vsel %vm304, %v433, 0
      %458 = vmatprep.subr.bf16.mxu0 0
      %459 = vmatpush1.bf16.xpose.msra.mxu0 %v447
      %460 = vmatprep.subr.bf16.mxu0 0
      %461 = vmatpush1.bf16.xpose.msra.mxu0 %v450
      %462 = vmatprep.subr.bf16.mxu0 0
      %463 = vmatpush1.bf16.xpose.msra.mxu0 %v453
      %464 = vmatprep.subr.bf16.mxu0 0
      %465 = vmatpush1.bf16.xpose.msra.mxu0 %v456
      %466 = vmatprep.subr.bf16.mxu0 0
      %467 = vmatpush1.bf16.xpose.msra.mxu0 0
      %468 = vmatprep.subr.bf16.mxu0 0
      %469 = vmatpush1.bf16.xpose.msra.mxu0 0
      %470 = vmatprep.subr.bf16.mxu0 0
      %471 = vmatpush1.bf16.xpose.msra.mxu0 0
      %472 = vmatprep.subr.bf16.mxu0 0
      %473 = vmatpush1.bf16.xpose.msra.mxu0 0
      %474 = vmatprep.subr.bf16.mxu0 0
      %475 = vmatpush1.bf16.xpose.msra.mxu0 0
      %476 = vmatprep.subr.bf16.mxu0 0
      %477 = vmatpush1.bf16.xpose.msra.mxu0 0
      %478 = vmatprep.subr.bf16.mxu0 0
      %479 = vmatpush1.bf16.xpose.msra.mxu0 0
      %480 = vmatprep.subr.bf16.mxu0 0
      %481 = vmatpush1.bf16.xpose.msra.mxu0 0
      %482 = vmatprep.subr.bf16.mxu0 0
      %483 = vmatpush1.bf16.xpose.msra.mxu0 0
      %484 = vmatprep.subr.bf16.mxu0 0
      %485 = vmatpush1.bf16.xpose.msra.mxu0 0
      %486 = vmatprep.subr.bf16.mxu0 0
      %487 = vmatpush1.bf16.xpose.msra.mxu0 0
      %488 = vmatprep.subr.bf16.mxu0 0
      %489 = vmatpush1.bf16.xpose.msra.mxu0 0
      %490 = vmatprep.mubr.bf16.mxu0 0
      %491 = vmatmul.mubr.bf16.gmra.mrb[0].mxu0 %v435
      %v492 = vpop.f32.mrb[0].mxu0
      %v493 = vadd.f32 0.0, %v492
      %v494 = vpop.f32.mrb[0].mxu0
      %v495 = vpop.f32.mrb[0].mxu0
      %v496 = vadd.f32 0.0, %v495
      %v497 = vpop.f32.mrb[0].mxu0
      %498 = vmatprep.mubr.bf16.mxu0 0
      %499 = vmatmul.mubr.bf16.gmra.mrb[0].mxu0 %v438
      %v500 = vpop.f32.mrb[0].mxu0
      %v501 = vadd.f32 0.0, %v500
      %v502 = vpop.f32.mrb[0].mxu0
      %v503 = vpop.f32.mrb[0].mxu0
      %v504 = vadd.f32 0.0, %v503
      %v505 = vpop.f32.mrb[0].mxu0
      %506 = vmatprep.mubr.bf16.mxu0 0
      %507 = vmatmul.mubr.bf16.gmra.mrb[0].mxu0 %v441
      %v508 = vpop.f32.mrb[0].mxu0
      %v509 = vadd.f32 0.0, %v508
      %v510 = vpop.f32.mrb[0].mxu0
      %v511 = vpop.f32.mrb[0].mxu0
      %v512 = vadd.f32 0.0, %v511
      %v513 = vpop.f32.mrb[0].mxu0
      %514 = vmatprep.mubr.bf16.mxu0 0
      %515 = vmatmul.mubr.bf16.gmra.mrb[0].mxu0 %v444
      %v516 = vpop.f32.mrb[0].mxu0
      %v517 = vadd.f32 0.0, %v516
      %v518 = vpop.f32.mrb[0].mxu0
      %v519 = vpop.f32.mrb[0].mxu0
      %v520 = vadd.f32 0.0, %v519
      %v521 = vpop.f32.mrb[0].mxu0
      %522 = vdwg.mxu0
      %v531 = vunpack.c.l.b16 %v216
      %v532 = vunpack.c.l.b16 %v217
      %v533 = vunpack.c.l.b16 %v218
      %v534 = vunpack.c.l.b16 %v219
      %v535 = vunpack.c.l.b16 %v220
      %v536 = vunpack.c.l.b16 %v221
      %v537 = vunpack.c.l.b16 %v222
      %v538 = vunpack.c.l.b16 %v223
      %v539 = vpack.c.b16 %v532, %v531
      %v540 = vpack.c.b16 %v534, %v533
      %v541 = vpack.c.b16 %v536, %v535
      %v542 = vpack.c.b16 %v538, %v537
      %v551 = vunpack.c.l.b16 %v248
      %v552 = vunpack.c.l.b16 %v249
      %v553 = vunpack.c.l.b16 %v250
      %v554 = vunpack.c.l.b16 %v251
      %v555 = vunpack.c.l.b16 %v252
      %v556 = vunpack.c.l.b16 %v253
      %v557 = vunpack.c.l.b16 %v254
      %v558 = vunpack.c.l.b16 %v255
      %v559 = vpack.c.b16 %v552, %v551
      %v560 = vpack.c.b16 %v554, %v553
      %v561 = vpack.c.b16 %v556, %v555
      %v562 = vpack.c.b16 %v558, %v557
      %v564 = vsel %vm304, %v539, 0
      %v567 = vsel %vm304, %v540, 0
      %v570 = vsel %vm304, %v541, 0
      %v573 = vsel %vm304, %v542, 0
      %v576 = vsel %vm304, %v559, 0
      %v579 = vsel %vm304, %v560, 0
      %v582 = vsel %vm304, %v561, 0
      %v585 = vsel %vm304, %v562, 0
      %587 = vmatprep.subr.bf16.mxu0 0
      %588 = vmatpush1.bf16.xpose.msra.mxu0 %v576
      %589 = vmatprep.subr.bf16.mxu0 0
      %590 = vmatpush1.bf16.xpose.msra.mxu0 %v579
      %591 = vmatprep.subr.bf16.mxu0 0
      %592 = vmatpush1.bf16.xpose.msra.mxu0 %v582
      %593 = vmatprep.subr.bf16.mxu0 0
      %594 = vmatpush1.bf16.xpose.msra.mxu0 %v585
      %595 = vmatprep.subr.bf16.mxu0 0
      %596 = vmatpush1.bf16.xpose.msra.mxu0 0
      %597 = vmatprep.subr.bf16.mxu0 0
      %598 = vmatpush1.bf16.xpose.msra.mxu0 0
      %599 = vmatprep.subr.bf16.mxu0 0
      %600 = vmatpush1.bf16.xpose.msra.mxu0 0
      %601 = vmatprep.subr.bf16.mxu0 0
      %602 = vmatpush1.bf16.xpose.msra.mxu0 0
      %603 = vmatprep.subr.bf16.mxu0 0
      %604 = vmatpush1.bf16.xpose.msra.mxu0 0
      %605 = vmatprep.subr.bf16.mxu0 0
      %606 = vmatpush1.bf16.xpose.msra.mxu0 0
      %607 = vmatprep.subr.bf16.mxu0 0
      %608 = vmatpush1.bf16.xpose.msra.mxu0 0
      %609 = vmatprep.subr.bf16.mxu0 0
      %610 = vmatpush1.bf16.xpose.msra.mxu0 0
      %611 = vmatprep.subr.bf16.mxu0 0
      %612 = vmatpush1.bf16.xpose.msra.mxu0 0
      %613 = vmatprep.subr.bf16.mxu0 0
      %614 = vmatpush1.bf16.xpose.msra.mxu0 0
      %615 = vmatprep.subr.bf16.mxu0 0
      %616 = vmatpush1.bf16.xpose.msra.mxu0 0
      %617 = vmatprep.subr.bf16.mxu0 0
      %618 = vmatpush1.bf16.xpose.msra.mxu0 0
      %619 = vmatprep.mubr.bf16.mxu0 0
      %620 = vmatmul.mubr.bf16.gmra.mrb[0].mxu0 %v564
      %v621 = vpop.f32.mrb[0].mxu0
      %v622 = vadd.f32 0.0, %v621
      %v623 = vpop.f32.mrb[0].mxu0
      %v624 = vpop.f32.mrb[0].mxu0
      %v625 = vadd.f32 0.0, %v624
      %v626 = vpop.f32.mrb[0].mxu0
      %627 = vmatprep.mubr.bf16.mxu0 0
      %628 = vmatmul.mubr.bf16.gmra.mrb[0].mxu0 %v567
      %v629 = vpop.f32.mrb[0].mxu0
      %v630 = vadd.f32 0.0, %v629
      %v631 = vpop.f32.mrb[0].mxu0
      %v632 = vpop.f32.mrb[0].mxu0
      %v633 = vadd.f32 0.0, %v632
      %v634 = vpop.f32.mrb[0].mxu0
      %635 = vmatprep.mubr.bf16.mxu0 0
      %636 = vmatmul.mubr.bf16.gmra.mrb[0].mxu0 %v570
      %v637 = vpop.f32.mrb[0].mxu0
      %v638 = vadd.f32 0.0, %v637
      %v639 = vpop.f32.mrb[0].mxu0
      %v640 = vpop.f32.mrb[0].mxu0
      %v641 = vadd.f32 0.0, %v640
      %v642 = vpop.f32.mrb[0].mxu0
      %643 = vmatprep.mubr.bf16.mxu0 0
      %644 = vmatmul.mubr.bf16.gmra.mrb[0].mxu0 %v573
      %v645 = vpop.f32.mrb[0].mxu0
      %v646 = vadd.f32 0.0, %v645
      %v647 = vpop.f32.mrb[0].mxu0
      %v648 = vpop.f32.mrb[0].mxu0
      %v649 = vadd.f32 0.0, %v648
      %v650 = vpop.f32.mrb[0].mxu0
      %651 = vdwg.mxu0
      %v660 = vunpack.c.l.b16 %v224
      %v661 = vunpack.c.l.b16 %v225
      %v662 = vunpack.c.l.b16 %v226
      %v663 = vunpack.c.l.b16 %v227
      %v664 = vunpack.c.l.b16 %v228
      %v665 = vunpack.c.l.b16 %v229
      %v666 = vunpack.c.l.b16 %v230
      %v667 = vunpack.c.l.b16 %v231
      %v668 = vpack.c.b16 %v661, %v660
      %v669 = vpack.c.b16 %v663, %v662
      %v670 = vpack.c.b16 %v665, %v664
      %v671 = vpack.c.b16 %v667, %v666
      %v680 = vunpack.c.l.b16 %v256
      %v681 = vunpack.c.l.b16 %v257
      %v682 = vunpack.c.l.b16 %v258
      %v683 = vunpack.c.l.b16 %v259
      %v684 = vunpack.c.l.b16 %v260
      %v685 = vunpack.c.l.b16 %v261
      %v686 = vunpack.c.l.b16 %v262
      %v687 = vunpack.c.l.b16 %v263
      %v688 = vpack.c.b16 %v681, %v680
      %v689 = vpack.c.b16 %v683, %v682
      %v690 = vpack.c.b16 %v685, %v684
      %v691 = vpack.c.b16 %v687, %v686
      %v693 = vsel %vm304, %v668, 0
      %v696 = vsel %vm304, %v669, 0
      %v699 = vsel %vm304, %v670, 0
      %v702 = vsel %vm304, %v671, 0
      %v705 = vsel %vm304, %v688, 0
      %v708 = vsel %vm304, %v689, 0
      %v711 = vsel %vm304, %v690, 0
      %v714 = vsel %vm304, %v691, 0
      %716 = vmatprep.subr.bf16.mxu0 0
      %717 = vmatpush1.bf16.xpose.msra.mxu0 %v705
      %718 = vmatprep.subr.bf16.mxu0 0
      %719 = vmatpush1.bf16.xpose.msra.mxu0 %v708
      %720 = vmatprep.subr.bf16.mxu0 0
      %721 = vmatpush1.bf16.xpose.msra.mxu0 %v711
      %722 = vmatprep.subr.bf16.mxu0 0
      %723 = vmatpush1.bf16.xpose.msra.mxu0 %v714
      %724 = vmatprep.subr.bf16.mxu0 0
      %725 = vmatpush1.bf16.xpose.msra.mxu0 0
      %726 = vmatprep.subr.bf16.mxu0 0
      %727 = vmatpush1.bf16.xpose.msra.mxu0 0
      %728 = vmatprep.subr.bf16.mxu0 0
      %729 = vmatpush1.bf16.xpose.msra.mxu0 0
      %730 = vmatprep.subr.bf16.mxu0 0
      %731 = vmatpush1.bf16.xpose.msra.mxu0 0
      %732 = vmatprep.subr.bf16.mxu0 0
      %733 = vmatpush1.bf16.xpose.msra.mxu0 0
      %734 = vmatprep.subr.bf16.mxu0 0
      %735 = vmatpush1.bf16.xpose.msra.mxu0 0
      %736 = vmatprep.subr.bf16.mxu0 0
      %737 = vmatpush1.bf16.xpose.msra.mxu0 0
      %738 = vmatprep.subr.bf16.mxu0 0
      %739 = vmatpush1.bf16.xpose.msra.mxu0 0
      %740 = vmatprep.subr.bf16.mxu0 0
      %741 = vmatpush1.bf16.xpose.msra.mxu0 0
      %742 = vmatprep.subr.bf16.mxu0 0
      %743 = vmatpush1.bf16.xpose.msra.mxu0 0
      %744 = vmatprep.subr.bf16.mxu0 0
      %745 = vmatpush1.bf16.xpose.msra.mxu0 0
      %746 = vmatprep.subr.bf16.mxu0 0
      %747 = vmatpush1.bf16.xpose.msra.mxu0 0
      %748 = vmatprep.mubr.bf16.mxu0 0
      %749 = vmatmul.mubr.bf16.gmra.mrb[0].mxu0 %v693
      %v750 = vpop.f32.mrb[0].mxu0
      %v751 = vadd.f32 0.0, %v750
      %v752 = vpop.f32.mrb[0].mxu0
      %v753 = vpop.f32.mrb[0].mxu0
      %v754 = vadd.f32 0.0, %v753
      %v755 = vpop.f32.mrb[0].mxu0
      %756 = vmatprep.mubr.bf16.mxu0 0
      %757 = vmatmul.mubr.bf16.gmra.mrb[0].mxu0 %v696
      %v758 = vpop.f32.mrb[0].mxu0
      %v759 = vadd.f32 0.0, %v758
      %v760 = vpop.f32.mrb[0].mxu0
      %v761 = vpop.f32.mrb[0].mxu0
      %v762 = vadd.f32 0.0, %v761
      %v763 = vpop.f32.mrb[0].mxu0
      %764 = vmatprep.mubr.bf16.mxu0 0
      %765 = vmatmul.mubr.bf16.gmra.mrb[0].mxu0 %v699
      %v766 = vpop.f32.mrb[0].mxu0
      %v767 = vadd.f32 0.0, %v766
      %v768 = vpop.f32.mrb[0].mxu0
      %v769 = vpop.f32.mrb[0].mxu0
      %v770 = vadd.f32 0.0, %v769
      %v771 = vpop.f32.mrb[0].mxu0
      %772 = vmatprep.mubr.bf16.mxu0 0
      %773 = vmatmul.mubr.bf16.gmra.mrb[0].mxu0 %v702
      %v774 = vpop.f32.mrb[0].mxu0
      %v775 = vadd.f32 0.0, %v774
      %v776 = vpop.f32.mrb[0].mxu0
      %v777 = vpop.f32.mrb[0].mxu0
      %v778 = vadd.f32 0.0, %v777
      %v779 = vpop.f32.mrb[0].mxu0
      %780 = vdwg.mxu0
      %v781 = vld [vmem:[%s0] sm:$0xff]
      %v782 = vld [vmem:[%s0 + $0x8] sm:$0xff]
      %v783 = vld [vmem:[%s0 + $0x10] sm:$0xff]
      %v784 = vld [vmem:[%s0 + $0x18] sm:$0xff]
      %v785 = vld [vmem:[%s0 + $0x20] sm:$0xff]
      %v786 = vld [vmem:[%s0 + $0x28] sm:$0xff]
      %v787 = vld [vmem:[%s0 + $0x30] sm:$0xff]
      %v788 = vld [vmem:[%s0 + $0x38] sm:$0xff]
      %v789 = vmul.f32 %v364, %v781
      %v790 = vmul.f32 %v367, %v782
      %v791 = vmul.f32 %v372, %v783
      %v792 = vmul.f32 %v375, %v784
      %v793 = vmul.f32 %v380, %v785
      %v794 = vmul.f32 %v383, %v786
      %v795 = vmul.f32 %v388, %v787
      %v796 = vmul.f32 %v391, %v788
      %v797 = vmul.f32 %v493, %v781
      %v798 = vmul.f32 %v496, %v782
      %v799 = vmul.f32 %v501, %v783
      %v800 = vmul.f32 %v504, %v784
      %v801 = vmul.f32 %v509, %v785
      %v802 = vmul.f32 %v512, %v786
      %v803 = vmul.f32 %v517, %v787
      %v804 = vmul.f32 %v520, %v788
      %v805 = vmul.f32 %v622, %v781
      %v806 = vmul.f32 %v625, %v782
      %v807 = vmul.f32 %v630, %v783
      %v808 = vmul.f32 %v633, %v784
      %v809 = vmul.f32 %v638, %v785
      %v810 = vmul.f32 %v641, %v786
      %v811 = vmul.f32 %v646, %v787
      %v812 = vmul.f32 %v649, %v788
      %v813 = vmul.f32 %v751, %v781
      %v814 = vmul.f32 %v754, %v782
      %v815 = vmul.f32 %v759, %v783
      %v816 = vmul.f32 %v762, %v784
      %v817 = vmul.f32 %v767, %v785
      %v818 = vmul.f32 %v770, %v786
      %v819 = vmul.f32 %v775, %v787
      %v820 = vmul.f32 %v778, %v788
      %vm821 = vcmask 523264
      %v822 = vsel %vm821, %v789, 0.0
      %823 = vadd.xlane.f32.xlu0 %v822
      %v824 = vpop.xlane.xlu0 %823
      %v825 = vsel %vm821, %v790, 0.0
      %826 = vadd.xlane.f32.xlu0 %v825
      %v827 = vpop.xlane.xlu0 %826
      %v828 = vsel %vm821, %v791, 0.0
      %829 = vadd.xlane.f32.xlu0 %v828
      %v830 = vpop.xlane.xlu0 %829
      %v831 = vsel %vm821, %v792, 0.0
      %832 = vadd.xlane.f32.xlu0 %v831
      %v833 = vpop.xlane.xlu0 %832
      %v834 = vsel %vm821, %v793, 0.0
      %835 = vadd.xlane.f32.xlu0 %v834
      %v836 = vpop.xlane.xlu0 %835
      %v837 = vsel %vm821, %v794, 0.0
      %838 = vadd.xlane.f32.xlu0 %v837
      %v839 = vpop.xlane.xlu0 %838
      %v840 = vsel %vm821, %v795, 0.0
      %841 = vadd.xlane.f32.xlu0 %v840
      %v842 = vpop.xlane.xlu0 %841
      %v843 = vsel %vm821, %v796, 0.0
      %844 = vadd.xlane.f32.xlu0 %v843
      %v845 = vpop.xlane.xlu0 %844
      %v846 = vsel %vm821, %v797, 0.0
      %847 = vadd.xlane.f32.xlu0 %v846
      %v848 = vpop.xlane.xlu0 %847
      %v849 = vsel %vm821, %v798, 0.0
      %850 = vadd.xlane.f32.xlu0 %v849
      %v851 = vpop.xlane.xlu0 %850
      %v852 = vsel %vm821, %v799, 0.0
      %853 = vadd.xlane.f32.xlu0 %v852
      %v854 = vpop.xlane.xlu0 %853
      %v855 = vsel %vm821, %v800, 0.0
      %856 = vadd.xlane.f32.xlu0 %v855
      %v857 = vpop.xlane.xlu0 %856
      %v858 = vsel %vm821, %v801, 0.0
      %859 = vadd.xlane.f32.xlu0 %v858
      %v860 = vpop.xlane.xlu0 %859
      %v861 = vsel %vm821, %v802, 0.0
      %862 = vadd.xlane.f32.xlu0 %v861
      %v863 = vpop.xlane.xlu0 %862
      %v864 = vsel %vm821, %v803, 0.0
      %865 = vadd.xlane.f32.xlu0 %v864
      %v866 = vpop.xlane.xlu0 %865
      %v867 = vsel %vm821, %v804, 0.0
      %868 = vadd.xlane.f32.xlu0 %v867
      %v869 = vpop.xlane.xlu0 %868
      %v870 = vsel %vm821, %v805, 0.0
      %871 = vadd.xlane.f32.xlu0 %v870
      %v872 = vpop.xlane.xlu0 %871
      %v873 = vsel %vm821, %v806, 0.0
      %874 = vadd.xlane.f32.xlu0 %v873
      %v875 = vpop.xlane.xlu0 %874
      %v876 = vsel %vm821, %v807, 0.0
      %877 = vadd.xlane.f32.xlu0 %v876
      %v878 = vpop.xlane.xlu0 %877
      %v879 = vsel %vm821, %v808, 0.0
      %880 = vadd.xlane.f32.xlu0 %v879
      %v881 = vpop.xlane.xlu0 %880
      %v882 = vsel %vm821, %v809, 0.0
      %883 = vadd.xlane.f32.xlu0 %v882
      %v884 = vpop.xlane.xlu0 %883
      %v885 = vsel %vm821, %v810, 0.0
      %886 = vadd.xlane.f32.xlu0 %v885
      %v887 = vpop.xlane.xlu0 %886
      %v888 = vsel %vm821, %v811, 0.0
      %889 = vadd.xlane.f32.xlu0 %v888
      %v890 = vpop.xlane.xlu0 %889
      %v891 = vsel %vm821, %v812, 0.0
      %892 = vadd.xlane.f32.xlu0 %v891
      %v893 = vpop.xlane.xlu0 %892
      %v894 = vsel %vm821, %v813, 0.0
      %895 = vadd.xlane.f32.xlu0 %v894
      %v896 = vpop.xlane.xlu0 %895
      %v897 = vsel %vm821, %v814, 0.0
      %898 = vadd.xlane.f32.xlu0 %v897
      %v899 = vpop.xlane.xlu0 %898
      %v900 = vsel %vm821, %v815, 0.0
      %901 = vadd.xlane.f32.xlu0 %v900
      %v902 = vpop.xlane.xlu0 %901
      %v903 = vsel %vm821, %v816, 0.0
      %904 = vadd.xlane.f32.xlu0 %v903
      %v905 = vpop.xlane.xlu0 %904
      %v906 = vsel %vm821, %v817, 0.0
      %907 = vadd.xlane.f32.xlu0 %v906
      %v908 = vpop.xlane.xlu0 %907
      %v909 = vsel %vm821, %v818, 0.0
      %910 = vadd.xlane.f32.xlu0 %v909
      %v911 = vpop.xlane.xlu0 %910
      %v912 = vsel %vm821, %v819, 0.0
      %913 = vadd.xlane.f32.xlu0 %v912
      %v914 = vpop.xlane.xlu0 %913
      %v915 = vsel %vm821, %v820, 0.0
      %916 = vadd.xlane.f32.xlu0 %v915
      %v917 = vpop.xlane.xlu0 %916
      %vm918 = vcmp.gt.f32.partialorder %v781, 0.0
      %vm919 = vcmp.gt.f32.partialorder %v782, 0.0
      %vm920 = vcmp.gt.f32.partialorder %v783, 0.0
      %vm921 = vcmp.gt.f32.partialorder %v784, 0.0
      %vm922 = vcmp.gt.f32.partialorder %v785, 0.0
      %vm923 = vcmp.gt.f32.partialorder %v786, 0.0
      %vm924 = vcmp.gt.f32.partialorder %v787, 0.0
      %vm925 = vcmp.gt.f32.partialorder %v788, 0.0
      %v926 = vsel %vm918, 1, 0
      %v927 = vsel %vm919, 1, 0
      %v928 = vsel %vm920, 1, 0
      %v929 = vsel %vm921, 1, 0
      %v930 = vsel %vm922, 1, 0
      %v931 = vsel %vm923, 1, 0
      %v932 = vsel %vm924, 1, 0
      %v933 = vsel %vm925, 1, 0
      %vm934 = vcmp.eq.s32.totalorder %v926, 1
      %vm935 = vcmp.eq.s32.totalorder %v927, 1
      %vm936 = vcmp.eq.s32.totalorder %v928, 1
      %vm937 = vcmp.eq.s32.totalorder %v929, 1
      %vm938 = vcmp.eq.s32.totalorder %v930, 1
      %vm939 = vcmp.eq.s32.totalorder %v931, 1
      %vm940 = vcmp.eq.s32.totalorder %v932, 1
      %vm941 = vcmp.eq.s32.totalorder %v933, 1
      %v942 = vsel %vm934, %v364, -3.4028235e+38
      %v943 = vsel %vm935, %v367, -3.4028235e+38
      %v944 = vsel %vm936, %v372, -3.4028235e+38
      %v945 = vsel %vm937, %v375, -3.4028235e+38
      %v946 = vsel %vm938, %v380, -3.4028235e+38
      %v947 = vsel %vm939, %v383, -3.4028235e+38
      %v948 = vsel %vm940, %v388, -3.4028235e+38
      %v949 = vsel %vm941, %v391, -3.4028235e+38
      %v950 = vsel %vm934, %v493, -3.4028235e+38
      %v951 = vsel %vm935, %v496, -3.4028235e+38
      %v952 = vsel %vm936, %v501, -3.4028235e+38
      %v953 = vsel %vm937, %v504, -3.4028235e+38
      %v954 = vsel %vm938, %v509, -3.4028235e+38
      %v955 = vsel %vm939, %v512, -3.4028235e+38
      %v956 = vsel %vm940, %v517, -3.4028235e+38
      %v957 = vsel %vm941, %v520, -3.4028235e+38
      %v958 = vsel %vm934, %v622, -3.4028235e+38
      %v959 = vsel %vm935, %v625, -3.4028235e+38
      %v960 = vsel %vm936, %v630, -3.4028235e+38
      %v961 = vsel %vm937, %v633, -3.4028235e+38
      %v962 = vsel %vm938, %v638, -3.4028235e+38
      %v963 = vsel %vm939, %v641, -3.4028235e+38
      %v964 = vsel %vm940, %v646, -3.4028235e+38
      %v965 = vsel %vm941, %v649, -3.4028235e+38
      %v966 = vsel %vm934, %v751, -3.4028235e+38
      %v967 = vsel %vm935, %v754, -3.4028235e+38
      %v968 = vsel %vm936, %v759, -3.4028235e+38
      %v969 = vsel %vm937, %v762, -3.4028235e+38
      %v970 = vsel %vm938, %v767, -3.4028235e+38
      %v971 = vsel %vm939, %v770, -3.4028235e+38
      %v972 = vsel %vm940, %v775, -3.4028235e+38
      %v973 = vsel %vm941, %v778, -3.4028235e+38
      %v974 = vsel %vm821, %v942, -inf
      %975 = vmax.xlane.f32.xlu0 %v974
      %v976 = vpop.xlane.xlu0 %975
      %v977 = vsel %vm821, %v943, -inf
      %978 = vmax.xlane.f32.xlu0 %v977
      %v979 = vpop.xlane.xlu0 %978
      %v980 = vsel %vm821, %v944, -inf
      %981 = vmax.xlane.f32.xlu0 %v980
      %v982 = vpop.xlane.xlu0 %981
      %v983 = vsel %vm821, %v945, -inf
      %984 = vmax.xlane.f32.xlu0 %v983
      %v985 = vpop.xlane.xlu0 %984
      %v986 = vsel %vm821, %v946, -inf
      %987 = vmax.xlane.f32.xlu0 %v986
      %v988 = vpop.xlane.xlu0 %987
      %v989 = vsel %vm821, %v947, -inf
      %990 = vmax.xlane.f32.xlu0 %v989
      %v991 = vpop.xlane.xlu0 %990
      %v992 = vsel %vm821, %v948, -inf
      %993 = vmax.xlane.f32.xlu0 %v992
      %v994 = vpop.xlane.xlu0 %993
      %v995 = vsel %vm821, %v949, -inf
      %996 = vmax.xlane.f32.xlu0 %v995
      %v997 = vpop.xlane.xlu0 %996
      %v998 = vsel %vm821, %v950, -inf
      %999 = vmax.xlane.f32.xlu0 %v998
      %v1000 = vpop.xlane.xlu0 %999
      %v1001 = vsel %vm821, %v951, -inf
      %1002 = vmax.xlane.f32.xlu0 %v1001
      %v1003 = vpop.xlane.xlu0 %1002
      %v1004 = vsel %vm821, %v952, -inf
      %1005 = vmax.xlane.f32.xlu0 %v1004
      %v1006 = vpop.xlane.xlu0 %1005
      %v1007 = vsel %vm821, %v953, -inf
      %1008 = vmax.xlane.f32.xlu0 %v1007
      %v1009 = vpop.xlane.xlu0 %1008
      %v1010 = vsel %vm821, %v954, -inf
      %1011 = vmax.xlane.f32.xlu0 %v1010
      %v1012 = vpop.xlane.xlu0 %1011
      %v1013 = vsel %vm821, %v955, -inf
      %1014 = vmax.xlane.f32.xlu0 %v1013
      %v1015 = vpop.xlane.xlu0 %1014
      %v1016 = vsel %vm821, %v956, -inf
      %1017 = vmax.xlane.f32.xlu0 %v1016
      %v1018 = vpop.xlane.xlu0 %1017
      %v1019 = vsel %vm821, %v957, -inf
      %1020 = vmax.xlane.f32.xlu0 %v1019
      %v1021 = vpop.xlane.xlu0 %1020
      %v1022 = vsel %vm821, %v958, -inf
      %1023 = vmax.xlane.f32.xlu0 %v1022
      %v1024 = vpop.xlane.xlu0 %1023
      %v1025 = vsel %vm821, %v959, -inf
      %1026 = vmax.xlane.f32.xlu0 %v1025
      %v1027 = vpop.xlane.xlu0 %1026
      %v1028 = vsel %vm821, %v960, -inf
      %1029 = vmax.xlane.f32.xlu0 %v1028
      %v1030 = vpop.xlane.xlu0 %1029
      %v1031 = vsel %vm821, %v961, -inf
      %1032 = vmax.xlane.f32.xlu0 %v1031
      %v1033 = vpop.xlane.xlu0 %1032
      %v1034 = vsel %vm821, %v962, -inf
      %1035 = vmax.xlane.f32.xlu0 %v1034
      %v1036 = vpop.xlane.xlu0 %1035
      %v1037 = vsel %vm821, %v963, -inf
      %1038 = vmax.xlane.f32.xlu0 %v1037
      %v1039 = vpop.xlane.xlu0 %1038
      %v1040 = vsel %vm821, %v964, -inf
      %1041 = vmax.xlane.f32.xlu0 %v1040
      %v1042 = vpop.xlane.xlu0 %1041
      %v1043 = vsel %vm821, %v965, -inf
      %1044 = vmax.xlane.f32.xlu0 %v1043
      %v1045 = vpop.xlane.xlu0 %1044
      %v1046 = vsel %vm821, %v966, -inf
      %1047 = vmax.xlane.f32.xlu0 %v1046
      %v1048 = vpop.xlane.xlu0 %1047
      %v1049 = vsel %vm821, %v967, -inf
      %1050 = vmax.xlane.f32.xlu0 %v1049
      %v1051 = vpop.xlane.xlu0 %1050
      %v1052 = vsel %vm821, %v968, -inf
      %1053 = vmax.xlane.f32.xlu0 %v1052
      %v1054 = vpop.xlane.xlu0 %1053
      %v1055 = vsel %vm821, %v969, -inf
      %1056 = vmax.xlane.f32.xlu0 %v1055
      %v1057 = vpop.xlane.xlu0 %1056
      %v1058 = vsel %vm821, %v970, -inf
      %1059 = vmax.xlane.f32.xlu0 %v1058
      %v1060 = vpop.xlane.xlu0 %1059
      %v1061 = vsel %vm821, %v971, -inf
      %1062 = vmax.xlane.f32.xlu0 %v1061
      %v1063 = vpop.xlane.xlu0 %1062
      %v1064 = vsel %vm821, %v972, -inf
      %1065 = vmax.xlane.f32.xlu0 %v1064
      %v1066 = vpop.xlane.xlu0 %1065
      %v1067 = vsel %vm821, %v973, -inf
      %1068 = vmax.xlane.f32.xlu0 %v1067
      %v1069 = vpop.xlane.xlu0 %1068
      %v1070 = vmul.f32 %v824, 0.015625
      %v1071 = vmul.f32 %v827, 0.015625
      %v1072 = vmul.f32 %v830, 0.015625
      %v1073 = vmul.f32 %v833, 0.015625
      %v1074 = vmul.f32 %v836, 0.015625
      %v1075 = vmul.f32 %v839, 0.015625
      %v1076 = vmul.f32 %v842, 0.015625
      %v1077 = vmul.f32 %v845, 0.015625
      %v1078 = vmul.f32 %v848, 0.015625
      %v1079 = vmul.f32 %v851, 0.015625
      %v1080 = vmul.f32 %v854, 0.015625
      %v1081 = vmul.f32 %v857, 0.015625
      %v1082 = vmul.f32 %v860, 0.015625
      %v1083 = vmul.f32 %v863, 0.015625
      %v1084 = vmul.f32 %v866, 0.015625
      %v1085 = vmul.f32 %v869, 0.015625
      %v1086 = vmul.f32 %v872, 0.015625
      %v1087 = vmul.f32 %v875, 0.015625
      %v1088 = vmul.f32 %v878, 0.015625
      %v1089 = vmul.f32 %v881, 0.015625
      %v1090 = vmul.f32 %v884, 0.015625
      %v1091 = vmul.f32 %v887, 0.015625
      %v1092 = vmul.f32 %v890, 0.015625
      %v1093 = vmul.f32 %v893, 0.015625
      %v1094 = vmul.f32 %v896, 0.015625
      %v1095 = vmul.f32 %v899, 0.015625
      %v1096 = vmul.f32 %v902, 0.015625
      %v1097 = vmul.f32 %v905, 0.015625
      %v1098 = vmul.f32 %v908, 0.015625
      %v1099 = vmul.f32 %v911, 0.015625
      %v1100 = vmul.f32 %v914, 0.015625
      %v1101 = vmul.f32 %v917, 0.015625
      %v1102 = vsub.f32 %v976, %v1070
      %v1103 = vsub.f32 %v979, %v1071
      %v1104 = vsub.f32 %v982, %v1072
      %v1105 = vsub.f32 %v985, %v1073
      %v1106 = vsub.f32 %v988, %v1074
      %v1107 = vsub.f32 %v991, %v1075
      %v1108 = vsub.f32 %v994, %v1076
      %v1109 = vsub.f32 %v997, %v1077
      %v1110 = vsub.f32 %v1000, %v1078
      %v1111 = vsub.f32 %v1003, %v1079
      %v1112 = vsub.f32 %v1006, %v1080
      %v1113 = vsub.f32 %v1009, %v1081
      %v1114 = vsub.f32 %v1012, %v1082
      %v1115 = vsub.f32 %v1015, %v1083
      %v1116 = vsub.f32 %v1018, %v1084
      %v1117 = vsub.f32 %v1021, %v1085
      %v1118 = vsub.f32 %v1024, %v1086
      %v1119 = vsub.f32 %v1027, %v1087
      %v1120 = vsub.f32 %v1030, %v1088
      %v1121 = vsub.f32 %v1033, %v1089
      %v1122 = vsub.f32 %v1036, %v1090
      %v1123 = vsub.f32 %v1039, %v1091
      %v1124 = vsub.f32 %v1042, %v1092
      %v1125 = vsub.f32 %v1045, %v1093
      %v1126 = vsub.f32 %v1048, %v1094
      %v1127 = vsub.f32 %v1051, %v1095
      %v1128 = vsub.f32 %v1054, %v1096
      %v1129 = vsub.f32 %v1057, %v1097
      %v1130 = vsub.f32 %v1060, %v1098
      %v1131 = vsub.f32 %v1063, %v1099
      %v1132 = vsub.f32 %v1066, %v1100
      %v1133 = vsub.f32 %v1069, %v1101
      %v1166 = vlaneseq
      %v1167 = vand.u32 %v1166, 127
      %v1168 = vlaneseq
      %v1169 = vshrl.u32 %v1168, 7
      %v1170 = vsub.s32 %v1167, %v1169
      %v1171 = vrot.slane %v1102, %v1170
      %v1172 = vadd.s32 %v1167, 4294967288
      %v1173 = vlaneseq
      %v1174 = vshrl.u32 %v1173, 7
      %v1175 = vsub.s32 %v1172, %v1174
      %v1176 = vrot.slane %v1103, %v1175
      %vm1177 = vcmask 130112
      %v1178 = vsel %vm1177, %v1176, %v1171
      %v1179 = vadd.s32 %v1167, 4294967280
      %v1180 = vlaneseq
      %v1181 = vshrl.u32 %v1180, 7
      %v1182 = vsub.s32 %v1179, %v1181
      %v1183 = vrot.slane %v1104, %v1182
      %vm1184 = vcmask 195712
      %v1185 = vsel %vm1184, %v1183, %v1178
      %v1186 = vadd.s32 %v1167, 4294967272
      %v1187 = vlaneseq
      %v1188 = vshrl.u32 %v1187, 7
      %v1189 = vsub.s32 %v1186, %v1188
      %v1190 = vrot.slane %v1105, %v1189
      %vm1191 = vcmask 261312
      %v1192 = vsel %vm1191, %v1190, %v1185
      %v1193 = vadd.s32 %v1167, 4294967264
      %v1194 = vlaneseq
      %v1195 = vshrl.u32 %v1194, 7
      %v1196 = vsub.s32 %v1193, %v1195
      %v1197 = vrot.slane %v1106, %v1196
      %vm1198 = vcmask 326912
      %v1199 = vsel %vm1198, %v1197, %v1192
      %v1200 = vadd.s32 %v1167, 4294967256
      %v1201 = vlaneseq
      %v1202 = vshrl.u32 %v1201, 7
      %v1203 = vsub.s32 %v1200, %v1202
      %v1204 = vrot.slane %v1107, %v1203
      %vm1205 = vcmask 392512
      %v1206 = vsel %vm1205, %v1204, %v1199
      %v1207 = vadd.s32 %v1167, 4294967248
      %v1208 = vlaneseq
      %v1209 = vshrl.u32 %v1208, 7
      %v1210 = vsub.s32 %v1207, %v1209
      %v1211 = vrot.slane %v1108, %v1210
      %vm1212 = vcmask 458112
      %v1213 = vsel %vm1212, %v1211, %v1206
      %v1214 = vadd.s32 %v1167, 4294967240
      %v1215 = vlaneseq
      %v1216 = vshrl.u32 %v1215, 7
      %v1217 = vsub.s32 %v1214, %v1216
      %v1218 = vrot.slane %v1109, %v1217
      %vm1219 = vcmask 523712
      %v1220 = vsel %vm1219, %v1218, %v1213
      %v1221 = vlaneseq
      %v1222 = vshrl.u32 %v1221, 7
      %v1223 = vsub.s32 %v1167, %v1222
      %v1224 = vrot.slane %v1110, %v1223
      %v1225 = vlaneseq
      %v1226 = vshrl.u32 %v1225, 7
      %v1227 = vsub.s32 %v1172, %v1226
      %v1228 = vrot.slane %v1111, %v1227
      %v1229 = vsel %vm1177, %v1228, %v1224
      %v1230 = vlaneseq
      %v1231 = vshrl.u32 %v1230, 7
      %v1232 = vsub.s32 %v1179, %v1231
      %v1233 = vrot.slane %v1112, %v1232
      %v1234 = vsel %vm1184, %v1233, %v1229
      %v1235 = vlaneseq
      %v1236 = vshrl.u32 %v1235, 7
      %v1237 = vsub.s32 %v1186, %v1236
      %v1238 = vrot.slane %v1113, %v1237
      %v1239 = vsel %vm1191, %v1238, %v1234
      %v1240 = vlaneseq
      %v1241 = vshrl.u32 %v1240, 7
      %v1242 = vsub.s32 %v1193, %v1241
      %v1243 = vrot.slane %v1114, %v1242
      %v1244 = vsel %vm1198, %v1243, %v1239
      %v1245 = vlaneseq
      %v1246 = vshrl.u32 %v1245, 7
      %v1247 = vsub.s32 %v1200, %v1246
      %v1248 = vrot.slane %v1115, %v1247
      %v1249 = vsel %vm1205, %v1248, %v1244
      %v1250 = vlaneseq
      %v1251 = vshrl.u32 %v1250, 7
      %v1252 = vsub.s32 %v1207, %v1251
      %v1253 = vrot.slane %v1116, %v1252
      %v1254 = vsel %vm1212, %v1253, %v1249
      %v1255 = vlaneseq
      %v1256 = vshrl.u32 %v1255, 7
      %v1257 = vsub.s32 %v1214, %v1256
      %v1258 = vrot.slane %v1117, %v1257
      %v1259 = vsel %vm1219, %v1258, %v1254
      %v1260 = vlaneseq
      %v1261 = vshrl.u32 %v1260, 7
      %v1262 = vsub.s32 %v1167, %v1261
      %v1263 = vrot.slane %v1118, %v1262
      %v1264 = vlaneseq
      %v1265 = vshrl.u32 %v1264, 7
      %v1266 = vsub.s32 %v1172, %v1265
      %v1267 = vrot.slane %v1119, %v1266
      %v1268 = vsel %vm1177, %v1267, %v1263
      %v1269 = vlaneseq
      %v1270 = vshrl.u32 %v1269, 7
      %v1271 = vsub.s32 %v1179, %v1270
      %v1272 = vrot.slane %v1120, %v1271
      %v1273 = vsel %vm1184, %v1272, %v1268
      %v1274 = vlaneseq
      %v1275 = vshrl.u32 %v1274, 7
      %v1276 = vsub.s32 %v1186, %v1275
      %v1277 = vrot.slane %v1121, %v1276
      %v1278 = vsel %vm1191, %v1277, %v1273
      %v1279 = vlaneseq
      %v1280 = vshrl.u32 %v1279, 7
      %v1281 = vsub.s32 %v1193, %v1280
      %v1282 = vrot.slane %v1122, %v1281
      %v1283 = vsel %vm1198, %v1282, %v1278
      %v1284 = vlaneseq
      %v1285 = vshrl.u32 %v1284, 7
      %v1286 = vsub.s32 %v1200, %v1285
      %v1287 = vrot.slane %v1123, %v1286
      %v1288 = vsel %vm1205, %v1287, %v1283
      %v1289 = vlaneseq
      %v1290 = vshrl.u32 %v1289, 7
      %v1291 = vsub.s32 %v1207, %v1290
      %v1292 = vrot.slane %v1124, %v1291
      %v1293 = vsel %vm1212, %v1292, %v1288
      %v1294 = vlaneseq
      %v1295 = vshrl.u32 %v1294, 7
      %v1296 = vsub.s32 %v1214, %v1295
      %v1297 = vrot.slane %v1125, %v1296
      %v1298 = vsel %vm1219, %v1297, %v1293
      %v1299 = vlaneseq
      %v1300 = vshrl.u32 %v1299, 7
      %v1301 = vsub.s32 %v1167, %v1300
      %v1302 = vrot.slane %v1126, %v1301
      %v1303 = vlaneseq
      %v1304 = vshrl.u32 %v1303, 7
      %v1305 = vsub.s32 %v1172, %v1304
      %v1306 = vrot.slane %v1127, %v1305
      %v1307 = vsel %vm1177, %v1306, %v1302
      %v1308 = vlaneseq
      %v1309 = vshrl.u32 %v1308, 7
      %v1310 = vsub.s32 %v1179, %v1309
      %v1311 = vrot.slane %v1128, %v1310
      %v1312 = vsel %vm1184, %v1311, %v1307
      %v1313 = vlaneseq
      %v1314 = vshrl.u32 %v1313, 7
      %v1315 = vsub.s32 %v1186, %v1314
      %v1316 = vrot.slane %v1129, %v1315
      %v1317 = vsel %vm1191, %v1316, %v1312
      %v1318 = vlaneseq
      %v1319 = vshrl.u32 %v1318, 7
      %v1320 = vsub.s32 %v1193, %v1319
      %v1321 = vrot.slane %v1130, %v1320
      %v1322 = vsel %vm1198, %v1321, %v1317
      %v1323 = vlaneseq
      %v1324 = vshrl.u32 %v1323, 7
      %v1325 = vsub.s32 %v1200, %v1324
      %v1326 = vrot.slane %v1131, %v1325
      %v1327 = vsel %vm1205, %v1326, %v1322
      %v1328 = vlaneseq
      %v1329 = vshrl.u32 %v1328, 7
      %v1330 = vsub.s32 %v1207, %v1329
      %v1331 = vrot.slane %v1132, %v1330
      %v1332 = vsel %vm1212, %v1331, %v1327
      %v1333 = vlaneseq
      %v1334 = vshrl.u32 %v1333, 7
      %v1335 = vsub.s32 %v1214, %v1334
      %v1336 = vrot.slane %v1133, %v1335
      %v1337 = vsel %vm1219, %v1336, %v1332
      %vm1338 = vcmask 1041409
      %v1339 = vsel %vm1338, %v1259, %v1220
      %vm1340 = vcmask 1042434
      %v1341 = vsel %vm1340, %v1298, %v1339
      %vm1342 = vcmask 1043459
      %v1343 = vsel %vm1342, %v1337, %v1341
      %vm1345 = vcmask 519168
      %1346 = vst.msk [vmem:[%s198] sm:$0xf] %vm1345, %v1343
      %p1347 = scmp.lt.s32.totalorder %s14, 1
      %s1348 = scalar_select %p1347, %s14, 1
      %s1349 = smul.addr %s1348, 4
      %s1350 = scalar_lea.vmem %s3, %s1349
      // Predicated region
      $region33: #{attention_layer.2} parent=31 // pred_check
        %p1351 = pneg %p105
      $region34: #{attention_layer.2} parent=31 // pred_check_branch
        %1353 = sbr.rel (%p1351) target = $region36
      $region35: #{attention_layer.2} parent=31 // pred_region
        _
      $region36: #{attention_layer.2} parent=31 // pred_fallthru
        _
    $region32: #{attention_layer.2} parent=5 // pred_fallthru
      _
    %p1354 = scmp.le.s32.totalorder 2, %s9
    // Predicated region
    $region37: #{attention_layer.2} parent=5 // pred_check
      %p1355 = pneg %p1354
    $region38: #{attention_layer.2} parent=5 // pred_check_branch
      %1357 = sbr.rel (%p1355) target = $region40
    $region39: #{attention_layer.2} parent=5 // pred_region
      %s1358 = ssub.s32 %s9, 2
      // Predicated region
      $region41: #{attention_layer.2} parent=39 // pred_check
        %p1359 = pneg %p111
      $region42: #{attention_layer.2} parent=39 // pred_check_branch
        %1361 = sbr.rel (%p1359) target = $region44
      $region43: #{attention_layer.2} parent=39 // pred_region
        %p1362 = scmp.lt.s32.totalorder %s15, 1
        %s1363 = scalar_select %p1362, %s15, 1
        %s1364 = smul.addr %s1363, 4
        %s1365 = scalar_lea.vmem %s3, %s1364
      $region44: #{attention_layer.2} parent=39 // pred_fallthru
        _
    $region40: #{attention_layer.2} parent=5 // pred_fallthru
      _
  $region6: #{attention_layer.2} parent=0 // loop_footer
    %s13 = sadd.s32 1, %s9
  $region7: #{attention_layer.2} parent=0 // loop_footer_branch
    %8 = sbr.rel target = $region3
  $region8: #{attention_layer.2} parent=0 // loop_exit
    _

// kernel: attention_layer.3
$region0: #{attention_layer.3}
  #allocation0 [shape = 'u32[]', space=smem, size = 0x4, offset = 0x4, fixed_abs, tag = 'smem constant byte address 0x4 - core index']
  #allocation1 [shape = 'u32[144,128]{1,0:T(1,128)}', space=vmem, size = 0x12000, scoped, tag = 'internal scratch']
  %s0 = inlined_call_operand.vmem [shape: s32[8,1,32], index: 0, kind: input, shape index: {}]
  %s1 = inlined_call_operand.vmem [shape: bf16[8,32,32], index: 1, kind: input, shape index: {}]
  %s2 = inlined_call_operand.vmem [shape: bf16[8,64,32], index: 2, kind: input, shape index: {}]
  %s3 = inlined_call_operand.vmem [shape: bf16[8,64,32], index: 3, kind: input, shape index: {}]
  %s4 = inlined_call_operand.vmem [shape: f32[8,64,32], index: 4, kind: output, shape index: {}]
  %s5 = sld [smem:[#allocation0]]
  $region49: #{attention_layer.3} parent=0
    _
  %s7 = ssub.s32 1, %s5
  %s8 = scalar_select 0, %s7, %s5
  loop: start=0, step=1, limit=4
  $region2: #{attention_layer.3} parent=0 // loop_pre_header
    _
  $region3: #{attention_layer.3} parent=0 // loop_header
    %s10 = sphi 0, %s14
    %p11 = scmp.ge.s32.totalorder %s10, 4
    %s20 = sphi 0, %s22
    %s23 = sphi 0, %s20
    %s24 = sphi 0, %s23
    %s40 = sphi 0, %s24
    %s46 = sphi 0, %s48
    %s49 = sphi 0, %s46
    %s50 = sphi 0, %s49
    %s66 = sphi 0, %s50
    %s72 = sphi 0, %s74
    %s75 = sphi 0, %s72
    %s76 = sphi 0, %s75
    %s92 = sphi 0, %s76
    %s98 = sphi 0, %s100
    %s101 = sphi 0, %s98
    %s102 = sphi 0, %s101
    %s118 = sphi 0, %s102
    %s124 = sphi 0, %s126
    %s127 = sphi 0, %s124
    %s128 = sphi 0, %s127
    %s144 = sphi 0, %s128
  $region4: #{attention_layer.3} parent=0 // loop_header_branch
    %13 = sbr.rel (%p11) target = $region8
  $region5: #{attention_layer.3} parent=0 // loop_body
    %s15 = ssub.s32 %s10, 1
    %s16 = ssub.s32 %s10, 2
    %s17 = sadd.s32 %s10, 1
    %s18 = ssub.s32 %s10, %s17
    %p19 = scmp.eq.s32.totalorder %s18, 0
    %s21 = sadd.s32 %s20, 1
    %s22 = scalar_select %p19, %s20, %s21
    %p25 = pneg %p19
    %p26 = scmp.eq.s32.totalorder %s10, 1
    %p27 = por %p25, %p26
    %p28 = scmp.ne.s32.totalorder %s20, %s23
    %p29 = scmp.eq.s32.totalorder %s10, 0
    %p30 = por %p28, %p29
    %p31 = scmp.ne.s32.totalorder %s20, %s23
    %p32 = scmp.eq.s32.totalorder %s15, 1
    %p33 = por %p31, %p32
    %p34 = scmp.ne.s32.totalorder %s23, %s24
    %p35 = scmp.eq.s32.totalorder %s15, 0
    %p36 = por %p34, %p35
    %p37 = scmp.ne.s32.totalorder %s23, %s24
    %p38 = scmp.eq.s32.totalorder %s16, 1
    %p39 = por %p37, %p38
    %p41 = scmp.ne.s32.totalorder %s24, %s40
    %p42 = scmp.eq.s32.totalorder %s16, 0
    %p43 = por %p41, %p42
    %s44 = ssub.s32 %s10, %s17
    %p45 = scmp.eq.s32.totalorder %s44, 0
    %s47 = sadd.s32 %s46, 1
    %s48 = scalar_select %p45, %s46, %s47
    %p51 = pneg %p45
    %p52 = scmp.eq.s32.totalorder %s10, 1
    %p53 = por %p51, %p52
    %p54 = scmp.ne.s32.totalorder %s46, %s49
    %p55 = scmp.eq.s32.totalorder %s10, 0
    %p56 = por %p54, %p55
    %p57 = scmp.ne.s32.totalorder %s46, %s49
    %p58 = scmp.eq.s32.totalorder %s15, 1
    %p59 = por %p57, %p58
    %p60 = scmp.ne.s32.totalorder %s49, %s50
    %p61 = scmp.eq.s32.totalorder %s15, 0
    %p62 = por %p60, %p61
    %p63 = scmp.ne.s32.totalorder %s49, %s50
    %p64 = scmp.eq.s32.totalorder %s16, 1
    %p65 = por %p63, %p64
    %p67 = scmp.ne.s32.totalorder %s50, %s66
    %p68 = scmp.eq.s32.totalorder %s16, 0
    %p69 = por %p67, %p68
    %s70 = ssub.s32 %s10, %s17
    %p71 = scmp.eq.s32.totalorder %s70, 0
    %s73 = sadd.s32 %s72, 1
    %s74 = scalar_select %p71, %s72, %s73
    %p77 = pneg %p71
    %p78 = scmp.eq.s32.totalorder %s10, 1
    %p79 = por %p77, %p78
    %p80 = scmp.ne.s32.totalorder %s72, %s75
    %p81 = scmp.eq.s32.totalorder %s10, 0
    %p82 = por %p80, %p81
    %p83 = scmp.ne.s32.totalorder %s72, %s75
    %p84 = scmp.eq.s32.totalorder %s15, 1
    %p85 = por %p83, %p84
    %p86 = scmp.ne.s32.totalorder %s75, %s76
    %p87 = scmp.eq.s32.totalorder %s15, 0
    %p88 = por %p86, %p87
    %p89 = scmp.ne.s32.totalorder %s75, %s76
    %p90 = scmp.eq.s32.totalorder %s16, 1
    %p91 = por %p89, %p90
    %p93 = scmp.ne.s32.totalorder %s76, %s92
    %p94 = scmp.eq.s32.totalorder %s16, 0
    %p95 = por %p93, %p94
    %s96 = ssub.s32 %s10, %s17
    %p97 = scmp.eq.s32.totalorder %s96, 0
    %s99 = sadd.s32 %s98, 1
    %s100 = scalar_select %p97, %s98, %s99
    %p103 = pneg %p97
    %p104 = scmp.eq.s32.totalorder %s10, 1
    %p105 = por %p103, %p104
    %p106 = scmp.ne.s32.totalorder %s98, %s101
    %p107 = scmp.eq.s32.totalorder %s10, 0
    %p108 = por %p106, %p107
    %p109 = scmp.ne.s32.totalorder %s98, %s101
    %p110 = scmp.eq.s32.totalorder %s15, 1
    %p111 = por %p109, %p110
    %p112 = scmp.ne.s32.totalorder %s101, %s102
    %p113 = scmp.eq.s32.totalorder %s15, 0
    %p114 = por %p112, %p113
    %p115 = scmp.ne.s32.totalorder %s101, %s102
    %p116 = scmp.eq.s32.totalorder %s16, 1
    %p117 = por %p115, %p116
    %p119 = scmp.ne.s32.totalorder %s102, %s118
    %p120 = scmp.eq.s32.totalorder %s16, 0
    %p121 = por %p119, %p120
    %s122 = ssub.s32 %s10, %s17
    %p123 = scmp.eq.s32.totalorder %s122, 0
    %s125 = sadd.s32 %s124, 1
    %s126 = scalar_select %p123, %s124, %s125
    %p129 = pneg %p123
    %p130 = scmp.eq.s32.totalorder %s10, 1
    %p131 = por %p129, %p130
    %p132 = scmp.ne.s32.totalorder %s124, %s127
    %p133 = scmp.eq.s32.totalorder %s10, 0
    %p134 = por %p132, %p133
    %p135 = scmp.ne.s32.totalorder %s124, %s127
    %p136 = scmp.eq.s32.totalorder %s15, 1
    %p137 = por %p135, %p136
    %p138 = scmp.ne.s32.totalorder %s127, %s128
    %p139 = scmp.eq.s32.totalorder %s15, 0
    %p140 = por %p138, %p139
    %p141 = scmp.ne.s32.totalorder %s127, %s128
    %p142 = scmp.eq.s32.totalorder %s16, 1
    %p143 = por %p141, %p142
    %p145 = scmp.ne.s32.totalorder %s128, %s144
    %p146 = scmp.eq.s32.totalorder %s16, 0
    %p147 = por %p145, %p146
    %p148 = scmp.le.s32.totalorder 1, %s10
    %p149 = scmp.lt.s32.totalorder %s10, 3
    %p150 = pnand %p148, %p149
    %p151 = pneg %p150
    // Predicated region
    $region9: #{attention_layer.3} parent=5 // pred_check
      _
    $region10: #{attention_layer.3} parent=5 // pred_check_branch
      %153 = sbr.rel (%p150) target = $region12
    $region11: #{attention_layer.3} parent=5 // pred_region
      %s154 = ssub.s32 %s10, 1
    $region12: #{attention_layer.3} parent=5 // pred_fallthru
      _
    %p155 = scmp.lt.s32.totalorder %s10, 2
    // Predicated region
    $region13: #{attention_layer.3} parent=5 // pred_check
      %p156 = pneg %p155
    $region14: #{attention_layer.3} parent=5 // pred_check_branch
      %158 = sbr.rel (%p156) target = $region16
    $region15: #{attention_layer.3} parent=5 // pred_region
      // Predicated region
      $region17: #{attention_layer.3} parent=15 // pred_check
        %p159 = pneg %p30
      $region18: #{attention_layer.3} parent=15 // pred_check_branch
        %161 = sbr.rel (%p159) target = $region20
      $region19: #{attention_layer.3} parent=15 // pred_region
        %s162 = smul.u32 4, %s10
        %p163 = scmp.lt.s32.totalorder %s162, 7
        %s164 = scalar_select %p163, %s162, 7
        %s165 = scalar_lea.vmem %s0, %s164
        %s166 = smul.u32 4, %s10
      $region20: #{attention_layer.3} parent=15 // pred_fallthru
        _
      // Predicated region
      $region21: #{attention_layer.3} parent=15 // pred_check
        %p167 = pneg %p56
      $region22: #{attention_layer.3} parent=15 // pred_check_branch
        %169 = sbr.rel (%p167) target = $region24
      $region23: #{attention_layer.3} parent=15 // pred_region
        %s170 = smul.u32 4, %s10
        %p171 = scmp.lt.s32.totalorder %s170, 7
        %s172 = scalar_select %p171, %s170, 7
        %s173 = smul.addr %s172, 4
        %s174 = smul.addr %s173, 4
        %s175 = scalar_lea.vmem %s1, %s174
        %s176 = smul.u32 4, %s10
      $region24: #{attention_layer.3} parent=15 // pred_fallthru
        _
      // Predicated region
      $region25: #{attention_layer.3} parent=15 // pred_check
        %p177 = pneg %p82
      $region26: #{attention_layer.3} parent=15 // pred_check_branch
        %179 = sbr.rel (%p177) target = $region28
      $region27: #{attention_layer.3} parent=15 // pred_region
        %s180 = smul.u32 4, %s10
        %p181 = scmp.lt.s32.totalorder %s180, 7
        %s182 = scalar_select %p181, %s180, 7
        %s183 = smul.addr %s182, 8
        %s184 = smul.addr %s183, 4
        %s185 = scalar_lea.vmem %s2, %s184
        %s186 = smul.u32 4, %s10
      $region28: #{attention_layer.3} parent=15 // pred_fallthru
        _
      // Predicated region
      $region29: #{attention_layer.3} parent=15 // pred_check
        %p187 = pneg %p108
      $region30: #{attention_layer.3} parent=15 // pred_check_branch
        %189 = sbr.rel (%p187) target = $region32
      $region31: #{attention_layer.3} parent=15 // pred_region
        %s190 = smul.u32 4, %s10
        %p191 = scmp.lt.s32.totalorder %s190, 7
        %s192 = scalar_select %p191, %s190, 7
        %s193 = smul.addr %s192, 8
        %s194 = smul.addr %s193, 4
        %s195 = scalar_lea.vmem %s3, %s194
        %s196 = smul.u32 4, %s10
      $region32: #{attention_layer.3} parent=15 // pred_fallthru
        _
    $region16: #{attention_layer.3} parent=5 // pred_fallthru
      _
    %p197 = scmp.le.s32.totalorder 1, %s10
    %p198 = scmp.lt.s32.totalorder %s10, 3
    %p199 = pnand %p197, %p198
    %p200 = pneg %p199
    // Predicated region
    $region33: #{attention_layer.3} parent=5 // pred_check
      _
    $region34: #{attention_layer.3} parent=5 // pred_check_branch
      %202 = sbr.rel (%p199) target = $region36
    $region35: #{attention_layer.3} parent=5 // pred_region
      %s203 = ssub.s32 %s10, 1
      %s204 = smul.u32 4, %s15
      %p205 = scmp.lt.s32.totalorder %s204, 7
      %s206 = scalar_select %p205, %s204, 7
      %s207 = scalar_lea.vmem %s0, %s206
      %p208 = pneg %p36
      %p209 = pneg %p33
      %s210 = smul.u32 4, %s15
      %p211 = scmp.lt.s32.totalorder %s210, 7
      %s212 = scalar_select %p211, %s210, 7
      %s213 = smul.addr %s212, 4
      %s214 = smul.addr %s213, 4
      %s215 = scalar_lea.vmem %s1, %s214
      %p216 = pneg %p62
      %p217 = pneg %p59
      %s218 = smul.u32 4, %s15
      %p219 = scmp.lt.s32.totalorder %s218, 7
      %s220 = scalar_select %p219, %s218, 7
      %s221 = smul.addr %s220, 8
      %s222 = smul.addr %s221, 4
      %s223 = scalar_lea.vmem %s2, %s222
      %p224 = pneg %p88
      %p225 = pneg %p85
      %s226 = smul.u32 4, %s15
      %p227 = scmp.lt.s32.totalorder %s226, 7
      %s228 = scalar_select %p227, %s226, 7
      %s229 = smul.addr %s228, 8
      %s230 = smul.addr %s229, 4
      %s231 = scalar_lea.vmem %s3, %s230
      %p232 = pneg %p114
      %p233 = pneg %p111
      %p234 = pneg %p140
      %p235 = pneg %p137
      %s236 = smul.u32 4, %s15
      %p237 = scmp.lt.s32.totalorder %s236, 7
      %s238 = scalar_select %p237, %s236, 7
      %s239 = smul.addr %s238, 8
      %s240 = smul.addr %s239, 8
      %s241 = scalar_lea.vmem %s4, %s240
      %s242 = smul.u32 4, %s15
      %p243 = scmp.lt.s32.totalorder %s242, 7
      %s244 = scalar_select %p243, %s242, 7
      %s245 = scalar_lea.vmem %s0, %s244
      %s246 = smul.u32 4, %s15
      %s247 = smul.u32 4, %s15
      %p248 = scmp.lt.s32.totalorder %s247, 7
      %s249 = scalar_select %p248, %s247, 7
      %s250 = smul.addr %s249, 4
      %s251 = smul.addr %s250, 4
      %s252 = scalar_lea.vmem %s1, %s251
      %s253 = smul.u32 4, %s15
      %s254 = smul.u32 4, %s15
      %p255 = scmp.lt.s32.totalorder %s254, 7
      %s256 = scalar_select %p255, %s254, 7
      %s257 = smul.addr %s256, 8
      %s258 = smul.addr %s257, 4
      %s259 = scalar_lea.vmem %s2, %s258
      %s260 = smul.u32 4, %s15
      %s261 = smul.u32 4, %s15
      %p262 = scmp.lt.s32.totalorder %s261, 7
      %s263 = scalar_select %p262, %s261, 7
      %s264 = smul.addr %s263, 8
      %s265 = smul.addr %s264, 4
      %s266 = scalar_lea.vmem %s3, %s265
      %s267 = smul.u32 4, %s15
      %s268 = smul.u32 4, %s15
      %p269 = scmp.lt.s32.totalorder %s268, 7
      %s270 = scalar_select %p269, %s268, 7
      %s271 = smul.addr %s270, 8
      %s272 = smul.addr %s271, 8
      %s273 = scalar_lea.vmem %s4, %s272
      %s274 = smul.u32 4, %s15
      %v276 = vld [vmem:[%s252] sm:$0xf]
      %v277 = vld [vmem:[%s252 + $0x4] sm:$0xf]
      %v278 = vld [vmem:[%s252 + $0x8] sm:$0xf]
      %v279 = vld [vmem:[%s252 + $0xc] sm:$0xf]
      %v280 = vld [vmem:[%s252 + $0x10] sm:$0xf]
      %v281 = vld [vmem:[%s252 + $0x14] sm:$0xf]
      %v282 = vld [vmem:[%s252 + $0x18] sm:$0xf]
      %v283 = vld [vmem:[%s252 + $0x1c] sm:$0xf]
      %v284 = vld [vmem:[%s252 + $0x20] sm:$0xf]
      %v285 = vld [vmem:[%s252 + $0x24] sm:$0xf]
      %v286 = vld [vmem:[%s252 + $0x28] sm:$0xf]
      %v287 = vld [vmem:[%s252 + $0x2c] sm:$0xf]
      %v288 = vld [vmem:[%s252 + $0x30] sm:$0xf]
      %v289 = vld [vmem:[%s252 + $0x34] sm:$0xf]
      %v290 = vld [vmem:[%s252 + $0x38] sm:$0xf]
      %v291 = vld [vmem:[%s252 + $0x3c] sm:$0xf]
      %v292 = vunpack.c.l.bf16 %v276
      %v293 = vunpack.c.l.bf16 %v277
      %v294 = vunpack.c.l.bf16 %v278
      %v295 = vunpack.c.l.bf16 %v279
      %v296 = vunpack.c.l.bf16 %v280
      %v297 = vunpack.c.l.bf16 %v281
      %v298 = vunpack.c.l.bf16 %v282
      %v299 = vunpack.c.l.bf16 %v283
      %v300 = vunpack.c.l.bf16 %v284
      %v301 = vunpack.c.l.bf16 %v285
      %v302 = vunpack.c.l.bf16 %v286
      %v303 = vunpack.c.l.bf16 %v287
      %v304 = vunpack.c.l.bf16 %v288
      %v305 = vunpack.c.l.bf16 %v289
      %v306 = vunpack.c.l.bf16 %v290
      %v307 = vunpack.c.l.bf16 %v291
      %v308 = vmul.f32 %v292, 0.17677669
      %v309 = vmul.f32 %v293, 0.17677669
      %v310 = vmul.f32 %v294, 0.17677669
      %v311 = vmul.f32 %v295, 0.17677669
      %v312 = vmul.f32 %v296, 0.17677669
      %v313 = vmul.f32 %v297, 0.17677669
      %v314 = vmul.f32 %v298, 0.17677669
      %v315 = vmul.f32 %v299, 0.17677669
      %v316 = vmul.f32 %v300, 0.17677669
      %v317 = vmul.f32 %v301, 0.17677669
      %v318 = vmul.f32 %v302, 0.17677669
      %v319 = vmul.f32 %v303, 0.17677669
      %v320 = vmul.f32 %v304, 0.17677669
      %v321 = vmul.f32 %v305, 0.17677669
      %v322 = vmul.f32 %v306, 0.17677669
      %v323 = vmul.f32 %v307, 0.17677669
      %v324 = vpack.c.bf16 %v309, %v308
      %v325 = vpack.c.bf16 %v311, %v310
      %v326 = vpack.c.bf16 %v313, %v312
      %v327 = vpack.c.bf16 %v315, %v314
      %v328 = vpack.c.bf16 %v317, %v316
      %v329 = vpack.c.bf16 %v319, %v318
      %v330 = vpack.c.bf16 %v321, %v320
      %v331 = vpack.c.bf16 %v323, %v322
      %v332 = vld [vmem:[%s259] sm:$0xf]
      %v333 = vld [vmem:[%s259 + $0x4] sm:$0xf]
      %v334 = vld [vmem:[%s259 + $0x8] sm:$0xf]
      %v335 = vld [vmem:[%s259 + $0xc] sm:$0xf]
      %v336 = vld [vmem:[%s259 + $0x10] sm:$0xf]
      %v337 = vld [vmem:[%s259 + $0x14] sm:$0xf]
      %v338 = vld [vmem:[%s259 + $0x18] sm:$0xf]
      %v339 = vld [vmem:[%s259 + $0x1c] sm:$0xf]
      %v340 = vld [vmem:[%s259 + $0x20] sm:$0xf]
      %v341 = vld [vmem:[%s259 + $0x24] sm:$0xf]
      %v342 = vld [vmem:[%s259 + $0x28] sm:$0xf]
      %v343 = vld [vmem:[%s259 + $0x2c] sm:$0xf]
      %v344 = vld [vmem:[%s259 + $0x30] sm:$0xf]
      %v345 = vld [vmem:[%s259 + $0x34] sm:$0xf]
      %v346 = vld [vmem:[%s259 + $0x38] sm:$0xf]
      %v347 = vld [vmem:[%s259 + $0x3c] sm:$0xf]
      %v348 = vld [vmem:[%s259 + $0x40] sm:$0xf]
      %v349 = vld [vmem:[%s259 + $0x44] sm:$0xf]
      %v350 = vld [vmem:[%s259 + $0x48] sm:$0xf]
      %v351 = vld [vmem:[%s259 + $0x4c] sm:$0xf]
      %v352 = vld [vmem:[%s259 + $0x50] sm:$0xf]
      %v353 = vld [vmem:[%s259 + $0x54] sm:$0xf]
      %v354 = vld [vmem:[%s259 + $0x58] sm:$0xf]
      %v355 = vld [vmem:[%s259 + $0x5c] sm:$0xf]
      %v356 = vld [vmem:[%s259 + $0x60] sm:$0xf]
      %v357 = vld [vmem:[%s259 + $0x64] sm:$0xf]
      %v358 = vld [vmem:[%s259 + $0x68] sm:$0xf]
      %v359 = vld [vmem:[%s259 + $0x6c] sm:$0xf]
      %v360 = vld [vmem:[%s259 + $0x70] sm:$0xf]
      %v361 = vld [vmem:[%s259 + $0x74] sm:$0xf]
      %v362 = vld [vmem:[%s259 + $0x78] sm:$0xf]
      %v363 = vld [vmem:[%s259 + $0x7c] sm:$0xf]
      %v372 = vunpack.c.l.b16 %v332
      %v373 = vunpack.c.l.b16 %v333
      %v374 = vunpack.c.l.b16 %v334
      %v375 = vunpack.c.l.b16 %v335
      %v376 = vunpack.c.l.b16 %v336
      %v377 = vunpack.c.l.b16 %v337
      %v378 = vunpack.c.l.b16 %v338
      %v379 = vunpack.c.l.b16 %v339
      %v380 = vpack.c.b16 %v373, %v372
      %v381 = vpack.c.b16 %v375, %v374
      %v382 = vpack.c.b16 %v377, %v376
      %v383 = vpack.c.b16 %v379, %v378
      %vm384 = vcmask 261120
      %v386 = vsel %vm384, %v324, 0
      %v389 = vsel %vm384, %v325, 0
      %v392 = vsel %vm384, %v380, 0
      %v395 = vsel %vm384, %v381, 0
      %v398 = vsel %vm384, %v382, 0
      %v401 = vsel %vm384, %v383, 0
      %403 = vmatprep.subr.bf16.mxu0 0
      %404 = vmatpush1.bf16.xpose.msra.mxu0 %v392
      %405 = vmatprep.subr.bf16.mxu0 0
      %406 = vmatpush1.bf16.xpose.msra.mxu0 %v395
      %407 = vmatprep.subr.bf16.mxu0 0
      %408 = vmatpush1.bf16.xpose.msra.mxu0 %v398
      %409 = vmatprep.subr.bf16.mxu0 0
      %410 = vmatpush1.bf16.xpose.msra.mxu0 %v401
      %411 = vmatprep.subr.bf16.mxu0 0
      %412 = vmatpush1.bf16.xpose.msra.mxu0 0
      %413 = vmatprep.subr.bf16.mxu0 0
      %414 = vmatpush1.bf16.xpose.msra.mxu0 0
      %415 = vmatprep.subr.bf16.mxu0 0
      %416 = vmatpush1.bf16.xpose.msra.mxu0 0
      %417 = vmatprep.subr.bf16.mxu0 0
      %418 = vmatpush1.bf16.xpose.msra.mxu0 0
      %419 = vmatprep.subr.bf16.mxu0 0
      %420 = vmatpush1.bf16.xpose.msra.mxu0 0
      %421 = vmatprep.subr.bf16.mxu0 0
      %422 = vmatpush1.bf16.xpose.msra.mxu0 0
      %423 = vmatprep.subr.bf16.mxu0 0
      %424 = vmatpush1.bf16.xpose.msra.mxu0 0
      %425 = vmatprep.subr.bf16.mxu0 0
      %426 = vmatpush1.bf16.xpose.msra.mxu0 0
      %427 = vmatprep.subr.bf16.mxu0 0
      %428 = vmatpush1.bf16.xpose.msra.mxu0 0
      %429 = vmatprep.subr.bf16.mxu0 0
      %430 = vmatpush1.bf16.xpose.msra.mxu0 0
      %431 = vmatprep.subr.bf16.mxu0 0
      %432 = vmatpush1.bf16.xpose.msra.mxu0 0
      %433 = vmatprep.subr.bf16.mxu0 0
      %434 = vmatpush1.bf16.xpose.msra.mxu0 0
      %435 = vmatprep.mubr.bf16.mxu0 0
      %436 = vmatmul.mubr.bf16.gmra.mrb[0].mxu0 %v386
      %v437 = vpop.f32.mrb[0].mxu0
      %v438 = vadd.f32 0.0, %v437
      %v439 = vpop.f32.mrb[0].mxu0
      %v440 = vpop.f32.mrb[0].mxu0
      %v441 = vadd.f32 0.0, %v440
      %v442 = vpop.f32.mrb[0].mxu0
      %443 = vmatprep.mubr.bf16.mxu0 0
      %444 = vmatmul.mubr.bf16.gmra.mrb[0].mxu0 %v389
      %v445 = vpop.f32.mrb[0].mxu0
      %v446 = vadd.f32 0.0, %v445
      %v447 = vpop.f32.mrb[0].mxu0
      %v448 = vpop.f32.mrb[0].mxu0
      %v449 = vadd.f32 0.0, %v448
      %v450 = vpop.f32.mrb[0].mxu0
      %451 = vdwg.mxu0
      %v460 = vunpack.c.l.b16 %v340
      %v461 = vunpack.c.l.b16 %v341
      %v462 = vunpack.c.l.b16 %v342
      %v463 = vunpack.c.l.b16 %v343
      %v464 = vunpack.c.l.b16 %v344
      %v465 = vunpack.c.l.b16 %v345
      %v466 = vunpack.c.l.b16 %v346
      %v467 = vunpack.c.l.b16 %v347
      %v468 = vpack.c.b16 %v461, %v460
      %v469 = vpack.c.b16 %v463, %v462
      %v470 = vpack.c.b16 %v465, %v464
      %v471 = vpack.c.b16 %v467, %v466
      %v473 = vsel %vm384, %v326, 0
      %v476 = vsel %vm384, %v327, 0
      %v479 = vsel %vm384, %v468, 0
      %v482 = vsel %vm384, %v469, 0
      %v485 = vsel %vm384, %v470, 0
      %v488 = vsel %vm384, %v471, 0
      %490 = vmatprep.subr.bf16.mxu0 0
      %491 = vmatpush1.bf16.xpose.msra.mxu0 %v479
      %492 = vmatprep.subr.bf16.mxu0 0
      %493 = vmatpush1.bf16.xpose.msra.mxu0 %v482
      %494 = vmatprep.subr.bf16.mxu0 0
      %495 = vmatpush1.bf16.xpose.msra.mxu0 %v485
      %496 = vmatprep.subr.bf16.mxu0 0
      %497 = vmatpush1.bf16.xpose.msra.mxu0 %v488
      %498 = vmatprep.subr.bf16.mxu0 0
      %499 = vmatpush1.bf16.xpose.msra.mxu0 0
      %500 = vmatprep.subr.bf16.mxu0 0
      %501 = vmatpush1.bf16.xpose.msra.mxu0 0
      %502 = vmatprep.subr.bf16.mxu0 0
      %503 = vmatpush1.bf16.xpose.msra.mxu0 0
      %504 = vmatprep.subr.bf16.mxu0 0
      %505 = vmatpush1.bf16.xpose.msra.mxu0 0
      %506 = vmatprep.subr.bf16.mxu0 0
      %507 = vmatpush1.bf16.xpose.msra.mxu0 0
      %508 = vmatprep.subr.bf16.mxu0 0
      %509 = vmatpush1.bf16.xpose.msra.mxu0 0
      %510 = vmatprep.subr.bf16.mxu0 0
      %511 = vmatpush1.bf16.xpose.msra.mxu0 0
      %512 = vmatprep.subr.bf16.mxu0 0
      %513 = vmatpush1.bf16.xpose.msra.mxu0 0
      %514 = vmatprep.subr.bf16.mxu0 0
      %515 = vmatpush1.bf16.xpose.msra.mxu0 0
      %516 = vmatprep.subr.bf16.mxu0 0
      %517 = vmatpush1.bf16.xpose.msra.mxu0 0
      %518 = vmatprep.subr.bf16.mxu0 0
      %519 = vmatpush1.bf16.xpose.msra.mxu0 0
      %520 = vmatprep.subr.bf16.mxu0 0
      %521 = vmatpush1.bf16.xpose.msra.mxu0 0
      %522 = vmatprep.mubr.bf16.mxu0 0
      %523 = vmatmul.mubr.bf16.gmra.mrb[0].mxu0 %v473
      %v524 = vpop.f32.mrb[0].mxu0
      %v525 = vadd.f32 0.0, %v524
      %v526 = vpop.f32.mrb[0].mxu0
      %v527 = vpop.f32.mrb[0].mxu0
      %v528 = vadd.f32 0.0, %v527
      %v529 = vpop.f32.mrb[0].mxu0
      %530 = vmatprep.mubr.bf16.mxu0 0
      %531 = vmatmul.mubr.bf16.gmra.mrb[0].mxu0 %v476
      %v532 = vpop.f32.mrb[0].mxu0
      %v533 = vadd.f32 0.0, %v532
      %v534 = vpop.f32.mrb[0].mxu0
      %v535 = vpop.f32.mrb[0].mxu0
      %v536 = vadd.f32 0.0, %v535
      %v537 = vpop.f32.mrb[0].mxu0
      %538 = vdwg.mxu0
      %v547 = vunpack.c.l.b16 %v348
      %v548 = vunpack.c.l.b16 %v349
      %v549 = vunpack.c.l.b16 %v350
      %v550 = vunpack.c.l.b16 %v351
      %v551 = vunpack.c.l.b16 %v352
      %v552 = vunpack.c.l.b16 %v353
      %v553 = vunpack.c.l.b16 %v354
      %v554 = vunpack.c.l.b16 %v355
      %v555 = vpack.c.b16 %v548, %v547
      %v556 = vpack.c.b16 %v550, %v549
      %v557 = vpack.c.b16 %v552, %v551
      %v558 = vpack.c.b16 %v554, %v553
      %v560 = vsel %vm384, %v328, 0
      %v563 = vsel %vm384, %v329, 0
      %v566 = vsel %vm384, %v555, 0
      %v569 = vsel %vm384, %v556, 0
      %v572 = vsel %vm384, %v557, 0
      %v575 = vsel %vm384, %v558, 0
      %577 = vmatprep.subr.bf16.mxu0 0
      %578 = vmatpush1.bf16.xpose.msra.mxu0 %v566
      %579 = vmatprep.subr.bf16.mxu0 0
      %580 = vmatpush1.bf16.xpose.msra.mxu0 %v569
      %581 = vmatprep.subr.bf16.mxu0 0
      %582 = vmatpush1.bf16.xpose.msra.mxu0 %v572
      %583 = vmatprep.subr.bf16.mxu0 0
      %584 = vmatpush1.bf16.xpose.msra.mxu0 %v575
      %585 = vmatprep.subr.bf16.mxu0 0
      %586 = vmatpush1.bf16.xpose.msra.mxu0 0
      %587 = vmatprep.subr.bf16.mxu0 0
      %588 = vmatpush1.bf16.xpose.msra.mxu0 0
      %589 = vmatprep.subr.bf16.mxu0 0
      %590 = vmatpush1.bf16.xpose.msra.mxu0 0
      %591 = vmatprep.subr.bf16.mxu0 0
      %592 = vmatpush1.bf16.xpose.msra.mxu0 0
      %593 = vmatprep.subr.bf16.mxu0 0
      %594 = vmatpush1.bf16.xpose.msra.mxu0 0
      %595 = vmatprep.subr.bf16.mxu0 0
      %596 = vmatpush1.bf16.xpose.msra.mxu0 0
      %597 = vmatprep.subr.bf16.mxu0 0
      %598 = vmatpush1.bf16.xpose.msra.mxu0 0
      %599 = vmatprep.subr.bf16.mxu0 0
      %600 = vmatpush1.bf16.xpose.msra.mxu0 0
      %601 = vmatprep.subr.bf16.mxu0 0
      %602 = vmatpush1.bf16.xpose.msra.mxu0 0
      %603 = vmatprep.subr.bf16.mxu0 0
      %604 = vmatpush1.bf16.xpose.msra.mxu0 0
      %605 = vmatprep.subr.bf16.mxu0 0
      %606 = vmatpush1.bf16.xpose.msra.mxu0 0
      %607 = vmatprep.subr.bf16.mxu0 0
      %608 = vmatpush1.bf16.xpose.msra.mxu0 0
      %609 = vmatprep.mubr.bf16.mxu0 0
      %610 = vmatmul.mubr.bf16.gmra.mrb[0].mxu0 %v560
      %v611 = vpop.f32.mrb[0].mxu0
      %v612 = vadd.f32 0.0, %v611
      %v613 = vpop.f32.mrb[0].mxu0
      %v614 = vpop.f32.mrb[0].mxu0
      %v615 = vadd.f32 0.0, %v614
      %v616 = vpop.f32.mrb[0].mxu0
      %617 = vmatprep.mubr.bf16.mxu0 0
      %618 = vmatmul.mubr.bf16.gmra.mrb[0].mxu0 %v563
      %v619 = vpop.f32.mrb[0].mxu0
      %v620 = vadd.f32 0.0, %v619
      %v621 = vpop.f32.mrb[0].mxu0
      %v622 = vpop.f32.mrb[0].mxu0
      %v623 = vadd.f32 0.0, %v622
      %v624 = vpop.f32.mrb[0].mxu0
      %625 = vdwg.mxu0
      %v634 = vunpack.c.l.b16 %v356
      %v635 = vunpack.c.l.b16 %v357
      %v636 = vunpack.c.l.b16 %v358
      %v637 = vunpack.c.l.b16 %v359
      %v638 = vunpack.c.l.b16 %v360
      %v639 = vunpack.c.l.b16 %v361
      %v640 = vunpack.c.l.b16 %v362
      %v641 = vunpack.c.l.b16 %v363
      %v642 = vpack.c.b16 %v635, %v634
      %v643 = vpack.c.b16 %v637, %v636
      %v644 = vpack.c.b16 %v639, %v638
      %v645 = vpack.c.b16 %v641, %v640
      %v647 = vsel %vm384, %v330, 0
      %v650 = vsel %vm384, %v331, 0
      %v653 = vsel %vm384, %v642, 0
      %v656 = vsel %vm384, %v643, 0
      %v659 = vsel %vm384, %v644, 0
      %v662 = vsel %vm384, %v645, 0
      %664 = vmatprep.subr.bf16.mxu0 0
      %665 = vmatpush1.bf16.xpose.msra.mxu0 %v653
      %666 = vmatprep.subr.bf16.mxu0 0
      %667 = vmatpush1.bf16.xpose.msra.mxu0 %v656
      %668 = vmatprep.subr.bf16.mxu0 0
      %669 = vmatpush1.bf16.xpose.msra.mxu0 %v659
      %670 = vmatprep.subr.bf16.mxu0 0
      %671 = vmatpush1.bf16.xpose.msra.mxu0 %v662
      %672 = vmatprep.subr.bf16.mxu0 0
      %673 = vmatpush1.bf16.xpose.msra.mxu0 0
      %674 = vmatprep.subr.bf16.mxu0 0
      %675 = vmatpush1.bf16.xpose.msra.mxu0 0
      %676 = vmatprep.subr.bf16.mxu0 0
      %677 = vmatpush1.bf16.xpose.msra.mxu0 0
      %678 = vmatprep.subr.bf16.mxu0 0
      %679 = vmatpush1.bf16.xpose.msra.mxu0 0
      %680 = vmatprep.subr.bf16.mxu0 0
      %681 = vmatpush1.bf16.xpose.msra.mxu0 0
      %682 = vmatprep.subr.bf16.mxu0 0
      %683 = vmatpush1.bf16.xpose.msra.mxu0 0
      %684 = vmatprep.subr.bf16.mxu0 0
      %685 = vmatpush1.bf16.xpose.msra.mxu0 0
      %686 = vmatprep.subr.bf16.mxu0 0
      %687 = vmatpush1.bf16.xpose.msra.mxu0 0
      %688 = vmatprep.subr.bf16.mxu0 0
      %689 = vmatpush1.bf16.xpose.msra.mxu0 0
      %690 = vmatprep.subr.bf16.mxu0 0
      %691 = vmatpush1.bf16.xpose.msra.mxu0 0
      %692 = vmatprep.subr.bf16.mxu0 0
      %693 = vmatpush1.bf16.xpose.msra.mxu0 0
      %694 = vmatprep.subr.bf16.mxu0 0
      %695 = vmatpush1.bf16.xpose.msra.mxu0 0
      %696 = vmatprep.mubr.bf16.mxu0 0
      %697 = vmatmul.mubr.bf16.gmra.mrb[0].mxu0 %v647
      %v698 = vpop.f32.mrb[0].mxu0
      %v699 = vadd.f32 0.0, %v698
      %v700 = vpop.f32.mrb[0].mxu0
      %v701 = vpop.f32.mrb[0].mxu0
      %v702 = vadd.f32 0.0, %v701
      %v703 = vpop.f32.mrb[0].mxu0
      %704 = vmatprep.mubr.bf16.mxu0 0
      %705 = vmatmul.mubr.bf16.gmra.mrb[0].mxu0 %v650
      %v706 = vpop.f32.mrb[0].mxu0
      %v707 = vadd.f32 0.0, %v706
      %v708 = vpop.f32.mrb[0].mxu0
      %v709 = vpop.f32.mrb[0].mxu0
      %v710 = vadd.f32 0.0, %v709
      %v711 = vpop.f32.mrb[0].mxu0
      %712 = vdwg.mxu0
      %vm713 = vcmask 523264
      %v714 = vsel %vm713, %v438, -inf
      %715 = vmax.xlane.f32.xlu0 %v714
      %v716 = vpop.xlane.xlu0 %715
      %v717 = vsel %vm713, %v441, -inf
      %718 = vmax.xlane.f32.xlu0 %v717
      %v719 = vpop.xlane.xlu0 %718
      %v720 = vsel %vm713, %v446, -inf
      %721 = vmax.xlane.f32.xlu0 %v720
      %v722 = vpop.xlane.xlu0 %721
      %v723 = vsel %vm713, %v449, -inf
      %724 = vmax.xlane.f32.xlu0 %v723
      %v725 = vpop.xlane.xlu0 %724
      %v726 = vsel %vm713, %v525, -inf
      %727 = vmax.xlane.f32.xlu0 %v726
      %v728 = vpop.xlane.xlu0 %727
      %v729 = vsel %vm713, %v528, -inf
      %730 = vmax.xlane.f32.xlu0 %v729
      %v731 = vpop.xlane.xlu0 %730
      %v732 = vsel %vm713, %v533, -inf
      %733 = vmax.xlane.f32.xlu0 %v732
      %v734 = vpop.xlane.xlu0 %733
      %v735 = vsel %vm713, %v536, -inf
      %736 = vmax.xlane.f32.xlu0 %v735
      %v737 = vpop.xlane.xlu0 %736
      %v738 = vsel %vm713, %v612, -inf
      %739 = vmax.xlane.f32.xlu0 %v738
      %v740 = vpop.xlane.xlu0 %739
      %v741 = vsel %vm713, %v615, -inf
      %742 = vmax.xlane.f32.xlu0 %v741
      %v743 = vpop.xlane.xlu0 %742
      %v744 = vsel %vm713, %v620, -inf
      %745 = vmax.xlane.f32.xlu0 %v744
      %v746 = vpop.xlane.xlu0 %745
      %v747 = vsel %vm713, %v623, -inf
      %748 = vmax.xlane.f32.xlu0 %v747
      %v749 = vpop.xlane.xlu0 %748
      %v750 = vsel %vm713, %v699, -inf
      %751 = vmax.xlane.f32.xlu0 %v750
      %v752 = vpop.xlane.xlu0 %751
      %v753 = vsel %vm713, %v702, -inf
      %754 = vmax.xlane.f32.xlu0 %v753
      %v755 = vpop.xlane.xlu0 %754
      %v756 = vsel %vm713, %v707, -inf
      %757 = vmax.xlane.f32.xlu0 %v756
      %v758 = vpop.xlane.xlu0 %757
      %v759 = vsel %vm713, %v710, -inf
      %760 = vmax.xlane.f32.xlu0 %v759
      %v761 = vpop.xlane.xlu0 %760
      %v762 = vsub.f32 %v438, %v716
      %v763 = vsub.f32 %v441, %v719
      %v764 = vsub.f32 %v446, %v722
      %v765 = vsub.f32 %v449, %v725
      %v766 = vsub.f32 %v525, %v728
      %v767 = vsub.f32 %v528, %v731
      %v768 = vsub.f32 %v533, %v734
      %v769 = vsub.f32 %v536, %v737
      %v770 = vsub.f32 %v612, %v740
      %v771 = vsub.f32 %v615, %v743
      %v772 = vsub.f32 %v620, %v746
      %v773 = vsub.f32 %v623, %v749
      %v774 = vsub.f32 %v699, %v752
      %v775 = vsub.f32 %v702, %v755
      %v776 = vsub.f32 %v707, %v758
      %v777 = vsub.f32 %v710, %v761
      %v778 = vmul.f32 %v762, 1.442695
      %v779 = vpow.pop %v778
      %v780 = vmul.f32 %v763, 1.442695
      %v781 = vpow.pop %v780
      %v782 = vmul.f32 %v764, 1.442695
      %v783 = vpow.pop %v782
      %v784 = vmul.f32 %v765, 1.442695
      %v785 = vpow.pop %v784
      %v786 = vmul.f32 %v766, 1.442695
      %v787 = vpow.pop %v786
      %v788 = vmul.f32 %v767, 1.442695
      %v789 = vpow.pop %v788
      %v790 = vmul.f32 %v768, 1.442695
      %v791 = vpow.pop %v790
      %v792 = vmul.f32 %v769, 1.442695
      %v793 = vpow.pop %v792
      %v794 = vmul.f32 %v770, 1.442695
      %v795 = vpow.pop %v794
      %v796 = vmul.f32 %v771, 1.442695
      %v797 = vpow.pop %v796
      %v798 = vmul.f32 %v772, 1.442695
      %v799 = vpow.pop %v798
      %v800 = vmul.f32 %v773, 1.442695
      %v801 = vpow.pop %v800
      %v802 = vmul.f32 %v774, 1.442695
      %v803 = vpow.pop %v802
      %v804 = vmul.f32 %v775, 1.442695
      %v805 = vpow.pop %v804
      %v806 = vmul.f32 %v776, 1.442695
      %v807 = vpow.pop %v806
      %v808 = vmul.f32 %v777, 1.442695
      %v809 = vpow.pop %v808
      %v810 = vsel %vm713, %v779, 0.0
      %811 = vadd.xlane.f32.xlu0 %v810
      %v812 = vpop.xlane.xlu0 %811
      %v813 = vsel %vm713, %v781, 0.0
      %814 = vadd.xlane.f32.xlu0 %v813
      %v815 = vpop.xlane.xlu0 %814
      %v816 = vsel %vm713, %v783, 0.0
      %817 = vadd.xlane.f32.xlu0 %v816
      %v818 = vpop.xlane.xlu0 %817
      %v819 = vsel %vm713, %v785, 0.0
      %820 = vadd.xlane.f32.xlu0 %v819
      %v821 = vpop.xlane.xlu0 %820
      %v822 = vsel %vm713, %v787, 0.0
      %823 = vadd.xlane.f32.xlu0 %v822
      %v824 = vpop.xlane.xlu0 %823
      %v825 = vsel %vm713, %v789, 0.0
      %826 = vadd.xlane.f32.xlu0 %v825
      %v827 = vpop.xlane.xlu0 %826
      %v828 = vsel %vm713, %v791, 0.0
      %829 = vadd.xlane.f32.xlu0 %v828
      %v830 = vpop.xlane.xlu0 %829
      %v831 = vsel %vm713, %v793, 0.0
      %832 = vadd.xlane.f32.xlu0 %v831
      %v833 = vpop.xlane.xlu0 %832
      %v834 = vsel %vm713, %v795, 0.0
      %835 = vadd.xlane.f32.xlu0 %v834
      %v836 = vpop.xlane.xlu0 %835
      %v837 = vsel %vm713, %v797, 0.0
      %838 = vadd.xlane.f32.xlu0 %v837
      %v839 = vpop.xlane.xlu0 %838
      %v840 = vsel %vm713, %v799, 0.0
      %841 = vadd.xlane.f32.xlu0 %v840
      %v842 = vpop.xlane.xlu0 %841
      %v843 = vsel %vm713, %v801, 0.0
      %844 = vadd.xlane.f32.xlu0 %v843
      %v845 = vpop.xlane.xlu0 %844
      %v846 = vsel %vm713, %v803, 0.0
      %847 = vadd.xlane.f32.xlu0 %v846
      %v848 = vpop.xlane.xlu0 %847
      %v849 = vsel %vm713, %v805, 0.0
      %850 = vadd.xlane.f32.xlu0 %v849
      %v851 = vpop.xlane.xlu0 %850
      %v852 = vsel %vm713, %v807, 0.0
      %853 = vadd.xlane.f32.xlu0 %v852
      %v854 = vpop.xlane.xlu0 %853
      %v855 = vsel %vm713, %v809, 0.0
      %856 = vadd.xlane.f32.xlu0 %v855
      %v857 = vpop.xlane.xlu0 %856
      %v858 = vpack.c.bf16 %v781, %v779
      %v859 = vpack.c.bf16 %v785, %v783
      %v860 = vpack.c.bf16 %v789, %v787
      %v861 = vpack.c.bf16 %v793, %v791
      %v862 = vpack.c.bf16 %v797, %v795
      %v863 = vpack.c.bf16 %v801, %v799
      %v864 = vpack.c.bf16 %v805, %v803
      %v865 = vpack.c.bf16 %v809, %v807
      %v866 = vld [vmem:[%s266] sm:$0xf]
      %v867 = vld [vmem:[%s266 + $0x4] sm:$0xf]
      %v868 = vld [vmem:[%s266 + $0x8] sm:$0xf]
      %v869 = vld [vmem:[%s266 + $0xc] sm:$0xf]
      %v870 = vld [vmem:[%s266 + $0x10] sm:$0xf]
      %v871 = vld [vmem:[%s266 + $0x14] sm:$0xf]
      %v872 = vld [vmem:[%s266 + $0x18] sm:$0xf]
      %v873 = vld [vmem:[%s266 + $0x1c] sm:$0xf]
      %v874 = vld [vmem:[%s266 + $0x20] sm:$0xf]
      %v875 = vld [vmem:[%s266 + $0x24] sm:$0xf]
      %v876 = vld [vmem:[%s266 + $0x28] sm:$0xf]
      %v877 = vld [vmem:[%s266 + $0x2c] sm:$0xf]
      %v878 = vld [vmem:[%s266 + $0x30] sm:$0xf]
      %v879 = vld [vmem:[%s266 + $0x34] sm:$0xf]
      %v880 = vld [vmem:[%s266 + $0x38] sm:$0xf]
      %v881 = vld [vmem:[%s266 + $0x3c] sm:$0xf]
      %v882 = vld [vmem:[%s266 + $0x40] sm:$0xf]
      %v883 = vld [vmem:[%s266 + $0x44] sm:$0xf]
      %v884 = vld [vmem:[%s266 + $0x48] sm:$0xf]
      %v885 = vld [vmem:[%s266 + $0x4c] sm:$0xf]
      %v886 = vld [vmem:[%s266 + $0x50] sm:$0xf]
      %v887 = vld [vmem:[%s266 + $0x54] sm:$0xf]
      %v888 = vld [vmem:[%s266 + $0x58] sm:$0xf]
      %v889 = vld [vmem:[%s266 + $0x5c] sm:$0xf]
      %v890 = vld [vmem:[%s266 + $0x60] sm:$0xf]
      %v891 = vld [vmem:[%s266 + $0x64] sm:$0xf]
      %v892 = vld [vmem:[%s266 + $0x68] sm:$0xf]
      %v893 = vld [vmem:[%s266 + $0x6c] sm:$0xf]
      %v894 = vld [vmem:[%s266 + $0x70] sm:$0xf]
      %v895 = vld [vmem:[%s266 + $0x74] sm:$0xf]
      %v896 = vld [vmem:[%s266 + $0x78] sm:$0xf]
      %v897 = vld [vmem:[%s266 + $0x7c] sm:$0xf]
      %v906 = vunpack.c.l.b16 %v866
      %v907 = vunpack.c.l.b16 %v867
      %v908 = vunpack.c.l.b16 %v868
      %v909 = vunpack.c.l.b16 %v869
      %v910 = vunpack.c.l.b16 %v870
      %v911 = vunpack.c.l.b16 %v871
      %v912 = vunpack.c.l.b16 %v872
      %v913 = vunpack.c.l.b16 %v873
      %v914 = vpack.c.b16 %v907, %v906
      %v915 = vpack.c.b16 %v909, %v908
      %v916 = vpack.c.b16 %v911, %v910
      %v917 = vpack.c.b16 %v913, %v912
      %v923 = vsel %vm713, %v858, 0
      %v926 = vsel %vm713, %v859, 0
      %928 = vmatprep.subr.bf16.mxu0 0
      %929 = vmatpush1.bf16.msra.mxu0 %v914
      %930 = vmatprep.subr.bf16.mxu0 0
      %931 = vmatpush1.bf16.msra.mxu0 %v915
      %932 = vmatprep.subr.bf16.mxu0 0
      %933 = vmatpush1.bf16.msra.mxu0 %v916
      %934 = vmatprep.subr.bf16.mxu0 0
      %935 = vmatpush1.bf16.msra.mxu0 %v917
      %936 = vmatprep.subr.bf16.mxu0 0
      %937 = vmatpush1.bf16.msra.mxu0 0
      %938 = vmatprep.subr.bf16.mxu0 0
      %939 = vmatpush1.bf16.msra.mxu0 0
      %940 = vmatprep.subr.bf16.mxu0 0
      %941 = vmatpush1.bf16.msra.mxu0 0
      %942 = vmatprep.subr.bf16.mxu0 0
      %943 = vmatpush1.bf16.msra.mxu0 0
      %944 = vmatprep.subr.bf16.mxu0 0
      %945 = vmatpush1.bf16.msra.mxu0 0
      %946 = vmatprep.subr.bf16.mxu0 0
      %947 = vmatpush1.bf16.msra.mxu0 0
      %948 = vmatprep.subr.bf16.mxu0 0
      %949 = vmatpush1.bf16.msra.mxu0 0
      %950 = vmatprep.subr.bf16.mxu0 0
      %951 = vmatpush1.bf16.msra.mxu0 0
      %952 = vmatprep.subr.bf16.mxu0 0
      %953 = vmatpush1.bf16.msra.mxu0 0
      %954 = vmatprep.subr.bf16.mxu0 0
      %955 = vmatpush1.bf16.msra.mxu0 0
      %956 = vmatprep.subr.bf16.mxu0 0
      %957 = vmatpush1.bf16.msra.mxu0 0
      %958 = vmatprep.subr.bf16.mxu0 0
      %959 = vmatpush1.bf16.msra.mxu0 0
      %960 = vmatprep.mubr.bf16.mxu0 0
      %961 = vmatmul.mubr.bf16.gmra.mrb[0].mxu0 %v923
      %v962 = vpop.f32.mrb[0].mxu0
      %v963 = vadd.f32 0.0, %v962
      %v964 = vpop.f32.mrb[0].mxu0
      %v965 = vpop.f32.mrb[0].mxu0
      %v966 = vadd.f32 0.0, %v965
      %v967 = vpop.f32.mrb[0].mxu0
      %968 = vmatprep.mubr.bf16.mxu0 0
      %969 = vmatmul.mubr.bf16.gmra.mrb[0].mxu0 %v926
      %v970 = vpop.f32.mrb[0].mxu0
      %v971 = vadd.f32 0.0, %v970
      %v972 = vpop.f32.mrb[0].mxu0
      %v973 = vpop.f32.mrb[0].mxu0
      %v974 = vadd.f32 0.0, %v973
      %v975 = vpop.f32.mrb[0].mxu0
      %976 = vdwg.mxu0
      %v985 = vunpack.c.l.b16 %v874
      %v986 = vunpack.c.l.b16 %v875
      %v987 = vunpack.c.l.b16 %v876
      %v988 = vunpack.c.l.b16 %v877
      %v989 = vunpack.c.l.b16 %v878
      %v990 = vunpack.c.l.b16 %v879
      %v991 = vunpack.c.l.b16 %v880
      %v992 = vunpack.c.l.b16 %v881
      %v993 = vpack.c.b16 %v986, %v985
      %v994 = vpack.c.b16 %v988, %v987
      %v995 = vpack.c.b16 %v990, %v989
      %v996 = vpack.c.b16 %v992, %v991
      %v1002 = vsel %vm713, %v860, 0
      %v1005 = vsel %vm713, %v861, 0
      %1007 = vmatprep.subr.bf16.mxu0 0
      %1008 = vmatpush1.bf16.msra.mxu0 %v993
      %1009 = vmatprep.subr.bf16.mxu0 0
      %1010 = vmatpush1.bf16.msra.mxu0 %v994
      %1011 = vmatprep.subr.bf16.mxu0 0
      %1012 = vmatpush1.bf16.msra.mxu0 %v995
      %1013 = vmatprep.subr.bf16.mxu0 0
      %1014 = vmatpush1.bf16.msra.mxu0 %v996
      %1015 = vmatprep.subr.bf16.mxu0 0
      %1016 = vmatpush1.bf16.msra.mxu0 0
      %1017 = vmatprep.subr.bf16.mxu0 0
      %1018 = vmatpush1.bf16.msra.mxu0 0
      %1019 = vmatprep.subr.bf16.mxu0 0
      %1020 = vmatpush1.bf16.msra.mxu0 0
      %1021 = vmatprep.subr.bf16.mxu0 0
      %1022 = vmatpush1.bf16.msra.mxu0 0
      %1023 = vmatprep.subr.bf16.mxu0 0
      %1024 = vmatpush1.bf16.msra.mxu0 0
      %1025 = vmatprep.subr.bf16.mxu0 0
      %1026 = vmatpush1.bf16.msra.mxu0 0
      %1027 = vmatprep.subr.bf16.mxu0 0
      %1028 = vmatpush1.bf16.msra.mxu0 0
      %1029 = vmatprep.subr.bf16.mxu0 0
      %1030 = vmatpush1.bf16.msra.mxu0 0
      %1031 = vmatprep.subr.bf16.mxu0 0
      %1032 = vmatpush1.bf16.msra.mxu0 0
      %1033 = vmatprep.subr.bf16.mxu0 0
      %1034 = vmatpush1.bf16.msra.mxu0 0
      %1035 = vmatprep.subr.bf16.mxu0 0
      %1036 = vmatpush1.bf16.msra.mxu0 0
      %1037 = vmatprep.subr.bf16.mxu0 0
      %1038 = vmatpush1.bf16.msra.mxu0 0
      %1039 = vmatprep.mubr.bf16.mxu0 0
      %1040 = vmatmul.mubr.bf16.gmra.mrb[0].mxu0 %v1002
      %v1041 = vpop.f32.mrb[0].mxu0
      %v1042 = vadd.f32 0.0, %v1041
      %v1043 = vpop.f32.mrb[0].mxu0
      %v1044 = vpop.f32.mrb[0].mxu0
      %v1045 = vadd.f32 0.0, %v1044
      %v1046 = vpop.f32.mrb[0].mxu0
      %1047 = vmatprep.mubr.bf16.mxu0 0
      %1048 = vmatmul.mubr.bf16.gmra.mrb[0].mxu0 %v1005
      %v1049 = vpop.f32.mrb[0].mxu0
      %v1050 = vadd.f32 0.0, %v1049
      %v1051 = vpop.f32.mrb[0].mxu0
      %v1052 = vpop.f32.mrb[0].mxu0
      %v1053 = vadd.f32 0.0, %v1052
      %v1054 = vpop.f32.mrb[0].mxu0
      %1055 = vdwg.mxu0
      %v1064 = vunpack.c.l.b16 %v882
      %v1065 = vunpack.c.l.b16 %v883
      %v1066 = vunpack.c.l.b16 %v884
      %v1067 = vunpack.c.l.b16 %v885
      %v1068 = vunpack.c.l.b16 %v886
      %v1069 = vunpack.c.l.b16 %v887
      %v1070 = vunpack.c.l.b16 %v888
      %v1071 = vunpack.c.l.b16 %v889
      %v1072 = vpack.c.b16 %v1065, %v1064
      %v1073 = vpack.c.b16 %v1067, %v1066
      %v1074 = vpack.c.b16 %v1069, %v1068
      %v1075 = vpack.c.b16 %v1071, %v1070
      %v1081 = vsel %vm713, %v862, 0
      %v1084 = vsel %vm713, %v863, 0
      %1086 = vmatprep.subr.bf16.mxu0 0
      %1087 = vmatpush1.bf16.msra.mxu0 %v1072
      %1088 = vmatprep.subr.bf16.mxu0 0
      %1089 = vmatpush1.bf16.msra.mxu0 %v1073
      %1090 = vmatprep.subr.bf16.mxu0 0
      %1091 = vmatpush1.bf16.msra.mxu0 %v1074
      %1092 = vmatprep.subr.bf16.mxu0 0
      %1093 = vmatpush1.bf16.msra.mxu0 %v1075
      %1094 = vmatprep.subr.bf16.mxu0 0
      %1095 = vmatpush1.bf16.msra.mxu0 0
      %1096 = vmatprep.subr.bf16.mxu0 0
      %1097 = vmatpush1.bf16.msra.mxu0 0
      %1098 = vmatprep.subr.bf16.mxu0 0
      %1099 = vmatpush1.bf16.msra.mxu0 0
      %1100 = vmatprep.subr.bf16.mxu0 0
      %1101 = vmatpush1.bf16.msra.mxu0 0
      %1102 = vmatprep.subr.bf16.mxu0 0
      %1103 = vmatpush1.bf16.msra.mxu0 0
      %1104 = vmatprep.subr.bf16.mxu0 0
      %1105 = vmatpush1.bf16.msra.mxu0 0
      %1106 = vmatprep.subr.bf16.mxu0 0
      %1107 = vmatpush1.bf16.msra.mxu0 0
      %1108 = vmatprep.subr.bf16.mxu0 0
      %1109 = vmatpush1.bf16.msra.mxu0 0
      %1110 = vmatprep.subr.bf16.mxu0 0
      %1111 = vmatpush1.bf16.msra.mxu0 0
      %1112 = vmatprep.subr.bf16.mxu0 0
      %1113 = vmatpush1.bf16.msra.mxu0 0
      %1114 = vmatprep.subr.bf16.mxu0 0
      %1115 = vmatpush1.bf16.msra.mxu0 0
      %1116 = vmatprep.subr.bf16.mxu0 0
      %1117 = vmatpush1.bf16.msra.mxu0 0
      %1118 = vmatprep.mubr.bf16.mxu0 0
      %1119 = vmatmul.mubr.bf16.gmra.mrb[0].mxu0 %v1081
      %v1120 = vpop.f32.mrb[0].mxu0
      %v1121 = vadd.f32 0.0, %v1120
      %v1122 = vpop.f32.mrb[0].mxu0
      %v1123 = vpop.f32.mrb[0].mxu0
      %v1124 = vadd.f32 0.0, %v1123
      %v1125 = vpop.f32.mrb[0].mxu0
      %1126 = vmatprep.mubr.bf16.mxu0 0
      %1127 = vmatmul.mubr.bf16.gmra.mrb[0].mxu0 %v1084
      %v1128 = vpop.f32.mrb[0].mxu0
      %v1129 = vadd.f32 0.0, %v1128
      %v1130 = vpop.f32.mrb[0].mxu0
      %v1131 = vpop.f32.mrb[0].mxu0
      %v1132 = vadd.f32 0.0, %v1131
      %v1133 = vpop.f32.mrb[0].mxu0
      %1134 = vdwg.mxu0
      %v1143 = vunpack.c.l.b16 %v890
      %v1144 = vunpack.c.l.b16 %v891
      %v1145 = vunpack.c.l.b16 %v892
      %v1146 = vunpack.c.l.b16 %v893
      %v1147 = vunpack.c.l.b16 %v894
      %v1148 = vunpack.c.l.b16 %v895
      %v1149 = vunpack.c.l.b16 %v896
      %v1150 = vunpack.c.l.b16 %v897
      %v1151 = vpack.c.b16 %v1144, %v1143
      %v1152 = vpack.c.b16 %v1146, %v1145
      %v1153 = vpack.c.b16 %v1148, %v1147
      %v1154 = vpack.c.b16 %v1150, %v1149
      %v1160 = vsel %vm713, %v864, 0
      %v1163 = vsel %vm713, %v865, 0
      %1165 = vmatprep.subr.bf16.mxu0 0
      %1166 = vmatpush1.bf16.msra.mxu0 %v1151
      %1167 = vmatprep.subr.bf16.mxu0 0
      %1168 = vmatpush1.bf16.msra.mxu0 %v1152
      %1169 = vmatprep.subr.bf16.mxu0 0
      %1170 = vmatpush1.bf16.msra.mxu0 %v1153
      %1171 = vmatprep.subr.bf16.mxu0 0
      %1172 = vmatpush1.bf16.msra.mxu0 %v1154
      %1173 = vmatprep.subr.bf16.mxu0 0
      %1174 = vmatpush1.bf16.msra.mxu0 0
      %1175 = vmatprep.subr.bf16.mxu0 0
      %1176 = vmatpush1.bf16.msra.mxu0 0
      %1177 = vmatprep.subr.bf16.mxu0 0
      %1178 = vmatpush1.bf16.msra.mxu0 0
      %1179 = vmatprep.subr.bf16.mxu0 0
      %1180 = vmatpush1.bf16.msra.mxu0 0
      %1181 = vmatprep.subr.bf16.mxu0 0
      %1182 = vmatpush1.bf16.msra.mxu0 0
      %1183 = vmatprep.subr.bf16.mxu0 0
      %1184 = vmatpush1.bf16.msra.mxu0 0
      %1185 = vmatprep.subr.bf16.mxu0 0
      %1186 = vmatpush1.bf16.msra.mxu0 0
      %1187 = vmatprep.subr.bf16.mxu0 0
      %1188 = vmatpush1.bf16.msra.mxu0 0
      %1189 = vmatprep.subr.bf16.mxu0 0
      %1190 = vmatpush1.bf16.msra.mxu0 0
      %1191 = vmatprep.subr.bf16.mxu0 0
      %1192 = vmatpush1.bf16.msra.mxu0 0
      %1193 = vmatprep.subr.bf16.mxu0 0
      %1194 = vmatpush1.bf16.msra.mxu0 0
      %1195 = vmatprep.subr.bf16.mxu0 0
      %1196 = vmatpush1.bf16.msra.mxu0 0
      %1197 = vmatprep.mubr.bf16.mxu0 0
      %1198 = vmatmul.mubr.bf16.gmra.mrb[0].mxu0 %v1160
      %v1199 = vpop.f32.mrb[0].mxu0
      %v1200 = vadd.f32 0.0, %v1199
      %v1201 = vpop.f32.mrb[0].mxu0
      %v1202 = vpop.f32.mrb[0].mxu0
      %v1203 = vadd.f32 0.0, %v1202
      %v1204 = vpop.f32.mrb[0].mxu0
      %1205 = vmatprep.mubr.bf16.mxu0 0
      %1206 = vmatmul.mubr.bf16.gmra.mrb[0].mxu0 %v1163
      %v1207 = vpop.f32.mrb[0].mxu0
      %v1208 = vadd.f32 0.0, %v1207
      %v1209 = vpop.f32.mrb[0].mxu0
      %v1210 = vpop.f32.mrb[0].mxu0
      %v1211 = vadd.f32 0.0, %v1210
      %v1212 = vpop.f32.mrb[0].mxu0
      %1213 = vdwg.mxu0
      %v1214 = vrcp.pop %v812
      %v1215 = vrcp.pop %v815
      %v1216 = vrcp.pop %v818
      %v1217 = vrcp.pop %v821
      %v1218 = vrcp.pop %v824
      %v1219 = vrcp.pop %v827
      %v1220 = vrcp.pop %v830
      %v1221 = vrcp.pop %v833
      %v1222 = vrcp.pop %v836
      %v1223 = vrcp.pop %v839
      %v1224 = vrcp.pop %v842
      %v1225 = vrcp.pop %v845
      %v1226 = vrcp.pop %v848
      %v1227 = vrcp.pop %v851
      %v1228 = vrcp.pop %v854
      %v1229 = vrcp.pop %v857
      %v1230 = vmul.f32 %v963, %v1214
      %v1231 = vmul.f32 %v966, %v1215
      %v1232 = vmul.f32 %v971, %v1216
      %v1233 = vmul.f32 %v974, %v1217
      %v1234 = vmul.f32 %v1042, %v1218
      %v1235 = vmul.f32 %v1045, %v1219
      %v1236 = vmul.f32 %v1050, %v1220
      %v1237 = vmul.f32 %v1053, %v1221
      %v1238 = vmul.f32 %v1121, %v1222
      %v1239 = vmul.f32 %v1124, %v1223
      %v1240 = vmul.f32 %v1129, %v1224
      %v1241 = vmul.f32 %v1132, %v1225
      %v1242 = vmul.f32 %v1200, %v1226
      %v1243 = vmul.f32 %v1203, %v1227
      %v1244 = vmul.f32 %v1208, %v1228
      %v1245 = vmul.f32 %v1211, %v1229
      %v1246 = vld [vmem:[%s266] sm:$0xf]
      %v1247 = vld [vmem:[%s266 + $0x4] sm:$0xf]
      %v1248 = vld [vmem:[%s266 + $0x8] sm:$0xf]
      %v1249 = vld [vmem:[%s266 + $0xc] sm:$0xf]
      %v1250 = vld [vmem:[%s266 + $0x10] sm:$0xf]
      %v1251 = vld [vmem:[%s266 + $0x14] sm:$0xf]
      %v1252 = vld [vmem:[%s266 + $0x18] sm:$0xf]
      %v1253 = vld [vmem:[%s266 + $0x1c] sm:$0xf]
      %v1254 = vld [vmem:[%s266 + $0x20] sm:$0xf]
      %v1255 = vld [vmem:[%s266 + $0x24] sm:$0xf]
      %v1256 = vld [vmem:[%s266 + $0x28] sm:$0xf]
      %v1257 = vld [vmem:[%s266 + $0x2c] sm:$0xf]
      %v1258 = vld [vmem:[%s266 + $0x30] sm:$0xf]
      %v1259 = vld [vmem:[%s266 + $0x34] sm:$0xf]
      %v1260 = vld [vmem:[%s266 + $0x38] sm:$0xf]
      %v1261 = vld [vmem:[%s266 + $0x3c] sm:$0xf]
      %v1262 = vld [vmem:[%s266 + $0x40] sm:$0xf]
      %v1263 = vld [vmem:[%s266 + $0x44] sm:$0xf]
      %v1264 = vld [vmem:[%s266 + $0x48] sm:$0xf]
      %v1265 = vld [vmem:[%s266 + $0x4c] sm:$0xf]
      %v1266 = vld [vmem:[%s266 + $0x50] sm:$0xf]
      %v1267 = vld [vmem:[%s266 + $0x54] sm:$0xf]
      %v1268 = vld [vmem:[%s266 + $0x58] sm:$0xf]
      %v1269 = vld [vmem:[%s266 + $0x5c] sm:$0xf]
      %v1270 = vld [vmem:[%s266 + $0x60] sm:$0xf]
      %v1271 = vld [vmem:[%s266 + $0x64] sm:$0xf]
      %v1272 = vld [vmem:[%s266 + $0x68] sm:$0xf]
      %v1273 = vld [vmem:[%s266 + $0x6c] sm:$0xf]
      %v1274 = vld [vmem:[%s266 + $0x70] sm:$0xf]
      %v1275 = vld [vmem:[%s266 + $0x74] sm:$0xf]
      %v1276 = vld [vmem:[%s266 + $0x78] sm:$0xf]
      %v1277 = vld [vmem:[%s266 + $0x7c] sm:$0xf]
      %v1278 = vunpack.c.l.bf16 %v1246
      %v1279 = vunpack.c.l.bf16 %v1247
      %v1280 = vunpack.c.l.bf16 %v1248
      %v1281 = vunpack.c.l.bf16 %v1249
      %v1282 = vunpack.c.l.bf16 %v1250
      %v1283 = vunpack.c.l.bf16 %v1251
      %v1284 = vunpack.c.l.bf16 %v1252
      %v1285 = vunpack.c.l.bf16 %v1253
      %v1286 = vunpack.c.l.bf16 %v1254
      %v1287 = vunpack.c.l.bf16 %v1255
      %v1288 = vunpack.c.l.bf16 %v1256
      %v1289 = vunpack.c.l.bf16 %v1257
      %v1290 = vunpack.c.l.bf16 %v1258
      %v1291 = vunpack.c.l.bf16 %v1259
      %v1292 = vunpack.c.l.bf16 %v1260
      %v1293 = vunpack.c.l.bf16 %v1261
      %v1294 = vunpack.c.l.bf16 %v1262
      %v1295 = vunpack.c.l.bf16 %v1263
      %v1296 = vunpack.c.l.bf16 %v1264
      %v1297 = vunpack.c.l.bf16 %v1265
      %v1298 = vunpack.c.l.bf16 %v1266
      %v1299 = vunpack.c.l.bf16 %v1267
      %v1300 = vunpack.c.l.bf16 %v1268
      %v1301 = vunpack.c.l.bf16 %v1269
      %v1302 = vunpack.c.l.bf16 %v1270
      %v1303 = vunpack.c.l.bf16 %v1271
      %v1304 = vunpack.c.l.bf16 %v1272
      %v1305 = vunpack.c.l.bf16 %v1273
      %v1306 = vunpack.c.l.bf16 %v1274
      %v1307 = vunpack.c.l.bf16 %v1275
      %v1308 = vunpack.c.l.bf16 %v1276
      %v1309 = vunpack.c.l.bf16 %v1277
      %v1310 = vsel %vm384, %v1278, 0.0
      %v1311 = vsel %vm384, %v1279, 0.0
      %v1312 = vadd.f32 %v1310, %v1311
      %v1313 = vsel %vm384, %v1280, 0.0
      %v1314 = vadd.f32 %v1312, %v1313
      %v1315 = vsel %vm384, %v1281, 0.0
      %v1316 = vadd.f32 %v1314, %v1315
      %v1317 = vsel %vm384, %v1282, 0.0
      %v1318 = vadd.f32 %v1316, %v1317
      %v1319 = vsel %vm384, %v1283, 0.0
      %v1320 = vadd.f32 %v1318, %v1319
      %v1321 = vsel %vm384, %v1284, 0.0
      %v1322 = vadd.f32 %v1320, %v1321
      %v1323 = vsel %vm384, %v1285, 0.0
      %v1324 = vadd.f32 %v1322, %v1323
      %v1325 = vrot.slane %v1324, 4
      %v1326 = vadd.f32 %v1324, %v1325
      %v1327 = vrot.slane %v1326, 2
      %v1328 = vadd.f32 %v1326, %v1327
      %v1329 = vrot.slane %v1328, 1
      %v1330 = vadd.f32 %v1328, %v1329
      %v1331 = vsel %vm384, %v1286, 0.0
      %v1332 = vsel %vm384, %v1287, 0.0
      %v1333 = vadd.f32 %v1331, %v1332
      %v1334 = vsel %vm384, %v1288, 0.0
      %v1335 = vadd.f32 %v1333, %v1334
      %v1336 = vsel %vm384, %v1289, 0.0
      %v1337 = vadd.f32 %v1335, %v1336
      %v1338 = vsel %vm384, %v1290, 0.0
      %v1339 = vadd.f32 %v1337, %v1338
      %v1340 = vsel %vm384, %v1291, 0.0
      %v1341 = vadd.f32 %v1339, %v1340
      %v1342 = vsel %vm384, %v1292, 0.0
      %v1343 = vadd.f32 %v1341, %v1342
      %v1344 = vsel %vm384, %v1293, 0.0
      %v1345 = vadd.f32 %v1343, %v1344
      %v1346 = vrot.slane %v1345, 4
      %v1347 = vadd.f32 %v1345, %v1346
      %v1348 = vrot.slane %v1347, 2
      %v1349 = vadd.f32 %v1347, %v1348
      %v1350 = vrot.slane %v1349, 1
      %v1351 = vadd.f32 %v1349, %v1350
      %v1352 = vsel %vm384, %v1294, 0.0
      %v1353 = vsel %vm384, %v1295, 0.0
      %v1354 = vadd.f32 %v1352, %v1353
      %v1355 = vsel %vm384, %v1296, 0.0
      %v1356 = vadd.f32 %v1354, %v1355
      %v1357 = vsel %vm384, %v1297, 0.0
      %v1358 = vadd.f32 %v1356, %v1357
      %v1359 = vsel %vm384, %v1298, 0.0
      %v1360 = vadd.f32 %v1358, %v1359
      %v1361 = vsel %vm384, %v1299, 0.0
      %v1362 = vadd.f32 %v1360, %v1361
      %v1363 = vsel %vm384, %v1300, 0.0
      %v1364 = vadd.f32 %v1362, %v1363
      %v1365 = vsel %vm384, %v1301, 0.0
      %v1366 = vadd.f32 %v1364, %v1365
      %v1367 = vrot.slane %v1366, 4
      %v1368 = vadd.f32 %v1366, %v1367
      %v1369 = vrot.slane %v1368, 2
      %v1370 = vadd.f32 %v1368, %v1369
      %v1371 = vrot.slane %v1370, 1
      %v1372 = vadd.f32 %v1370, %v1371
      %v1373 = vsel %vm384, %v1302, 0.0
      %v1374 = vsel %vm384, %v1303, 0.0
      %v1375 = vadd.f32 %v1373, %v1374
      %v1376 = vsel %vm384, %v1304, 0.0
      %v1377 = vadd.f32 %v1375, %v1376
      %v1378 = vsel %vm384, %v1305, 0.0
      %v1379 = vadd.f32 %v1377, %v1378
      %v1380 = vsel %vm384, %v1306, 0.0
      %v1381 = vadd.f32 %v1379, %v1380
      %v1382 = vsel %vm384, %v1307, 0.0
      %v1383 = vadd.f32 %v1381, %v1382
      %v1384 = vsel %vm384, %v1308, 0.0
      %v1385 = vadd.f32 %v1383, %v1384
      %v1386 = vsel %vm384, %v1309, 0.0
      %v1387 = vadd.f32 %v1385, %v1386
      %v1388 = vrot.slane %v1387, 4
      %v1389 = vadd.f32 %v1387, %v1388
      %v1390 = vrot.slane %v1389, 2
      %v1391 = vadd.f32 %v1389, %v1390
      %v1392 = vrot.slane %v1391, 1
      %v1393 = vadd.f32 %v1391, %v1392
      %v1394 = vrcp.pop 64.0
      %v1395 = vmul.f32 %v1330, %v1394
      %v1396 = vmul.f32 %v1351, %v1394
      %v1397 = vmul.f32 %v1372, %v1394
      %v1398 = vmul.f32 %v1393, %v1394
      %v1399 = vlaneseq
      %v1400 = vshrl.u32 %v1399, 7
      %v1401 = vadd.s32 %v1400, 8
      %v1402 = vadd.s32 %v1400, 16
      %v1403 = vadd.s32 %v1400, 24
      %v1404 = vadd.s32 %v1400, 32
      %v1405 = vadd.s32 %v1400, 40
      %v1406 = vadd.s32 %v1400, 48
      %v1407 = vadd.s32 %v1400, 56
      %v1408 = vld [vmem:[%s245] sm:$0x1]
      %v1409 = vld [vmem:[%s245 + $0x1] sm:$0x1]
      %v1410 = vld [vmem:[%s245 + $0x2] sm:$0x1]
      %v1411 = vld [vmem:[%s245 + $0x3] sm:$0x1]
      %v1412 = vlaneseq
      %v1413 = vshrl.u32 %v1412, 7
      %v1414 = vsub.s32 0, %v1413
      %v1415 = vrot.slane %v1408, %v1414
      %v1416 = vlaneseq
      %v1417 = vshrl.u32 %v1416, 7
      %v1418 = vsub.s32 0, %v1417
      %v1419 = vrot.slane %v1409, %v1418
      %v1420 = vlaneseq
      %v1421 = vshrl.u32 %v1420, 7
      %v1422 = vsub.s32 0, %v1421
      %v1423 = vrot.slane %v1410, %v1422
      %v1424 = vlaneseq
      %v1425 = vshrl.u32 %v1424, 7
      %v1426 = vsub.s32 0, %v1425
      %v1427 = vrot.slane %v1411, %v1426
      %vm1428 = vcmp.eq.s32.totalorder %v1400, %v1415
      %vm1429 = vcmp.eq.s32.totalorder %v1401, %v1415
      %vm1430 = vcmp.eq.s32.totalorder %v1402, %v1415
      %vm1431 = vcmp.eq.s32.totalorder %v1403, %v1415
      %vm1432 = vcmp.eq.s32.totalorder %v1404, %v1415
      %vm1433 = vcmp.eq.s32.totalorder %v1405, %v1415
      %vm1434 = vcmp.eq.s32.totalorder %v1406, %v1415
      %vm1435 = vcmp.eq.s32.totalorder %v1407, %v1415
      %vm1436 = vcmp.eq.s32.totalorder %v1400, %v1419
      %vm1437 = vcmp.eq.s32.totalorder %v1401, %v1419
      %vm1438 = vcmp.eq.s32.totalorder %v1402, %v1419
      %vm1439 = vcmp.eq.s32.totalorder %v1403, %v1419
      %vm1440 = vcmp.eq.s32.totalorder %v1404, %v1419
      %vm1441 = vcmp.eq.s32.totalorder %v1405, %v1419
      %vm1442 = vcmp.eq.s32.totalorder %v1406, %v1419
      %vm1443 = vcmp.eq.s32.totalorder %v1407, %v1419
      %vm1444 = vcmp.eq.s32.totalorder %v1400, %v1423
      %vm1445 = vcmp.eq.s32.totalorder %v1401, %v1423
      %vm1446 = vcmp.eq.s32.totalorder %v1402, %v1423
      %vm1447 = vcmp.eq.s32.totalorder %v1403, %v1423
      %vm1448 = vcmp.eq.s32.totalorder %v1404, %v1423
      %vm1449 = vcmp.eq.s32.totalorder %v1405, %v1423
      %vm1450 = vcmp.eq.s32.totalorder %v1406, %v1423
      %vm1451 = vcmp.eq.s32.totalorder %v1407, %v1423
      %vm1452 = vcmp.eq.s32.totalorder %v1400, %v1427
      %vm1453 = vcmp.eq.s32.totalorder %v1401, %v1427
      %vm1454 = vcmp.eq.s32.totalorder %v1402, %v1427
      %vm1455 = vcmp.eq.s32.totalorder %v1403, %v1427
      %vm1456 = vcmp.eq.s32.totalorder %v1404, %v1427
      %vm1457 = vcmp.eq.s32.totalorder %v1405, %v1427
      %vm1458 = vcmp.eq.s32.totalorder %v1406, %v1427
      %vm1459 = vcmp.eq.s32.totalorder %v1407, %v1427
      %v1460 = vsel %vm1428, 1, 0
      %v1461 = vsel %vm1429, 1, 0
      %v1462 = vsel %vm1430, 1, 0
      %v1463 = vsel %vm1431, 1, 0
      %v1464 = vsel %vm1432, 1, 0
      %v1465 = vsel %vm1433, 1, 0
      %v1466 = vsel %vm1434, 1, 0
      %v1467 = vsel %vm1435, 1, 0
      %v1468 = vsel %vm1436, 1, 0
      %v1469 = vsel %vm1437, 1, 0
      %v1470 = vsel %vm1438, 1, 0
      %v1471 = vsel %vm1439, 1, 0
      %v1472 = vsel %vm1440, 1, 0
      %v1473 = vsel %vm1441, 1, 0
      %v1474 = vsel %vm1442, 1, 0
      %v1475 = vsel %vm1443, 1, 0
      %v1476 = vsel %vm1444, 1, 0
      %v1477 = vsel %vm1445, 1, 0
      %v1478 = vsel %vm1446, 1, 0
      %v1479 = vsel %vm1447, 1, 0
      %v1480 = vsel %vm1448, 1, 0
      %v1481 = vsel %vm1449, 1, 0
      %v1482 = vsel %vm1450, 1, 0
      %v1483 = vsel %vm1451, 1, 0
      %v1484 = vsel %vm1452, 1, 0
      %v1485 = vsel %vm1453, 1, 0
      %v1486 = vsel %vm1454, 1, 0
      %v1487 = vsel %vm1455, 1, 0
      %v1488 = vsel %vm1456, 1, 0
      %v1489 = vsel %vm1457, 1, 0
      %v1490 = vsel %vm1458, 1, 0
      %v1491 = vsel %vm1459, 1, 0
      %v1492 = vcvt.s32.f32 %v1460
      %v1493 = vcvt.s32.f32 %v1461
      %v1494 = vcvt.s32.f32 %v1462
      %v1495 = vcvt.s32.f32 %v1463
      %v1496 = vcvt.s32.f32 %v1464
      %v1497 = vcvt.s32.f32 %v1465
      %v1498 = vcvt.s32.f32 %v1466
      %v1499 = vcvt.s32.f32 %v1467
      %v1500 = vcvt.s32.f32 %v1468
      %v1501 = vcvt.s32.f32 %v1469
      %v1502 = vcvt.s32.f32 %v1470
      %v1503 = vcvt.s32.f32 %v1471
      %v1504 = vcvt.s32.f32 %v1472
      %v1505 = vcvt.s32.f32 %v1473
      %v1506 = vcvt.s32.f32 %v1474
      %v1507 = vcvt.s32.f32 %v1475
      %v1508 = vcvt.s32.f32 %v1476
      %v1509 = vcvt.s32.f32 %v1477
      %v1510 = vcvt.s32.f32 %v1478
      %v1511 = vcvt.s32.f32 %v1479
      %v1512 = vcvt.s32.f32 %v1480
      %v1513 = vcvt.s32.f32 %v1481
      %v1514 = vcvt.s32.f32 %v1482
      %v1515 = vcvt.s32.f32 %v1483
      %v1516 = vcvt.s32.f32 %v1484
      %v1517 = vcvt.s32.f32 %v1485
      %v1518 = vcvt.s32.f32 %v1486
      %v1519 = vcvt.s32.f32 %v1487
      %v1520 = vcvt.s32.f32 %v1488
      %v1521 = vcvt.s32.f32 %v1489
      %v1522 = vcvt.s32.f32 %v1490
      %v1523 = vcvt.s32.f32 %v1491
      %v1524 = vsel %vm384, %v1492, 0.0
      %1525 = vadd.xlane.f32.xlu0 %v1524
      %v1526 = vpop.xlane.xlu0 %1525
      %v1527 = vsel %vm384, %v1493, 0.0
      %1528 = vadd.xlane.f32.xlu0 %v1527
      %v1529 = vpop.xlane.xlu0 %1528
      %v1530 = vsel %vm384, %v1494, 0.0
      %1531 = vadd.xlane.f32.xlu0 %v1530
      %v1532 = vpop.xlane.xlu0 %1531
      %v1533 = vsel %vm384, %v1495, 0.0
      %1534 = vadd.xlane.f32.xlu0 %v1533
      %v1535 = vpop.xlane.xlu0 %1534
      %v1536 = vsel %vm384, %v1496, 0.0
      %1537 = vadd.xlane.f32.xlu0 %v1536
      %v1538 = vpop.xlane.xlu0 %1537
      %v1539 = vsel %vm384, %v1497, 0.0
      %1540 = vadd.xlane.f32.xlu0 %v1539
      %v1541 = vpop.xlane.xlu0 %1540
      %v1542 = vsel %vm384, %v1498, 0.0
      %1543 = vadd.xlane.f32.xlu0 %v1542
      %v1544 = vpop.xlane.xlu0 %1543
      %v1545 = vsel %vm384, %v1499, 0.0
      %1546 = vadd.xlane.f32.xlu0 %v1545
      %v1547 = vpop.xlane.xlu0 %1546
      %v1548 = vsel %vm384, %v1500, 0.0
      %1549 = vadd.xlane.f32.xlu0 %v1548
      %v1550 = vpop.xlane.xlu0 %1549
      %v1551 = vsel %vm384, %v1501, 0.0
      %1552 = vadd.xlane.f32.xlu0 %v1551
      %v1553 = vpop.xlane.xlu0 %1552
      %v1554 = vsel %vm384, %v1502, 0.0
      %1555 = vadd.xlane.f32.xlu0 %v1554
      %v1556 = vpop.xlane.xlu0 %1555
      %v1557 = vsel %vm384, %v1503, 0.0
      %1558 = vadd.xlane.f32.xlu0 %v1557
      %v1559 = vpop.xlane.xlu0 %1558
      %v1560 = vsel %vm384, %v1504, 0.0
      %1561 = vadd.xlane.f32.xlu0 %v1560
      %v1562 = vpop.xlane.xlu0 %1561
      %v1563 = vsel %vm384, %v1505, 0.0
      %1564 = vadd.xlane.f32.xlu0 %v1563
      %v1565 = vpop.xlane.xlu0 %1564
      %v1566 = vsel %vm384, %v1506, 0.0
      %1567 = vadd.xlane.f32.xlu0 %v1566
      %v1568 = vpop.xlane.xlu0 %1567
      %v1569 = vsel %vm384, %v1507, 0.0
      %1570 = vadd.xlane.f32.xlu0 %v1569
      %v1571 = vpop.xlane.xlu0 %1570
      %v1572 = vsel %vm384, %v1508, 0.0
      %1573 = vadd.xlane.f32.xlu0 %v1572
      %v1574 = vpop.xlane.xlu0 %1573
      %v1575 = vsel %vm384, %v1509, 0.0
      %1576 = vadd.xlane.f32.xlu0 %v1575
      %v1577 = vpop.xlane.xlu0 %1576
      %v1578 = vsel %vm384, %v1510, 0.0
      %1579 = vadd.xlane.f32.xlu0 %v1578
      %v1580 = vpop.xlane.xlu0 %1579
      %v1581 = vsel %vm384, %v1511, 0.0
      %1582 = vadd.xlane.f32.xlu0 %v1581
      %v1583 = vpop.xlane.xlu0 %1582
      %v1584 = vsel %vm384, %v1512, 0.0
      %1585 = vadd.xlane.f32.xlu0 %v1584
      %v1586 = vpop.xlane.xlu0 %1585
      %v1587 = vsel %vm384, %v1513, 0.0
      %1588 = vadd.xlane.f32.xlu0 %v1587
      %v1589 = vpop.xlane.xlu0 %1588
      %v1590 = vsel %vm384, %v1514, 0.0
      %1591 = vadd.xlane.f32.xlu0 %v1590
      %v1592 = vpop.xlane.xlu0 %1591
      %v1593 = vsel %vm384, %v1515, 0.0
      %1594 = vadd.xlane.f32.xlu0 %v1593
      %v1595 = vpop.xlane.xlu0 %1594
      %v1596 = vsel %vm384, %v1516, 0.0
      %1597 = vadd.xlane.f32.xlu0 %v1596
      %v1598 = vpop.xlane.xlu0 %1597
      %v1599 = vsel %vm384, %v1517, 0.0
      %1600 = vadd.xlane.f32.xlu0 %v1599
      %v1601 = vpop.xlane.xlu0 %1600
      %v1602 = vsel %vm384, %v1518, 0.0
      %1603 = vadd.xlane.f32.xlu0 %v1602
      %v1604 = vpop.xlane.xlu0 %1603
      %v1605 = vsel %vm384, %v1519, 0.0
      %1606 = vadd.xlane.f32.xlu0 %v1605
      %v1607 = vpop.xlane.xlu0 %1606
      %v1608 = vsel %vm384, %v1520, 0.0
      %1609 = vadd.xlane.f32.xlu0 %v1608
      %v1610 = vpop.xlane.xlu0 %1609
      %v1611 = vsel %vm384, %v1521, 0.0
      %1612 = vadd.xlane.f32.xlu0 %v1611
      %v1613 = vpop.xlane.xlu0 %1612
      %v1614 = vsel %vm384, %v1522, 0.0
      %1615 = vadd.xlane.f32.xlu0 %v1614
      %v1616 = vpop.xlane.xlu0 %1615
      %v1617 = vsel %vm384, %v1523, 0.0
      %1618 = vadd.xlane.f32.xlu0 %v1617
      %v1619 = vpop.xlane.xlu0 %1618
      %v1620 = vsub.f32 1.0, %v1526
      %v1621 = vsub.f32 1.0, %v1529
      %v1622 = vsub.f32 1.0, %v1532
      %v1623 = vsub.f32 1.0, %v1535
      %v1624 = vsub.f32 1.0, %v1538
      %v1625 = vsub.f32 1.0, %v1541
      %v1626 = vsub.f32 1.0, %v1544
      %v1627 = vsub.f32 1.0, %v1547
      %v1628 = vsub.f32 1.0, %v1550
      %v1629 = vsub.f32 1.0, %v1553
      %v1630 = vsub.f32 1.0, %v1556
      %v1631 = vsub.f32 1.0, %v1559
      %v1632 = vsub.f32 1.0, %v1562
      %v1633 = vsub.f32 1.0, %v1565
      %v1634 = vsub.f32 1.0, %v1568
      %v1635 = vsub.f32 1.0, %v1571
      %v1636 = vsub.f32 1.0, %v1574
      %v1637 = vsub.f32 1.0, %v1577
      %v1638 = vsub.f32 1.0, %v1580
      %v1639 = vsub.f32 1.0, %v1583
      %v1640 = vsub.f32 1.0, %v1586
      %v1641 = vsub.f32 1.0, %v1589
      %v1642 = vsub.f32 1.0, %v1592
      %v1643 = vsub.f32 1.0, %v1595
      %v1644 = vsub.f32 1.0, %v1598
      %v1645 = vsub.f32 1.0, %v1601
      %v1646 = vsub.f32 1.0, %v1604
      %v1647 = vsub.f32 1.0, %v1607
      %v1648 = vsub.f32 1.0, %v1610
      %v1649 = vsub.f32 1.0, %v1613
      %v1650 = vsub.f32 1.0, %v1616
      %v1651 = vsub.f32 1.0, %v1619
      %v1652 = vmul.f32 %v1620, %v1395
      %v1653 = vmul.f32 %v1621, %v1395
      %v1654 = vmul.f32 %v1622, %v1395
      %v1655 = vmul.f32 %v1623, %v1395
      %v1656 = vmul.f32 %v1624, %v1395
      %v1657 = vmul.f32 %v1625, %v1395
      %v1658 = vmul.f32 %v1626, %v1395
      %v1659 = vmul.f32 %v1627, %v1395
      %v1660 = vmul.f32 %v1628, %v1396
      %v1661 = vmul.f32 %v1629, %v1396
      %v1662 = vmul.f32 %v1630, %v1396
      %v1663 = vmul.f32 %v1631, %v1396
      %v1664 = vmul.f32 %v1632, %v1396
      %v1665 = vmul.f32 %v1633, %v1396
      %v1666 = vmul.f32 %v1634, %v1396
      %v1667 = vmul.f32 %v1635, %v1396
      %v1668 = vmul.f32 %v1636, %v1397
      %v1669 = vmul.f32 %v1637, %v1397
      %v1670 = vmul.f32 %v1638, %v1397
      %v1671 = vmul.f32 %v1639, %v1397
      %v1672 = vmul.f32 %v1640, %v1397
      %v1673 = vmul.f32 %v1641, %v1397
      %v1674 = vmul.f32 %v1642, %v1397
      %v1675 = vmul.f32 %v1643, %v1397
      %v1676 = vmul.f32 %v1644, %v1398
      %v1677 = vmul.f32 %v1645, %v1398
      %v1678 = vmul.f32 %v1646, %v1398
      %v1679 = vmul.f32 %v1647, %v1398
      %v1680 = vmul.f32 %v1648, %v1398
      %v1681 = vmul.f32 %v1649, %v1398
      %v1682 = vmul.f32 %v1650, %v1398
      %v1683 = vmul.f32 %v1651, %v1398
      %v1685 = vsel %vm384, %v1492, 0
      %v1688 = vsel %vm384, %v1493, 0
      %v1691 = vsel %vm384, %v1494, 0
      %v1694 = vsel %vm384, %v1495, 0
      %v1697 = vsel %vm384, %v1496, 0
      %v1700 = vsel %vm384, %v1497, 0
      %v1703 = vsel %vm384, %v1498, 0
      %v1706 = vsel %vm384, %v1499, 0
      %1708 = vmatprep.subr.mxu0 0.0
      %1709 = vmatpush1.msra.mxu0 %v1230
      %1710 = vmatprep.subr.mxu0 0.0
      %1711 = vmatpush1.msra.mxu0 %v1231
      %1712 = vmatprep.subr.mxu0 0.0
      %1713 = vmatpush1.msra.mxu0 %v1232
      %1714 = vmatprep.subr.mxu0 0.0
      %1715 = vmatpush1.msra.mxu0 %v1233
      %1716 = vmatprep.subr.mxu0 0.0
      %1717 = vmatpush1.msra.mxu0 0.0
      %1718 = vmatprep.subr.mxu0 0.0
      %1719 = vmatpush1.msra.mxu0 0.0
      %1720 = vmatprep.subr.mxu0 0.0
      %1721 = vmatpush1.msra.mxu0 0.0
      %1722 = vmatprep.subr.mxu0 0.0
      %1723 = vmatpush1.msra.mxu0 0.0
      %1724 = vmatprep.subr.mxu0 0.0
      %1725 = vmatpush1.msra.mxu0 0.0
      %1726 = vmatprep.subr.mxu0 0.0
      %1727 = vmatpush1.msra.mxu0 0.0
      %1728 = vmatprep.subr.mxu0 0.0
      %1729 = vmatpush1.msra.mxu0 0.0
      %1730 = vmatprep.subr.mxu0 0.0
      %1731 = vmatpush1.msra.mxu0 0.0
      %1732 = vmatprep.subr.mxu0 0.0
      %1733 = vmatpush1.msra.mxu0 0.0
      %1734 = vmatprep.subr.mxu0 0.0
      %1735 = vmatpush1.msra.mxu0 0.0
      %1736 = vmatprep.subr.mxu0 0.0
      %1737 = vmatpush1.msra.mxu0 0.0
      %1738 = vmatprep.subr.mxu0 0.0
      %1739 = vmatpush1.msra.mxu0 0.0
      %1740 = vmatprep.subr.mxu0 0.0
      %1741 = vmatpush1.msra.mxu0 0.0
      %1742 = vmatprep.subr.mxu0 0.0
      %1743 = vmatpush1.msra.mxu0 0.0
      %1744 = vmatprep.subr.mxu0 0.0
      %1745 = vmatpush1.msra.mxu0 0.0
      %1746 = vmatprep.subr.mxu0 0.0
      %1747 = vmatpush1.msra.mxu0 0.0
      %1748 = vmatprep.subr.mxu0 0.0
      %1749 = vmatpush1.msra.mxu0 0.0
      %1750 = vmatprep.subr.mxu0 0.0
      %1751 = vmatpush1.msra.mxu0 0.0
      %1752 = vmatprep.subr.mxu0 0.0
      %1753 = vmatpush1.msra.mxu0 0.0
      %1754 = vmatprep.subr.mxu0 0.0
      %1755 = vmatpush1.msra.mxu0 0.0
      %1756 = vmatprep.subr.mxu0 0.0
      %1757 = vmatpush1.msra.mxu0 0.0
      %1758 = vmatprep.subr.mxu0 0.0
      %1759 = vmatpush1.msra.mxu0 0.0
      %1760 = vmatprep.subr.mxu0 0.0
      %1761 = vmatpush1.msra.mxu0 0.0
      %1762 = vmatprep.subr.mxu0 0.0
      %1763 = vmatpush1.msra.mxu0 0.0
      %1764 = vmatprep.subr.mxu0 0.0
      %1765 = vmatpush1.msra.mxu0 0.0
      %1766 = vmatprep.subr.mxu0 0.0
      %1767 = vmatpush1.msra.mxu0 0.0
      %1768 = vmatprep.subr.mxu0 0.0
      %1769 = vmatpush1.msra.mxu0 0.0
      %1770 = vmatprep.subr.mxu0 0.0
      %1771 = vmatpush1.msra.mxu0 0.0
      %1772 = vmatprep.mubr.f32.mxu0 0.0
      %1773 = vmatmul.mubr.f32.gmra.mrb[0].mxu0 %v1685
      %v1774 = vpop.f32.mrb[0].mxu0
      %v1775 = vadd.f32 %v1652, %v1774
      %v1776 = vpop.f32.mrb[0].mxu0
      %1777 = vmatprep.mubr.f32.mxu0 0.0
      %1778 = vmatmul.mubr.f32.gmra.mrb[0].mxu0 %v1688
      %v1779 = vpop.f32.mrb[0].mxu0
      %v1780 = vadd.f32 %v1653, %v1779
      %v1781 = vpop.f32.mrb[0].mxu0
      %1782 = vmatprep.mubr.f32.mxu0 0.0
      %1783 = vmatmul.mubr.f32.gmra.mrb[0].mxu0 %v1691
      %v1784 = vpop.f32.mrb[0].mxu0
      %v1785 = vadd.f32 %v1654, %v1784
      %v1786 = vpop.f32.mrb[0].mxu0
      %1787 = vmatprep.mubr.f32.mxu0 0.0
      %1788 = vmatmul.mubr.f32.gmra.mrb[0].mxu0 %v1694
      %v1789 = vpop.f32.mrb[0].mxu0
      %v1790 = vadd.f32 %v1655, %v1789
      %v1791 = vpop.f32.mrb[0].mxu0
      %1792 = vmatprep.mubr.f32.mxu0 0.0
      %1793 = vmatmul.mubr.f32.gmra.mrb[0].mxu0 %v1697
      %v1794 = vpop.f32.mrb[0].mxu0
      %v1795 = vadd.f32 %v1656, %v1794
      %v1796 = vpop.f32.mrb[0].mxu0
      %1797 = vmatprep.mubr.f32.mxu0 0.0
      %1798 = vmatmul.mubr.f32.gmra.mrb[0].mxu0 %v1700
      %v1799 = vpop.f32.mrb[0].mxu0
      %v1800 = vadd.f32 %v1657, %v1799
      %v1801 = vpop.f32.mrb[0].mxu0
      %1802 = vmatprep.mubr.f32.mxu0 0.0
      %1803 = vmatmul.mubr.f32.gmra.mrb[0].mxu0 %v1703
      %v1804 = vpop.f32.mrb[0].mxu0
      %v1805 = vadd.f32 %v1658, %v1804
      %v1806 = vpop.f32.mrb[0].mxu0
      %1807 = vmatprep.mubr.f32.mxu0 0.0
      %1808 = vmatmul.mubr.f32.gmra.mrb[0].mxu0 %v1706
      %v1809 = vpop.f32.mrb[0].mxu0
      %v1810 = vadd.f32 %v1659, %v1809
      %v1811 = vpop.f32.mrb[0].mxu0
      %1812 = vdwg.mxu0
      %v1814 = vsel %vm384, %v1500, 0
      %v1817 = vsel %vm384, %v1501, 0
      %v1820 = vsel %vm384, %v1502, 0
      %v1823 = vsel %vm384, %v1503, 0
      %v1826 = vsel %vm384, %v1504, 0
      %v1829 = vsel %vm384, %v1505, 0
      %v1832 = vsel %vm384, %v1506, 0
      %v1835 = vsel %vm384, %v1507, 0
      %1837 = vmatprep.subr.mxu0 0.0
      %1838 = vmatpush1.msra.mxu0 %v1234
      %1839 = vmatprep.subr.mxu0 0.0
      %1840 = vmatpush1.msra.mxu0 %v1235
      %1841 = vmatprep.subr.mxu0 0.0
      %1842 = vmatpush1.msra.mxu0 %v1236
      %1843 = vmatprep.subr.mxu0 0.0
      %1844 = vmatpush1.msra.mxu0 %v1237
      %1845 = vmatprep.subr.mxu0 0.0
      %1846 = vmatpush1.msra.mxu0 0.0
      %1847 = vmatprep.subr.mxu0 0.0
      %1848 = vmatpush1.msra.mxu0 0.0
      %1849 = vmatprep.subr.mxu0 0.0
      %1850 = vmatpush1.msra.mxu0 0.0
      %1851 = vmatprep.subr.mxu0 0.0
      %1852 = vmatpush1.msra.mxu0 0.0
      %1853 = vmatprep.subr.mxu0 0.0
      %1854 = vmatpush1.msra.mxu0 0.0
      %1855 = vmatprep.subr.mxu0 0.0
      %1856 = vmatpush1.msra.mxu0 0.0
      %1857 = vmatprep.subr.mxu0 0.0
      %1858 = vmatpush1.msra.mxu0 0.0
      %1859 = vmatprep.subr.mxu0 0.0
      %1860 = vmatpush1.msra.mxu0 0.0
      %1861 = vmatprep.subr.mxu0 0.0
      %1862 = vmatpush1.msra.mxu0 0.0
      %1863 = vmatprep.subr.mxu0 0.0
      %1864 = vmatpush1.msra.mxu0 0.0
      %1865 = vmatprep.subr.mxu0 0.0
      %1866 = vmatpush1.msra.mxu0 0.0
      %1867 = vmatprep.subr.mxu0 0.0
      %1868 = vmatpush1.msra.mxu0 0.0
      %1869 = vmatprep.subr.mxu0 0.0
      %1870 = vmatpush1.msra.mxu0 0.0
      %1871 = vmatprep.subr.mxu0 0.0
      %1872 = vmatpush1.msra.mxu0 0.0
      %1873 = vmatprep.subr.mxu0 0.0
      %1874 = vmatpush1.msra.mxu0 0.0
      %1875 = vmatprep.subr.mxu0 0.0
      %1876 = vmatpush1.msra.mxu0 0.0
      %1877 = vmatprep.subr.mxu0 0.0
      %1878 = vmatpush1.msra.mxu0 0.0
      %1879 = vmatprep.subr.mxu0 0.0
      %1880 = vmatpush1.msra.mxu0 0.0
      %1881 = vmatprep.subr.mxu0 0.0
      %1882 = vmatpush1.msra.mxu0 0.0
      %1883 = vmatprep.subr.mxu0 0.0
      %1884 = vmatpush1.msra.mxu0 0.0
      %1885 = vmatprep.subr.mxu0 0.0
      %1886 = vmatpush1.msra.mxu0 0.0
      %1887 = vmatprep.subr.mxu0 0.0
      %1888 = vmatpush1.msra.mxu0 0.0
      %1889 = vmatprep.subr.mxu0 0.0
      %1890 = vmatpush1.msra.mxu0 0.0
      %1891 = vmatprep.subr.mxu0 0.0
      %1892 = vmatpush1.msra.mxu0 0.0
      %1893 = vmatprep.subr.mxu0 0.0
      %1894 = vmatpush1.msra.mxu0 0.0
      %1895 = vmatprep.subr.mxu0 0.0
      %1896 = vmatpush1.msra.mxu0 0.0
      %1897 = vmatprep.subr.mxu0 0.0
      %1898 = vmatpush1.msra.mxu0 0.0
      %1899 = vmatprep.subr.mxu0 0.0
      %1900 = vmatpush1.msra.mxu0 0.0
      %1901 = vmatprep.mubr.f32.mxu0 0.0
      %1902 = vmatmul.mubr.f32.gmra.mrb[0].mxu0 %v1814
      %v1903 = vpop.f32.mrb[0].mxu0
      %v1904 = vadd.f32 %v1660, %v1903
      %v1905 = vpop.f32.mrb[0].mxu0
      %1906 = vmatprep.mubr.f32.mxu0 0.0
      %1907 = vmatmul.mubr.f32.gmra.mrb[0].mxu0 %v1817
      %v1908 = vpop.f32.mrb[0].mxu0
      %v1909 = vadd.f32 %v1661, %v1908
      %v1910 = vpop.f32.mrb[0].mxu0
      %1911 = vmatprep.mubr.f32.mxu0 0.0
      %1912 = vmatmul.mubr.f32.gmra.mrb[0].mxu0 %v1820
      %v1913 = vpop.f32.mrb[0].mxu0
      %v1914 = vadd.f32 %v1662, %v1913
      %v1915 = vpop.f32.mrb[0].mxu0
      %1916 = vmatprep.mubr.f32.mxu0 0.0
      %1917 = vmatmul.mubr.f32.gmra.mrb[0].mxu0 %v1823
      %v1918 = vpop.f32.mrb[0].mxu0
      %v1919 = vadd.f32 %v1663, %v1918
      %v1920 = vpop.f32.mrb[0].mxu0
      %1921 = vmatprep.mubr.f32.mxu0 0.0
      %1922 = vmatmul.mubr.f32.gmra.mrb[0].mxu0 %v1826
      %v1923 = vpop.f32.mrb[0].mxu0
      %v1924 = vadd.f32 %v1664, %v1923
      %v1925 = vpop.f32.mrb[0].mxu0
      %1926 = vmatprep.mubr.f32.mxu0 0.0
      %1927 = vmatmul.mubr.f32.gmra.mrb[0].mxu0 %v1829
      %v1928 = vpop.f32.mrb[0].mxu0
      %v1929 = vadd.f32 %v1665, %v1928
      %v1930 = vpop.f32.mrb[0].mxu0
      %1931 = vmatprep.mubr.f32.mxu0 0.0
      %1932 = vmatmul.mubr.f32.gmra.mrb[0].mxu0 %v1832
      %v1933 = vpop.f32.mrb[0].mxu0
      %v1934 = vadd.f32 %v1666, %v1933
      %v1935 = vpop.f32.mrb[0].mxu0
      %1936 = vmatprep.mubr.f32.mxu0 0.0
      %1937 = vmatmul.mubr.f32.gmra.mrb[0].mxu0 %v1835
      %v1938 = vpop.f32.mrb[0].mxu0
      %v1939 = vadd.f32 %v1667, %v1938
      %v1940 = vpop.f32.mrb[0].mxu0
      %1941 = vdwg.mxu0
      %v1943 = vsel %vm384, %v1508, 0
      %v1946 = vsel %vm384, %v1509, 0
      %v1949 = vsel %vm384, %v1510, 0
      %v1952 = vsel %vm384, %v1511, 0
      %v1955 = vsel %vm384, %v1512, 0
      %v1958 = vsel %vm384, %v1513, 0
      %v1961 = vsel %vm384, %v1514, 0
      %v1964 = vsel %vm384, %v1515, 0
      %1966 = vmatprep.subr.mxu0 0.0
      %1967 = vmatpush1.msra.mxu0 %v1238
      %1968 = vmatprep.subr.mxu0 0.0
      %1969 = vmatpush1.msra.mxu0 %v1239
      %1970 = vmatprep.subr.mxu0 0.0
      %1971 = vmatpush1.msra.mxu0 %v1240
      %1972 = vmatprep.subr.mxu0 0.0
      %1973 = vmatpush1.msra.mxu0 %v1241
      %1974 = vmatprep.subr.mxu0 0.0
      %1975 = vmatpush1.msra.mxu0 0.0
      %1976 = vmatprep.subr.mxu0 0.0
      %1977 = vmatpush1.msra.mxu0 0.0
      %1978 = vmatprep.subr.mxu0 0.0
      %1979 = vmatpush1.msra.mxu0 0.0
      %1980 = vmatprep.subr.mxu0 0.0
      %1981 = vmatpush1.msra.mxu0 0.0
      %1982 = vmatprep.subr.mxu0 0.0
      %1983 = vmatpush1.msra.mxu0 0.0
      %1984 = vmatprep.subr.mxu0 0.0
      %1985 = vmatpush1.msra.mxu0 0.0
      %1986 = vmatprep.subr.mxu0 0.0
      %1987 = vmatpush1.msra.mxu0 0.0
      %1988 = vmatprep.subr.mxu0 0.0
      %1989 = vmatpush1.msra.mxu0 0.0
      %1990 = vmatprep.subr.mxu0 0.0
      %1991 = vmatpush1.msra.mxu0 0.0
      %1992 = vmatprep.subr.mxu0 0.0
      %1993 = vmatpush1.msra.mxu0 0.0
      %1994 = vmatprep.subr.mxu0 0.0
      %1995 = vmatpush1.msra.mxu0 0.0
      %1996 = vmatprep.subr.mxu0 0.0
      %1997 = vmatpush1.msra.mxu0 0.0
      %1998 = vmatprep.subr.mxu0 0.0
      %1999 = vmatpush1.msra.mxu0 0.0
      %2000 = vmatprep.subr.mxu0 0.0
      %2001 = vmatpush1.msra.mxu0 0.0
      %2002 = vmatprep.subr.mxu0 0.0
      %2003 = vmatpush1.msra.mxu0 0.0
      %2004 = vmatprep.subr.mxu0 0.0
      %2005 = vmatpush1.msra.mxu0 0.0
      %2006 = vmatprep.subr.mxu0 0.0
      %2007 = vmatpush1.msra.mxu0 0.0
      %2008 = vmatprep.subr.mxu0 0.0
      %2009 = vmatpush1.msra.mxu0 0.0
      %2010 = vmatprep.subr.mxu0 0.0
      %2011 = vmatpush1.msra.mxu0 0.0
      %2012 = vmatprep.subr.mxu0 0.0
      %2013 = vmatpush1.msra.mxu0 0.0
      %2014 = vmatprep.subr.mxu0 0.0
      %2015 = vmatpush1.msra.mxu0 0.0
      %2016 = vmatprep.subr.mxu0 0.0
      %2017 = vmatpush1.msra.mxu0 0.0
      %2018 = vmatprep.subr.mxu0 0.0
      %2019 = vmatpush1.msra.mxu0 0.0
      %2020 = vmatprep.subr.mxu0 0.0
      %2021 = vmatpush1.msra.mxu0 0.0
      %2022 = vmatprep.subr.mxu0 0.0
      %2023 = vmatpush1.msra.mxu0 0.0
      %2024 = vmatprep.subr.mxu0 0.0
      %2025 = vmatpush1.msra.mxu0 0.0
      %2026 = vmatprep.subr.mxu0 0.0
      %2027 = vmatpush1.msra.mxu0 0.0
      %2028 = vmatprep.subr.mxu0 0.0
      %2029 = vmatpush1.msra.mxu0 0.0
      %2030 = vmatprep.mubr.f32.mxu0 0.0
      %2031 = vmatmul.mubr.f32.gmra.mrb[0].mxu0 %v1943
      %v2032 = vpop.f32.mrb[0].mxu0
      %v2033 = vadd.f32 %v1668, %v2032
      %v2034 = vpop.f32.mrb[0].mxu0
      %2035 = vmatprep.mubr.f32.mxu0 0.0
      %2036 = vmatmul.mubr.f32.gmra.mrb[0].mxu0 %v1946
      %v2037 = vpop.f32.mrb[0].mxu0
      %v2038 = vadd.f32 %v1669, %v2037
      %v2039 = vpop.f32.mrb[0].mxu0
      %2040 = vmatprep.mubr.f32.mxu0 0.0
      %2041 = vmatmul.mubr.f32.gmra.mrb[0].mxu0 %v1949
      %v2042 = vpop.f32.mrb[0].mxu0
      %v2043 = vadd.f32 %v1670, %v2042
      %v2044 = vpop.f32.mrb[0].mxu0
      %2045 = vmatprep.mubr.f32.mxu0 0.0
      %2046 = vmatmul.mubr.f32.gmra.mrb[0].mxu0 %v1952
      %v2047 = vpop.f32.mrb[0].mxu0
      %v2048 = vadd.f32 %v1671, %v2047
      %v2049 = vpop.f32.mrb[0].mxu0
      %2050 = vmatprep.mubr.f32.mxu0 0.0
      %2051 = vmatmul.mubr.f32.gmra.mrb[0].mxu0 %v1955
      %v2052 = vpop.f32.mrb[0].mxu0
      %v2053 = vadd.f32 %v1672, %v2052
      %v2054 = vpop.f32.mrb[0].mxu0
      %2055 = vmatprep.mubr.f32.mxu0 0.0
      %2056 = vmatmul.mubr.f32.gmra.mrb[0].mxu0 %v1958
      %v2057 = vpop.f32.mrb[0].mxu0
      %v2058 = vadd.f32 %v1673, %v2057
      %v2059 = vpop.f32.mrb[0].mxu0
      %2060 = vmatprep.mubr.f32.mxu0 0.0
      %2061 = vmatmul.mubr.f32.gmra.mrb[0].mxu0 %v1961
      %v2062 = vpop.f32.mrb[0].mxu0
      %v2063 = vadd.f32 %v1674, %v2062
      %v2064 = vpop.f32.mrb[0].mxu0
      %2065 = vmatprep.mubr.f32.mxu0 0.0
      %2066 = vmatmul.mubr.f32.gmra.mrb[0].mxu0 %v1964
      %v2067 = vpop.f32.mrb[0].mxu0
      %v2068 = vadd.f32 %v1675, %v2067
      %v2069 = vpop.f32.mrb[0].mxu0
      %2070 = vdwg.mxu0
      %v2072 = vsel %vm384, %v1516, 0
      %v2075 = vsel %vm384, %v1517, 0
      %v2078 = vsel %vm384, %v1518, 0
      %v2081 = vsel %vm384, %v1519, 0
      %v2084 = vsel %vm384, %v1520, 0
      %v2087 = vsel %vm384, %v1521, 0
      %v2090 = vsel %vm384, %v1522, 0
      %v2093 = vsel %vm384, %v1523, 0
      %2095 = vmatprep.subr.mxu0 0.0
      %2096 = vmatpush1.msra.mxu0 %v1242
      %2097 = vmatprep.subr.mxu0 0.0
      %2098 = vmatpush1.msra.mxu0 %v1243
      %2099 = vmatprep.subr.mxu0 0.0
      %2100 = vmatpush1.msra.mxu0 %v1244
      %2101 = vmatprep.subr.mxu0 0.0
      %2102 = vmatpush1.msra.mxu0 %v1245
      %2103 = vmatprep.subr.mxu0 0.0
      %2104 = vmatpush1.msra.mxu0 0.0
      %2105 = vmatprep.subr.mxu0 0.0
      %2106 = vmatpush1.msra.mxu0 0.0
      %2107 = vmatprep.subr.mxu0 0.0
      %2108 = vmatpush1.msra.mxu0 0.0
      %2109 = vmatprep.subr.mxu0 0.0
      %2110 = vmatpush1.msra.mxu0 0.0
      %2111 = vmatprep.subr.mxu0 0.0
      %2112 = vmatpush1.msra.mxu0 0.0
      %2113 = vmatprep.subr.mxu0 0.0
      %2114 = vmatpush1.msra.mxu0 0.0
      %2115 = vmatprep.subr.mxu0 0.0
      %2116 = vmatpush1.msra.mxu0 0.0
      %2117 = vmatprep.subr.mxu0 0.0
      %2118 = vmatpush1.msra.mxu0 0.0
      %2119 = vmatprep.subr.mxu0 0.0
      %2120 = vmatpush1.msra.mxu0 0.0
      %2121 = vmatprep.subr.mxu0 0.0
      %2122 = vmatpush1.msra.mxu0 0.0
      %2123 = vmatprep.subr.mxu0 0.0
      %2124 = vmatpush1.msra.mxu0 0.0
      %2125 = vmatprep.subr.mxu0 0.0
      %2126 = vmatpush1.msra.mxu0 0.0
      %2127 = vmatprep.subr.mxu0 0.0
      %2128 = vmatpush1.msra.mxu0 0.0
      %2129 = vmatprep.subr.mxu0 0.0
      %2130 = vmatpush1.msra.mxu0 0.0
      %2131 = vmatprep.subr.mxu0 0.0
      %2132 = vmatpush1.msra.mxu0 0.0
      %2133 = vmatprep.subr.mxu0 0.0
      %2134 = vmatpush1.msra.mxu0 0.0
      %2135 = vmatprep.subr.mxu0 0.0
      %2136 = vmatpush1.msra.mxu0 0.0
      %2137 = vmatprep.subr.mxu0 0.0
      %2138 = vmatpush1.msra.mxu0 0.0
      %2139 = vmatprep.subr.mxu0 0.0
      %2140 = vmatpush1.msra.mxu0 0.0
      %2141 = vmatprep.subr.mxu0 0.0
      %2142 = vmatpush1.msra.mxu0 0.0
      %2143 = vmatprep.subr.mxu0 0.0
      %2144 = vmatpush1.msra.mxu0 0.0
      %2145 = vmatprep.subr.mxu0 0.0
      %2146 = vmatpush1.msra.mxu0 0.0
      %2147 = vmatprep.subr.mxu0 0.0
      %2148 = vmatpush1.msra.mxu0 0.0
      %2149 = vmatprep.subr.mxu0 0.0
      %2150 = vmatpush1.msra.mxu0 0.0
      %2151 = vmatprep.subr.mxu0 0.0
      %2152 = vmatpush1.msra.mxu0 0.0
      %2153 = vmatprep.subr.mxu0 0.0
      %2154 = vmatpush1.msra.mxu0 0.0
      %2155 = vmatprep.subr.mxu0 0.0
      %2156 = vmatpush1.msra.mxu0 0.0
      %2157 = vmatprep.subr.mxu0 0.0
      %2158 = vmatpush1.msra.mxu0 0.0
      %2159 = vmatprep.mubr.f32.mxu0 0.0
      %2160 = vmatmul.mubr.f32.gmra.mrb[0].mxu0 %v2072
      %v2161 = vpop.f32.mrb[0].mxu0
      %v2162 = vadd.f32 %v1676, %v2161
      %v2163 = vpop.f32.mrb[0].mxu0
      %2164 = vmatprep.mubr.f32.mxu0 0.0
      %2165 = vmatmul.mubr.f32.gmra.mrb[0].mxu0 %v2075
      %v2166 = vpop.f32.mrb[0].mxu0
      %v2167 = vadd.f32 %v1677, %v2166
      %v2168 = vpop.f32.mrb[0].mxu0
      %2169 = vmatprep.mubr.f32.mxu0 0.0
      %2170 = vmatmul.mubr.f32.gmra.mrb[0].mxu0 %v2078
      %v2171 = vpop.f32.mrb[0].mxu0
      %v2172 = vadd.f32 %v1678, %v2171
      %v2173 = vpop.f32.mrb[0].mxu0
      %2174 = vmatprep.mubr.f32.mxu0 0.0
      %2175 = vmatmul.mubr.f32.gmra.mrb[0].mxu0 %v2081
      %v2176 = vpop.f32.mrb[0].mxu0
      %v2177 = vadd.f32 %v1679, %v2176
      %v2178 = vpop.f32.mrb[0].mxu0
      %2179 = vmatprep.mubr.f32.mxu0 0.0
      %2180 = vmatmul.mubr.f32.gmra.mrb[0].mxu0 %v2084
      %v2181 = vpop.f32.mrb[0].mxu0
      %v2182 = vadd.f32 %v1680, %v2181
      %v2183 = vpop.f32.mrb[0].mxu0
      %2184 = vmatprep.mubr.f32.mxu0 0.0
      %2185 = vmatmul.mubr.f32.gmra.mrb[0].mxu0 %v2087
      %v2186 = vpop.f32.mrb[0].mxu0
      %v2187 = vadd.f32 %v1681, %v2186
      %v2188 = vpop.f32.mrb[0].mxu0
      %2189 = vmatprep.mubr.f32.mxu0 0.0
      %2190 = vmatmul.mubr.f32.gmra.mrb[0].mxu0 %v2090
      %v2191 = vpop.f32.mrb[0].mxu0
      %v2192 = vadd.f32 %v1682, %v2191
      %v2193 = vpop.f32.mrb[0].mxu0
      %2194 = vmatprep.mubr.f32.mxu0 0.0
      %2195 = vmatmul.mubr.f32.gmra.mrb[0].mxu0 %v2093
      %v2196 = vpop.f32.mrb[0].mxu0
      %v2197 = vadd.f32 %v1683, %v2196
      %v2198 = vpop.f32.mrb[0].mxu0
      %2199 = vdwg.mxu0
      %2200 = vst.msk [vmem:[%s273] sm:$0xff] %vm384, %v1775
      %2201 = vst.msk [vmem:[%s273 + $0x8] sm:$0xff] %vm384, %v1780
      %2202 = vst.msk [vmem:[%s273 + $0x10] sm:$0xff] %vm384, %v1785
      %2203 = vst.msk [vmem:[%s273 + $0x18] sm:$0xff] %vm384, %v1790
      %2204 = vst.msk [vmem:[%s273 + $0x20] sm:$0xff] %vm384, %v1795
      %2205 = vst.msk [vmem:[%s273 + $0x28] sm:$0xff] %vm384, %v1800
      %2206 = vst.msk [vmem:[%s273 + $0x30] sm:$0xff] %vm384, %v1805
      %2207 = vst.msk [vmem:[%s273 + $0x38] sm:$0xff] %vm384, %v1810
      %2208 = vst.msk [vmem:[%s273 + $0x40] sm:$0xff] %vm384, %v1904
      %2209 = vst.msk [vmem:[%s273 + $0x48] sm:$0xff] %vm384, %v1909
      %2210 = vst.msk [vmem:[%s273 + $0x50] sm:$0xff] %vm384, %v1914
      %2211 = vst.msk [vmem:[%s273 + $0x58] sm:$0xff] %vm384, %v1919
      %2212 = vst.msk [vmem:[%s273 + $0x60] sm:$0xff] %vm384, %v1924
      %2213 = vst.msk [vmem:[%s273 + $0x68] sm:$0xff] %vm384, %v1929
      %2214 = vst.msk [vmem:[%s273 + $0x70] sm:$0xff] %vm384, %v1934
      %2215 = vst.msk [vmem:[%s273 + $0x78] sm:$0xff] %vm384, %v1939
      %2216 = vst.msk [vmem:[%s273 + $0x80] sm:$0xff] %vm384, %v2033
      %2217 = vst.msk [vmem:[%s273 + $0x88] sm:$0xff] %vm384, %v2038
      %2218 = vst.msk [vmem:[%s273 + $0x90] sm:$0xff] %vm384, %v2043
      %2219 = vst.msk [vmem:[%s273 + $0x98] sm:$0xff] %vm384, %v2048
      %2220 = vst.msk [vmem:[%s273 + $0xa0] sm:$0xff] %vm384, %v2053
      %2221 = vst.msk [vmem:[%s273 + $0xa8] sm:$0xff] %vm384, %v2058
      %2222 = vst.msk [vmem:[%s273 + $0xb0] sm:$0xff] %vm384, %v2063
      %2223 = vst.msk [vmem:[%s273 + $0xb8] sm:$0xff] %vm384, %v2068
      %2224 = vst.msk [vmem:[%s273 + $0xc0] sm:$0xff] %vm384, %v2162
      %2225 = vst.msk [vmem:[%s273 + $0xc8] sm:$0xff] %vm384, %v2167
      %2226 = vst.msk [vmem:[%s273 + $0xd0] sm:$0xff] %vm384, %v2172
      %2227 = vst.msk [vmem:[%s273 + $0xd8] sm:$0xff] %vm384, %v2177
      %2228 = vst.msk [vmem:[%s273 + $0xe0] sm:$0xff] %vm384, %v2182
      %2229 = vst.msk [vmem:[%s273 + $0xe8] sm:$0xff] %vm384, %v2187
      %2230 = vst.msk [vmem:[%s273 + $0xf0] sm:$0xff] %vm384, %v2192
      %2231 = vst.msk [vmem:[%s273 + $0xf8] sm:$0xff] %vm384, %v2197
      %s2232 = smul.u32 4, %s15
      %p2233 = scmp.lt.s32.totalorder %s2232, 7
      %s2234 = scalar_select %p2233, %s2232, 7
      %s2235 = smul.addr %s2234, 8
      %s2236 = smul.addr %s2235, 8
      %s2237 = scalar_lea.vmem %s4, %s2236
      // Predicated region
      $region37: #{attention_layer.3} parent=35 // pred_check
        %p2238 = pneg %p137
      $region38: #{attention_layer.3} parent=35 // pred_check_branch
        %2240 = sbr.rel (%p2238) target = $region40
      $region39: #{attention_layer.3} parent=35 // pred_region
        %s2241 = smul.u32 4, %s15
      $region40: #{attention_layer.3} parent=35 // pred_fallthru
        _
    $region36: #{attention_layer.3} parent=5 // pred_fallthru
      _
    %p2242 = scmp.le.s32.totalorder 2, %s10
    // Predicated region
    $region41: #{attention_layer.3} parent=5 // pred_check
      %p2243 = pneg %p2242
    $region42: #{attention_layer.3} parent=5 // pred_check_branch
      %2245 = sbr.rel (%p2243) target = $region44
    $region43: #{attention_layer.3} parent=5 // pred_region
      %s2246 = ssub.s32 %s10, 2
      // Predicated region
      $region45: #{attention_layer.3} parent=43 // pred_check
        %p2247 = pneg %p143
      $region46: #{attention_layer.3} parent=43 // pred_check_branch
        %2249 = sbr.rel (%p2247) target = $region48
      $region47: #{attention_layer.3} parent=43 // pred_region
        %s2250 = smul.u32 4, %s16
        %p2251 = scmp.lt.s32.totalorder %s2250, 7
        %s2252 = scalar_select %p2251, %s2250, 7
        %s2253 = smul.addr %s2252, 8
        %s2254 = smul.addr %s2253, 8
        %s2255 = scalar_lea.vmem %s4, %s2254
      $region48: #{attention_layer.3} parent=43 // pred_fallthru
        _
    $region44: #{attention_layer.3} parent=5 // pred_fallthru
      _
  $region6: #{attention_layer.3} parent=0 // loop_footer
    %s14 = sadd.s32 1, %s10
  $region7: #{attention_layer.3} parent=0 // loop_footer_branch
    %9 = sbr.rel target = $region3
  $region8: #{attention_layer.3} parent=0 // loop_exit
    _

</llo_original>
